<compile_context>
chip_gen: v6e
topology: v6e:2x2x1
jax: 0.10.0
libtpu: 0.0.40
codegen_flags: <defaults>
</compile_context>

<pallas_src>
import functools

import numpy as np
import jax
import jax.numpy as jnp
from jax import lax
from jax.experimental import pallas as pl
from jax.experimental.pallas import tpu as pltpu


def _round_up(v, m):
    return ((v + m - 1) // m) * m


# ---------------------------- fused Pallas kernel ----------------------------

def _counter_kernel(x_ref, w1_ref, b1_ref, w2_ref, b2_ref, mask_ref,
                    fc1_ref, fc2_ref, o_ref,
                    pk1_ref, s2_ref, pk2_ref,
                    *, C, shifts1, shifts2, L1, base_off, s2_off, inv_hw):
    """Whole Counter_attention forward for one batch sample.

    x_ref   : (2, 1, C, Lpad) f32   [assistant, present], 5x5-SAME zero padded,
                                    row-flattened (row stride Wp = W+4), lane padded
    w1_ref  : (2, 4C, 25C)    bf16  fused stage-1 weights (mc c1/c2/c3 + plain 3x3),
                                    BN scale folded, columns packed as tap*C + cin
    b1_ref  : (2, 4C, 1)      f32
    w2_ref  : (2, C, 27C)     bf16  Multi_Context final 3x3 conv, packed tap*3C + cin
    b2_ref  : (2, C, 1)       f32
    mask_ref: (1, L1)         f32   1.0 on valid output lanes (col < W, lane < H*Wp)
    fc1_ref : (2, C, FCW)     f32   Adaptive_Weight fc1, zero lane-padded to FCW
    fc2_ref : (2, 1, FCW)     f32   Adaptive_Weight fc2^T, zero lane-padded to FCW
    o_ref   : (1, C, L1)      f32   out1 + out2 in the same flat layout (cropped outside)
    pk1_ref : (25C, L1)       f32   scratch: tap-packed stage-1 im2col operand
    s2_ref  : (3C, S2LEN)     f32   scratch: zero-halo flat image for stage 2
    pk2_ref : (27C, L1)       f32   scratch: tap-packed stage-2 im2col operand
    """
    mask = mask_ref[...]                                            # (1, L1)
    mcs, gates, bases = [], [], []
    for s in range(2):                                              # 0: assistant, 1: present
        # ---- stage 1: pack 25 shifted lane-slices once, then ONE MXU dot ----
        for t, sh in enumerate(shifts1):
            pk1_ref[t * C:(t + 1) * C, :] = x_ref[s, 0, :, sh:sh + L1]
        acc1 = jnp.dot(w1_ref[s], pk1_ref[...].astype(jnp.bfloat16),
                       preferred_element_type=jnp.float32) + b1_ref[s]   # (4C, L1)
        # Static ReLU split: rows [0,3C) = Multi_Context branches (ReLU),
        # rows [3C,4C) = plain conv1/conv2 gate (no ReLU).
        branch = jnp.maximum(acc1[:3 * C, :], 0.0) * mask           # garbage cols -> 0
        gates.append(acc1[3 * C:, :])
        # ---- stage 2: zero-halo placement in VMEM, pack 9 taps, one dot ----
        s2_ref[...] = jnp.zeros_like(s2_ref)
        s2_ref[:, s2_off:s2_off + L1] = branch                      # lane-aligned store
        for t, sh in enumerate(shifts2):
            pk2_ref[t * 3 * C:(t + 1) * 3 * C, :] = s2_ref[:, sh:sh + L1]
        mcs.append(jnp.dot(w2_ref[s], pk2_ref[...].astype(jnp.bfloat16),
                           preferred_element_type=jnp.float32) + b2_ref[s])  # (C, L1)
        # Residual / gating base = the original image in the same flat layout
        # (its garbage columns & tail lanes are exactly zero by construction).
        bases.append(x_ref[s, 0, :, base_off:base_off + L1])

    # out1 = present  *(sig(mc1(assistant)) + sig(conv1(present))  + 1) -> ada_w1
    # out2 = assistant*(sig(mc2(present))   + sig(conv2(assistant))+ 1) -> ada_w2
    total = None
    for j in range(2):
        b = bases[1 - j]
        y = b * (jax.nn.sigmoid(mcs[j]) + jax.nn.sigmoid(gates[1 - j]) + 1.0)
        # Adaptive_Weight: global average pool (garbage lanes of y are zero),
        # fc1 -> relu -> fc2 -> relu -> sigmoid, done in-kernel as tiny
        # broadcast-multiply + reductions (no matmul, no extra dispatch).
        mean = jnp.sum(y, axis=-1, keepdims=True) * inv_hw                       # (C, 1)
        h = jnp.maximum(jnp.sum(fc1_ref[j] * mean, axis=0, keepdims=True), 0.0)  # (1, FCW)
        s_gate = jax.nn.sigmoid(jnp.maximum(
            jnp.sum(fc2_ref[j] * h, axis=-1, keepdims=True), 0.0))               # (1, 1)
        contrib = y * s_gate
        total = contrib if total is None else total + contrib
    o_ref[0] = total


# ---------------------------- parameter prep ----------------------------

def _prepare_fused_params(params, C):
    def fold(p):                        # fold BN scale into the conv weight
        return p["w"] * p["scale"][None, None, None, :]

    def embed(w, k_to):                 # embed a kxk kernel into centered k_to x k_to taps
        k = w.shape[0]
        if k == k_to:
            return w
        off = (k_to - k) // 2
        z = jnp.zeros((k_to, k_to) + w.shape[2:], w.dtype)
        return z.at[off:off + k, off:off + k].set(w)

    def pack(w):                        # (k,k,Cin,Cout) -> (Cout, k*k*Cin) bf16, col = t*Cin + c
        k, _, cin, cout = w.shape
        return (jnp.transpose(w.reshape(k * k, cin, cout), (2, 0, 1))
                .reshape(cout, k * k * cin).astype(jnp.bfloat16))

    def stage1(mc, plain):              # mc branches (ReLU) + plain 3x3 conv: Cout = 4C
        w = jnp.concatenate([embed(fold(mc["c1"]), 5), embed(fold(mc["c2"]), 5),
                             fold(mc["c3"]), embed(fold(plain), 5)], axis=-1)
        b = jnp.concatenate([mc["c1"]["bias"], mc["c2"]["bias"],
                             mc["c3"]["bias"], plain["bias"]])
        return pack(w), b

    w1a, b1a = stage1(params["mc1"], params["conv2"])    # s=0: assistant source
    w1p, b1p = stage1(params["mc2"], params["conv1"])    # s=1: present source
    w2a, b2a = pack(fold(params["mc1"]["cc"])), params["mc1"]["cc"]["bias"]
    w2p, b2p = pack(fold(params["mc2"]["cc"])), params["mc2"]["cc"]["bias"]

    def fc_pack(ada):                   # zero lane-pad the tiny fc weights to 128 lanes
        f1, f2 = ada["fc1"], ada["fc2"]              # (C, C//4), (C//4, 1)
        c, c4 = f1.shape
        width = _round_up(c4, 128)
        f1p = jnp.zeros((c, width), jnp.float32).at[:, :c4].set(f1)
        f2p = jnp.zeros((1, width), jnp.float32).at[0, :c4].set(f2[:, 0])
        return f1p, f2p

    f1_1, f2_1 = fc_pack(params["ada1"])
    f1_2, f2_2 = fc_pack(params["ada2"])

    return dict(w1=jnp.stack([w1a, w1p]), b1=jnp.stack([b1a, b1p])[:, :, None],
                w2=jnp.stack([w2a, w2p]), b2=jnp.stack([b2a, b2p])[:, :, None],
                fc1=jnp.stack([f1_1, f1_2]), fc2=jnp.stack([f2_1, f2_2]))


# ---------------------------- forward pass ----------------------------

def counter_attention_forward(params, assistant, present):
    """assistant, present: (N, C, H, W) float32 (PyTorch NCHW).  Returns (N, C, H, W)."""
    N, C, H, W = present.shape
    prep = _prepare_fused_params(params, C)

    # Layout geometry: one 5x5-SAME spatial pad, rows flattened with stride Wp.
    p1 = 2
    Hp, Wp = H + 2 * p1, W + 2 * p1
    out_len = H * Wp                                   # stage-1/2 output lanes (valid cols < W)
    L1 = _round_up(out_len, 128)
    shifts1 = tuple(dy * Wp + dx for dy in range(5) for dx in range(5))
    base_off = p1 * Wp + p1                            # original pixel (h, w) in the padded flat
    Lpad1 = _round_up(max(max(shifts1), base_off) + L1, 128)

    # Stage-2 (3x3, pad=1) geometry: branch placed at an aligned lane offset inside
    # a zero-halo flat image; read shifts carry the -(Wp+1) padding correction.
    s2_off = _round_up(Wp + 1, 128)
    shifts2 = tuple(s2_off - (Wp + 1) + dy * Wp + dx for dy in range(3) for dx in range(3))
    s2_len = _round_up(max(shifts2) + L1, 128)

    # One padded, row-flattened f32 copy per source image (the only HBM input).
    x_all = jnp.stack([assistant, present])            # (2, N, C, H, W)
    xp = jnp.pad(x_all, ((0, 0), (0, 0), (0, 0), (p1, p1), (p1, p1)))
    xflat = jnp.pad(xp.reshape(2, N, C, Hp * Wp),
                    ((0, 0), (0, 0), (0, 0), (0, Lpad1 - Hp * Wp)))

    col = np.arange(L1)
    mask = jnp.asarray(((col < out_len) & ((col % Wp) < W)).astype(np.float32)[None, :])

    FCW = prep["fc1"].shape[-1]
    kernel = functools.partial(
        _counter_kernel, C=C, shifts1=shifts1, shifts2=shifts2, L1=L1,
        base_off=base_off, s2_off=s2_off, inv_hw=1.0 / float(H * W))

    out_flat = pl.pallas_call(
        kernel,
        out_shape=jax.ShapeDtypeStruct((N, C, L1), jnp.float32),
        grid=(N,),
        in_specs=[
            pl.BlockSpec((2, 1, C, Lpad1), lambda n: (0, n, 0, 0)),
            pl.BlockSpec((2, 4 * C, 25 * C), lambda n: (0, 0, 0)),
            pl.BlockSpec((2, 4 * C, 1), lambda n: (0, 0, 0)),
            pl.BlockSpec((2, C, 27 * C), lambda n: (0, 0, 0)),
            pl.BlockSpec((2, C, 1), lambda n: (0, 0, 0)),
            pl.BlockSpec((1, L1), lambda n: (0, 0)),
            pl.BlockSpec((2, C, FCW), lambda n: (0, 0, 0)),
            pl.BlockSpec((2, 1, FCW), lambda n: (0, 0, 0)),
        ],
        out_specs=pl.BlockSpec((1, C, L1), lambda n: (n, 0, 0)),
        scratch_shapes=[
            pltpu.VMEM((25 * C, L1), jnp.float32),     # tap-packed stage-1 operand
            pltpu.VMEM((3 * C, s2_len), jnp.float32),  # zero-halo stage-2 image
            pltpu.VMEM((27 * C, L1), jnp.float32),     # tap-packed stage-2 operand
        ],
        compiler_params=pltpu.CompilerParams(
            dimension_semantics=("parallel",),
            vmem_limit_bytes=32 * 1024 * 1024),        # explicit budget (safe on v5e/v6e/v7x)
    )(xflat, prep["w1"], prep["b1"], prep["w2"], prep["b2"], mask,
      prep["fc1"], prep["fc2"])

    # Crop the lane-padded / garbage columns back to (N, C, H, W).
    return out_flat[..., :out_len].reshape(N, C, H, Wp)[..., :W]


# ---------------------------- parameter init ----------------------------

def init_params(key, C):
    ks = iter(jax.random.split(key, 64))

    def w(shape, s=0.1):
        return jax.random.normal(next(ks), shape, jnp.float32) * s

    def conv_block(k, cin, cout):
        # conv bias + inference-mode BatchNorm folded into (scale, bias).
        return dict(w=w((k, k, cin, cout)), scale=1.0 + w((cout,)), bias=w((cout,)))

    def mc():
        return dict(c1=conv_block(1, C, C), c2=conv_block(3, C, C),
                    c3=conv_block(5, C, C), cc=conv_block(3, 3 * C, C))

    def ada():
        return dict(fc1=w((C, C // 4)), fc2=w((C // 4, 1)))

    return dict(mc1=mc(), mc2=mc(), conv1=conv_block(3, C, C),
                conv2=conv_block(3, C, C), ada1=ada(), ada2=ada())


# ---------------------------- pure-JAX reference ----------------------------

def _ref_conv_bn(x, p, relu):
    y = lax.conv_general_dilated(x, p["w"], (1, 1), "SAME",
                                 dimension_numbers=("NCHW", "HWIO", "NCHW"))
    y = y * p["scale"][None, :, None, None] + p["bias"][None, :, None, None]
    return jnp.maximum(y, 0.0) if relu else y


def _ref_forward(params, assistant, present):
    sig = jax.nn.sigmoid

    def mc(x, p):
        x1 = _ref_conv_bn(x, p["c1"], True)
        x2 = _ref_conv_bn(x, p["c2"], True)
        x3 = _ref_conv_bn(x, p["c3"], True)
        return _ref_conv_bn(jnp.concatenate([x1, x2, x3], axis=1), p["cc"], False)

    out1 = present * sig(mc(assistant, params["mc1"])) \
        + present * sig(_ref_conv_bn(present, params["conv1"], False)) + present
    out2 = assistant * sig(mc(present, params["mc2"])) \
        + assistant * sig(_ref_conv_bn(assistant, params["conv2"], False)) + assistant

    def ada(x, p):
        m = jnp.mean(x, axis=(2, 3))                      # (N, C)
        h = jnp.maximum(m @ p["fc1"], 0.0)
        s = sig(jnp.maximum(h @ p["fc2"], 0.0))           # (N, 1)
        return x * s[:, :, None, None]

    return ada(out1, params["ada1"]) + ada(out2, params["ada2"])


# ---------------------------- main ----------------------------

if __name__ == "__main__":
    N, C, H, W = 2, 8, 16, 16      # inchannels divisible by 4 (fc1); NCHW like PyTorch
    key = jax.random.PRNGKey(0)
    kp, ka, kb = jax.random.split(key, 3)

    params = init_params(kp, C)
    assistant = jax.random.normal(ka, (N, C, H, W), jnp.float32)
    present = jax.random.normal(kb, (N, C, H, W), jnp.float32)

    out = jax.jit(counter_attention_forward)(params, assistant, present)
    out = jax.block_until_ready(out)

    ref = _ref_forward(params, assistant, present)
    # Kernel path uses bf16 MXU operands (f32 accumulation); reference is pure f32.
    if not np.allclose(np.asarray(out), np.asarray(ref), rtol=5e-2, atol=5e-2):
        max_err = float(np.max(np.abs(np.asarray(out) - np.asarray(ref))))
        raise AssertionError(
            f"Pallas output mismatch vs JAX reference (max |err| = {max_err:.4g})")

    print("KERNEL_OK")
</pallas_src>

<mosaic_0001>
module attributes {stable_mosaic.version = 11 : i64} {
  func.func @_counter_kernel(%arg0: i32, %arg1: memref<2x1x8x512xf32, #tpu.memory_space<vmem>>, %arg2: memref<2x32x200xbf16, #tpu.memory_space<vmem>>, %arg3: memref<2x32x1xf32, #tpu.memory_space<vmem>>, %arg4: memref<2x8x216xbf16, #tpu.memory_space<vmem>>, %arg5: memref<2x8x1xf32, #tpu.memory_space<vmem>>, %arg6: memref<1x384xf32, #tpu.memory_space<vmem>>, %arg7: memref<2x8x128xf32, #tpu.memory_space<vmem>>, %arg8: memref<2x1x128xf32, #tpu.memory_space<vmem>>, %arg9: memref<1x8x384xf32, #tpu.memory_space<vmem>>, %arg10: memref<200x384xf32, #tpu.memory_space<vmem>>, %arg11: memref<24x640xf32, #tpu.memory_space<vmem>>, %arg12: memref<216x384xf32, #tpu.memory_space<vmem>>) attributes {dimension_semantics = [#tpu.dimension_semantics<parallel>], iteration_bounds = array<i64: 2>, scalar_prefetch = 0 : i64, scratch_operands = 3 : i64, tpu.core_type = #tpu.core_type<tc>, window_params = [{transform_indices = @transform_0, window_bounds = array<i64: 2, 1, 8, 512>}, {pipeline_mode = #tpu.pipeline_mode<synchronous>, transform_indices = @transform_1, window_bounds = array<i64: 2, 32, 200>}, {pipeline_mode = #tpu.pipeline_mode<synchronous>, transform_indices = @transform_2, window_bounds = array<i64: 2, 32, 1>}, {pipeline_mode = #tpu.pipeline_mode<synchronous>, transform_indices = @transform_3, window_bounds = array<i64: 2, 8, 216>}, {pipeline_mode = #tpu.pipeline_mode<synchronous>, transform_indices = @transform_4, window_bounds = array<i64: 2, 8, 1>}, {pipeline_mode = #tpu.pipeline_mode<synchronous>, transform_indices = @transform_5, window_bounds = array<i64: 1, 384>}, {pipeline_mode = #tpu.pipeline_mode<synchronous>, transform_indices = @transform_6, window_bounds = array<i64: 2, 8, 128>}, {pipeline_mode = #tpu.pipeline_mode<synchronous>, transform_indices = @transform_7, window_bounds = array<i64: 2, 1, 128>}, {transform_indices = @transform_8, window_bounds = array<i64: 1, 8, 384>}]} {
    %c0 = arith.constant 0 : index
    %c0_0 = arith.constant 0 : index
    %0 = vector.load %arg6[%c0, %c0_0] : memref<1x384xf32, #tpu.memory_space<vmem>>, vector<1x384xf32>
    %c0_1 = arith.constant 0 : index
    %c0_2 = arith.constant 0 : index
    %c0_3 = arith.constant 0 : index
    %c0_4 = arith.constant 0 : index
    %1 = vector.load %arg1[%c0_1, %c0_2, %c0_3, %c0_4] : memref<2x1x8x512xf32, #tpu.memory_space<vmem>>, vector<1x1x8x384xf32>
    %2 = vector.shape_cast %1 : vector<1x1x8x384xf32> to vector<8x384xf32>
    %c0_5 = arith.constant 0 : index
    %c0_6 = arith.constant 0 : index
    %3 = vector.load %arg10[%c0_5, %c0_6] : memref<200x384xf32, #tpu.memory_space<vmem>>, vector<8x384xf32>
    tpu.vector_store %arg10[%c0_5, %c0_6], %2 {strides = array<i32>} : memref<200x384xf32, #tpu.memory_space<vmem>>, vector<8x384xf32>,
    %c0_7 = arith.constant 0 : index
    %c0_8 = arith.constant 0 : index
    %c0_9 = arith.constant 0 : index
    %c1 = arith.constant 1 : index
    %4 = vector.load %arg1[%c0_7, %c0_8, %c0_9, %c1] : memref<2x1x8x512xf32, #tpu.memory_space<vmem>>, vector<1x1x8x384xf32>
    %5 = vector.shape_cast %4 : vector<1x1x8x384xf32> to vector<8x384xf32>
    %c8 = arith.constant 8 : index
    %c0_10 = arith.constant 0 : index
    %6 = vector.load %arg10[%c8, %c0_10] : memref<200x384xf32, #tpu.memory_space<vmem>>, vector<8x384xf32>
    tpu.vector_store %arg10[%c8, %c0_10], %5 {strides = array<i32>} : memref<200x384xf32, #tpu.memory_space<vmem>>, vector<8x384xf32>,
    %c0_11 = arith.constant 0 : index
    %c0_12 = arith.constant 0 : index
    %c0_13 = arith.constant 0 : index
    %c2 = arith.constant 2 : index
    %7 = vector.load %arg1[%c0_11, %c0_12, %c0_13, %c2] : memref<2x1x8x512xf32, #tpu.memory_space<vmem>>, vector<1x1x8x384xf32>
    %8 = vector.shape_cast %7 : vector<1x1x8x384xf32> to vector<8x384xf32>
    %c16 = arith.constant 16 : index
    %c0_14 = arith.constant 0 : index
    %9 = vector.load %arg10[%c16, %c0_14] : memref<200x384xf32, #tpu.memory_space<vmem>>, vector<8x384xf32>
    tpu.vector_store %arg10[%c16, %c0_14], %8 {strides = array<i32>} : memref<200x384xf32, #tpu.memory_space<vmem>>, vector<8x384xf32>,
    %c0_15 = arith.constant 0 : index
    %c0_16 = arith.constant 0 : index
    %c0_17 = arith.constant 0 : index
    %c3 = arith.constant 3 : index
    %10 = vector.load %arg1[%c0_15, %c0_16, %c0_17, %c3] : memref<2x1x8x512xf32, #tpu.memory_space<vmem>>, vector<1x1x8x384xf32>
    %11 = vector.shape_cast %10 : vector<1x1x8x384xf32> to vector<8x384xf32>
    %c24 = arith.constant 24 : index
    %c0_18 = arith.constant 0 : index
    %12 = vector.load %arg10[%c24, %c0_18] : memref<200x384xf32, #tpu.memory_space<vmem>>, vector<8x384xf32>
    tpu.vector_store %arg10[%c24, %c0_18], %11 {strides = array<i32>} : memref<200x384xf32, #tpu.memory_space<vmem>>, vector<8x384xf32>,
    %c0_19 = arith.constant 0 : index
    %c0_20 = arith.constant 0 : index
    %c0_21 = arith.constant 0 : index
    %c4 = arith.constant 4 : index
    %13 = vector.load %arg1[%c0_19, %c0_20, %c0_21, %c4] : memref<2x1x8x512xf32, #tpu.memory_space<vmem>>, vector<1x1x8x384xf32>
    %14 = vector.shape_cast %13 : vector<1x1x8x384xf32> to vector<8x384xf32>
    %c32 = arith.constant 32 : index
    %c0_22 = arith.constant 0 : index
    %15 = vector.load %arg10[%c32, %c0_22] : memref<200x384xf32, #tpu.memory_space<vmem>>, vector<8x384xf32>
    tpu.vector_store %arg10[%c32, %c0_22], %14 {strides = array<i32>} : memref<200x384xf32, #tpu.memory_space<vmem>>, vector<8x384xf32>,
    %c0_23 = arith.constant 0 : index
    %c0_24 = arith.constant 0 : index
    %c0_25 = arith.constant 0 : index
    %c20 = arith.constant 20 : index
    %16 = vector.load %arg1[%c0_23, %c0_24, %c0_25, %c20] : memref<2x1x8x512xf32, #tpu.memory_space<vmem>>, vector<1x1x8x384xf32>
    %17 = vector.shape_cast %16 : vector<1x1x8x384xf32> to vector<8x384xf32>
    %c40 = arith.constant 40 : index
    %c0_26 = arith.constant 0 : index
    %18 = vector.load %arg10[%c40, %c0_26] : memref<200x384xf32, #tpu.memory_space<vmem>>, vector<8x384xf32>
    tpu.vector_store %arg10[%c40, %c0_26], %17 {strides = array<i32>} : memref<200x384xf32, #tpu.memory_space<vmem>>, vector<8x384xf32>,
    %c0_27 = arith.constant 0 : index
    %c0_28 = arith.constant 0 : index
    %c0_29 = arith.constant 0 : index
    %c21 = arith.constant 21 : index
    %19 = vector.load %arg1[%c0_27, %c0_28, %c0_29, %c21] : memref<2x1x8x512xf32, #tpu.memory_space<vmem>>, vector<1x1x8x384xf32>
    %20 = vector.shape_cast %19 : vector<1x1x8x384xf32> to vector<8x384xf32>
    %c48 = arith.constant 48 : index
    %c0_30 = arith.constant 0 : index
    %21 = vector.load %arg10[%c48, %c0_30] : memref<200x384xf32, #tpu.memory_space<vmem>>, vector<8x384xf32>
    tpu.vector_store %arg10[%c48, %c0_30], %20 {strides = array<i32>} : memref<200x384xf32, #tpu.memory_space<vmem>>, vector<8x384xf32>,
    %c0_31 = arith.constant 0 : index
    %c0_32 = arith.constant 0 : index
    %c0_33 = arith.constant 0 : index
    %c22 = arith.constant 22 : index
    %22 = vector.load %arg1[%c0_31, %c0_32, %c0_33, %c22] : memref<2x1x8x512xf32, #tpu.memory_space<vmem>>, vector<1x1x8x384xf32>
    %23 = vector.shape_cast %22 : vector<1x1x8x384xf32> to vector<8x384xf32>
    %c56 = arith.constant 56 : index
    %c0_34 = arith.constant 0 : index
    %24 = vector.load %arg10[%c56, %c0_34] : memref<200x384xf32, #tpu.memory_space<vmem>>, vector<8x384xf32>
    tpu.vector_store %arg10[%c56, %c0_34], %23 {strides = array<i32>} : memref<200x384xf32, #tpu.memory_space<vmem>>, vector<8x384xf32>,
    %c0_35 = arith.constant 0 : index
    %c0_36 = arith.constant 0 : index
    %c0_37 = arith.constant 0 : index
    %c23 = arith.constant 23 : index
    %25 = vector.load %arg1[%c0_35, %c0_36, %c0_37, %c23] : memref<2x1x8x512xf32, #tpu.memory_space<vmem>>, vector<1x1x8x384xf32>
    %26 = vector.shape_cast %25 : vector<1x1x8x384xf32> to vector<8x384xf32>
    %c64 = arith.constant 64 : index
    %c0_38 = arith.constant 0 : index
    %27 = vector.load %arg10[%c64, %c0_38] : memref<200x384xf32, #tpu.memory_space<vmem>>, vector<8x384xf32>
    tpu.vector_store %arg10[%c64, %c0_38], %26 {strides = array<i32>} : memref<200x384xf32, #tpu.memory_space<vmem>>, vector<8x384xf32>,
    %c0_39 = arith.constant 0 : index
    %c0_40 = arith.constant 0 : index
    %c0_41 = arith.constant 0 : index
    %c24_42 = arith.constant 24 : index
    %28 = vector.load %arg1[%c0_39, %c0_40, %c0_41, %c24_42] : memref<2x1x8x512xf32, #tpu.memory_space<vmem>>, vector<1x1x8x384xf32>
    %29 = vector.shape_cast %28 : vector<1x1x8x384xf32> to vector<8x384xf32>
    %c72 = arith.constant 72 : index
    %c0_43 = arith.constant 0 : index
    %30 = vector.load %arg10[%c72, %c0_43] : memref<200x384xf32, #tpu.memory_space<vmem>>, vector<8x384xf32>
    tpu.vector_store %arg10[%c72, %c0_43], %29 {strides = array<i32>} : memref<200x384xf32, #tpu.memory_space<vmem>>, vector<8x384xf32>,
    %c0_44 = arith.constant 0 : index
    %c0_45 = arith.constant 0 : index
    %c0_46 = arith.constant 0 : index
    %c40_47 = arith.constant 40 : index
    %31 = vector.load %arg1[%c0_44, %c0_45, %c0_46, %c40_47] : memref<2x1x8x512xf32, #tpu.memory_space<vmem>>, vector<1x1x8x384xf32>
    %32 = vector.shape_cast %31 : vector<1x1x8x384xf32> to vector<8x384xf32>
    %c80 = arith.constant 80 : index
    %c0_48 = arith.constant 0 : index
    %33 = vector.load %arg10[%c80, %c0_48] : memref<200x384xf32, #tpu.memory_space<vmem>>, vector<8x384xf32>
    tpu.vector_store %arg10[%c80, %c0_48], %32 {strides = array<i32>} : memref<200x384xf32, #tpu.memory_space<vmem>>, vector<8x384xf32>,
    %c0_49 = arith.constant 0 : index
    %c0_50 = arith.constant 0 : index
    %c0_51 = arith.constant 0 : index
    %c41 = arith.constant 41 : index
    %34 = vector.load %arg1[%c0_49, %c0_50, %c0_51, %c41] : memref<2x1x8x512xf32, #tpu.memory_space<vmem>>, vector<1x1x8x384xf32>
    %35 = vector.shape_cast %34 : vector<1x1x8x384xf32> to vector<8x384xf32>
    %c88 = arith.constant 88 : index
    %c0_52 = arith.constant 0 : index
    %36 = vector.load %arg10[%c88, %c0_52] : memref<200x384xf32, #tpu.memory_space<vmem>>, vector<8x384xf32>
    tpu.vector_store %arg10[%c88, %c0_52], %35 {strides = array<i32>} : memref<200x384xf32, #tpu.memory_space<vmem>>, vector<8x384xf32>,
    %c0_53 = arith.constant 0 : index
    %c0_54 = arith.constant 0 : index
    %c0_55 = arith.constant 0 : index
    %c42 = arith.constant 42 : index
    %37 = vector.load %arg1[%c0_53, %c0_54, %c0_55, %c42] : memref<2x1x8x512xf32, #tpu.memory_space<vmem>>, vector<1x1x8x384xf32>
    %38 = vector.shape_cast %37 : vector<1x1x8x384xf32> to vector<8x384xf32>
    %c96 = arith.constant 96 : index
    %c0_56 = arith.constant 0 : index
    %39 = vector.load %arg10[%c96, %c0_56] : memref<200x384xf32, #tpu.memory_space<vmem>>, vector<8x384xf32>
    tpu.vector_store %arg10[%c96, %c0_56], %38 {strides = array<i32>} : memref<200x384xf32, #tpu.memory_space<vmem>>, vector<8x384xf32>,
    %c0_57 = arith.constant 0 : index
    %c0_58 = arith.constant 0 : index
    %c0_59 = arith.constant 0 : index
    %c43 = arith.constant 43 : index
    %40 = vector.load %arg1[%c0_57, %c0_58, %c0_59, %c43] : memref<2x1x8x512xf32, #tpu.memory_space<vmem>>, vector<1x1x8x384xf32>
    %41 = vector.shape_cast %40 : vector<1x1x8x384xf32> to vector<8x384xf32>
    %c104 = arith.constant 104 : index
    %c0_60 = arith.constant 0 : index
    %42 = vector.load %arg10[%c104, %c0_60] : memref<200x384xf32, #tpu.memory_space<vmem>>, vector<8x384xf32>
    tpu.vector_store %arg10[%c104, %c0_60], %41 {strides = array<i32>} : memref<200x384xf32, #tpu.memory_space<vmem>>, vector<8x384xf32>,
    %c0_61 = arith.constant 0 : index
    %c0_62 = arith.constant 0 : index
    %c0_63 = arith.constant 0 : index
    %c44 = arith.constant 44 : index
    %43 = vector.load %arg1[%c0_61, %c0_62, %c0_63, %c44] : memref<2x1x8x512xf32, #tpu.memory_space<vmem>>, vector<1x1x8x384xf32>
    %44 = vector.shape_cast %43 : vector<1x1x8x384xf32> to vector<8x384xf32>
    %c112 = arith.constant 112 : index
    %c0_64 = arith.constant 0 : index
    %45 = vector.load %arg10[%c112, %c0_64] : memref<200x384xf32, #tpu.memory_space<vmem>>, vector<8x384xf32>
    tpu.vector_store %arg10[%c112, %c0_64], %44 {strides = array<i32>} : memref<200x384xf32, #tpu.memory_space<vmem>>, vector<8x384xf32>,
    %c0_65 = arith.constant 0 : index
    %c0_66 = arith.constant 0 : index
    %c0_67 = arith.constant 0 : index
    %c60 = arith.constant 60 : index
    %46 = vector.load %arg1[%c0_65, %c0_66, %c0_67, %c60] : memref<2x1x8x512xf32, #tpu.memory_space<vmem>>, vector<1x1x8x384xf32>
    %47 = vector.shape_cast %46 : vector<1x1x8x384xf32> to vector<8x384xf32>
    %c120 = arith.constant 120 : index
    %c0_68 = arith.constant 0 : index
    %48 = vector.load %arg10[%c120, %c0_68] : memref<200x384xf32, #tpu.memory_space<vmem>>, vector<8x384xf32>
    tpu.vector_store %arg10[%c120, %c0_68], %47 {strides = array<i32>} : memref<200x384xf32, #tpu.memory_space<vmem>>, vector<8x384xf32>,
    %c0_69 = arith.constant 0 : index
    %c0_70 = arith.constant 0 : index
    %c0_71 = arith.constant 0 : index
    %c61 = arith.constant 61 : index
    %49 = vector.load %arg1[%c0_69, %c0_70, %c0_71, %c61] : memref<2x1x8x512xf32, #tpu.memory_space<vmem>>, vector<1x1x8x384xf32>
    %50 = vector.shape_cast %49 : vector<1x1x8x384xf32> to vector<8x384xf32>
    %c128 = arith.constant 128 : index
    %c0_72 = arith.constant 0 : index
    %51 = vector.load %arg10[%c128, %c0_72] : memref<200x384xf32, #tpu.memory_space<vmem>>, vector<8x384xf32>
    tpu.vector_store %arg10[%c128, %c0_72], %50 {strides = array<i32>} : memref<200x384xf32, #tpu.memory_space<vmem>>, vector<8x384xf32>,
    %c0_73 = arith.constant 0 : index
    %c0_74 = arith.constant 0 : index
    %c0_75 = arith.constant 0 : index
    %c62 = arith.constant 62 : index
    %52 = vector.load %arg1[%c0_73, %c0_74, %c0_75, %c62] : memref<2x1x8x512xf32, #tpu.memory_space<vmem>>, vector<1x1x8x384xf32>
    %53 = vector.shape_cast %52 : vector<1x1x8x384xf32> to vector<8x384xf32>
    %c136 = arith.constant 136 : index
    %c0_76 = arith.constant 0 : index
    %54 = vector.load %arg10[%c136, %c0_76] : memref<200x384xf32, #tpu.memory_space<vmem>>, vector<8x384xf32>
    tpu.vector_store %arg10[%c136, %c0_76], %53 {strides = array<i32>} : memref<200x384xf32, #tpu.memory_space<vmem>>, vector<8x384xf32>,
    %c0_77 = arith.constant 0 : index
    %c0_78 = arith.constant 0 : index
    %c0_79 = arith.constant 0 : index
    %c63 = arith.constant 63 : index
    %55 = vector.load %arg1[%c0_77, %c0_78, %c0_79, %c63] : memref<2x1x8x512xf32, #tpu.memory_space<vmem>>, vector<1x1x8x384xf32>
    %56 = vector.shape_cast %55 : vector<1x1x8x384xf32> to vector<8x384xf32>
    %c144 = arith.constant 144 : index
    %c0_80 = arith.constant 0 : index
    %57 = vector.load %arg10[%c144, %c0_80] : memref<200x384xf32, #tpu.memory_space<vmem>>, vector<8x384xf32>
    tpu.vector_store %arg10[%c144, %c0_80], %56 {strides = array<i32>} : memref<200x384xf32, #tpu.memory_space<vmem>>, vector<8x384xf32>,
    %c0_81 = arith.constant 0 : index
    %c0_82 = arith.constant 0 : index
    %c0_83 = arith.constant 0 : index
    %c64_84 = arith.constant 64 : index
    %58 = vector.load %arg1[%c0_81, %c0_82, %c0_83, %c64_84] : memref<2x1x8x512xf32, #tpu.memory_space<vmem>>, vector<1x1x8x384xf32>
    %59 = vector.shape_cast %58 : vector<1x1x8x384xf32> to vector<8x384xf32>
    %c152 = arith.constant 152 : index
    %c0_85 = arith.constant 0 : index
    %60 = vector.load %arg10[%c152, %c0_85] : memref<200x384xf32, #tpu.memory_space<vmem>>, vector<8x384xf32>
    tpu.vector_store %arg10[%c152, %c0_85], %59 {strides = array<i32>} : memref<200x384xf32, #tpu.memory_space<vmem>>, vector<8x384xf32>,
    %c0_86 = arith.constant 0 : index
    %c0_87 = arith.constant 0 : index
    %c0_88 = arith.constant 0 : index
    %c80_89 = arith.constant 80 : index
    %61 = vector.load %arg1[%c0_86, %c0_87, %c0_88, %c80_89] : memref<2x1x8x512xf32, #tpu.memory_space<vmem>>, vector<1x1x8x384xf32>
    %62 = vector.shape_cast %61 : vector<1x1x8x384xf32> to vector<8x384xf32>
    %c160 = arith.constant 160 : index
    %c0_90 = arith.constant 0 : index
    %63 = vector.load %arg10[%c160, %c0_90] : memref<200x384xf32, #tpu.memory_space<vmem>>, vector<8x384xf32>
    tpu.vector_store %arg10[%c160, %c0_90], %62 {strides = array<i32>} : memref<200x384xf32, #tpu.memory_space<vmem>>, vector<8x384xf32>,
    %c0_91 = arith.constant 0 : index
    %c0_92 = arith.constant 0 : index
    %c0_93 = arith.constant 0 : index
    %c81 = arith.constant 81 : index
    %64 = vector.load %arg1[%c0_91, %c0_92, %c0_93, %c81] : memref<2x1x8x512xf32, #tpu.memory_space<vmem>>, vector<1x1x8x384xf32>
    %65 = vector.shape_cast %64 : vector<1x1x8x384xf32> to vector<8x384xf32>
    %c168 = arith.constant 168 : index
    %c0_94 = arith.constant 0 : index
    %66 = vector.load %arg10[%c168, %c0_94] : memref<200x384xf32, #tpu.memory_space<vmem>>, vector<8x384xf32>
    tpu.vector_store %arg10[%c168, %c0_94], %65 {strides = array<i32>} : memref<200x384xf32, #tpu.memory_space<vmem>>, vector<8x384xf32>,
    %c0_95 = arith.constant 0 : index
    %c0_96 = arith.constant 0 : index
    %c0_97 = arith.constant 0 : index
    %c82 = arith.constant 82 : index
    %67 = vector.load %arg1[%c0_95, %c0_96, %c0_97, %c82] : memref<2x1x8x512xf32, #tpu.memory_space<vmem>>, vector<1x1x8x384xf32>
    %68 = vector.shape_cast %67 : vector<1x1x8x384xf32> to vector<8x384xf32>
    %c176 = arith.constant 176 : index
    %c0_98 = arith.constant 0 : index
    %69 = vector.load %arg10[%c176, %c0_98] : memref<200x384xf32, #tpu.memory_space<vmem>>, vector<8x384xf32>
    tpu.vector_store %arg10[%c176, %c0_98], %68 {strides = array<i32>} : memref<200x384xf32, #tpu.memory_space<vmem>>, vector<8x384xf32>,
    %c0_99 = arith.constant 0 : index
    %c0_100 = arith.constant 0 : index
    %c0_101 = arith.constant 0 : index
    %c83 = arith.constant 83 : index
    %70 = vector.load %arg1[%c0_99, %c0_100, %c0_101, %c83] : memref<2x1x8x512xf32, #tpu.memory_space<vmem>>, vector<1x1x8x384xf32>
    %71 = vector.shape_cast %70 : vector<1x1x8x384xf32> to vector<8x384xf32>
    %c184 = arith.constant 184 : index
    %c0_102 = arith.constant 0 : index
    %72 = vector.load %arg10[%c184, %c0_102] : memref<200x384xf32, #tpu.memory_space<vmem>>, vector<8x384xf32>
    tpu.vector_store %arg10[%c184, %c0_102], %71 {strides = array<i32>} : memref<200x384xf32, #tpu.memory_space<vmem>>, vector<8x384xf32>,
    %c0_103 = arith.constant 0 : index
    %c0_104 = arith.constant 0 : index
    %c0_105 = arith.constant 0 : index
    %c84 = arith.constant 84 : index
    %73 = vector.load %arg1[%c0_103, %c0_104, %c0_105, %c84] : memref<2x1x8x512xf32, #tpu.memory_space<vmem>>, vector<1x1x8x384xf32>
    %74 = vector.shape_cast %73 : vector<1x1x8x384xf32> to vector<8x384xf32>
    %c192 = arith.constant 192 : index
    %c0_106 = arith.constant 0 : index
    %75 = vector.load %arg10[%c192, %c0_106] : memref<200x384xf32, #tpu.memory_space<vmem>>, vector<8x384xf32>
    tpu.vector_store %arg10[%c192, %c0_106], %74 {strides = array<i32>} : memref<200x384xf32, #tpu.memory_space<vmem>>, vector<8x384xf32>,
    %c0_107 = arith.constant 0 : index
    %c0_108 = arith.constant 0 : index
    %c0_109 = arith.constant 0 : index
    %76 = vector.load %arg2[%c0_107, %c0_108, %c0_109] : memref<2x32x200xbf16, #tpu.memory_space<vmem>>, vector<1x32x200xbf16>
    %77 = vector.shape_cast %76 : vector<1x32x200xbf16> to vector<32x200xbf16>
    %c0_110 = arith.constant 0 : index
    %c0_111 = arith.constant 0 : index
    %78 = vector.load %arg10[%c0_110, %c0_111] : memref<200x384xf32, #tpu.memory_space<vmem>>, vector<200x384xf32>
    %79 = arith.truncf %78 : vector<200x384xf32> to vector<200x384xbf16>
    %cst = arith.constant dense<0.000000e+00> : vector<32x384xf32>
    %80 = tpu.matmul %77, %79, %cst {dimension_numbers = #tpu.dot_dimension_numbers<[1], [0], [0], [1], [0, 0, 1, 1], [], []>} : vector<32x200xbf16>, vector<200x384xbf16>, vector<32x384xf32> -> vector<32x384xf32>
    %c0_112 = arith.constant 0 : index
    %c0_113 = arith.constant 0 : index
    %c0_114 = arith.constant 0 : index
    %81 = vector.load %arg3[%c0_112, %c0_113, %c0_114] : memref<2x32x1xf32, #tpu.memory_space<vmem>>, vector<1x32x1xf32>
    %82 = vector.shape_cast %81 : vector<1x32x1xf32> to vector<32x1xf32>
    %83 = vector.broadcast %82 : vector<32x1xf32> to vector<32x384xf32>
    %84 = arith.addf %80, %83 : vector<32x384xf32>
    %85 = vector.extract_strided_slice %84 {offsets = [0, 0], sizes = [24, 384], strides = [1, 1]} : vector<32x384xf32> to vector<24x384xf32>
    %cst_115 = arith.constant 0.000000e+00 : f32
    %86 = vector.broadcast %cst_115 : f32 to vector<24x384xf32>
    %87 = arith.maximumf %85, %86 : vector<24x384xf32>
    %88 = vector.broadcast %0 : vector<1x384xf32> to vector<24x384xf32>
    %89 = arith.mulf %87, %88 : vector<24x384xf32>
    %90 = vector.extract_strided_slice %84 {offsets = [24, 0], sizes = [8, 384], strides = [1, 1]} : vector<32x384xf32> to vector<8x384xf32>
    %cst_116 = arith.constant 0.000000e+00 : f32
    %91 = vector.broadcast %cst_116 : f32 to vector<24x640xf32>
    %c0_117 = arith.constant 0 : index
    %c0_118 = arith.constant 0 : index
    %92 = vector.load %arg11[%c0_117, %c0_118] : memref<24x640xf32, #tpu.memory_space<vmem>>, vector<24x640xf32>
    tpu.vector_store %arg11[%c0_117, %c0_118], %91 {strides = array<i32>} : memref<24x640xf32, #tpu.memory_space<vmem>>, vector<24x640xf32>,
    %c0_119 = arith.constant 0 : index
    %c128_120 = arith.constant 128 : index
    %93 = vector.load %arg11[%c0_119, %c128_120] : memref<24x640xf32, #tpu.memory_space<vmem>>, vector<24x384xf32>
    tpu.vector_store %arg11[%c0_119, %c128_120], %89 {strides = array<i32>} : memref<24x640xf32, #tpu.memory_space<vmem>>, vector<24x384xf32>,
    %c0_121 = arith.constant 0 : index
    %c107 = arith.constant 107 : index
    %94 = vector.load %arg11[%c0_121, %c107] : memref<24x640xf32, #tpu.memory_space<vmem>>, vector<24x384xf32>
    %c0_122 = arith.constant 0 : index
    %c0_123 = arith.constant 0 : index
    %95 = vector.load %arg12[%c0_122, %c0_123] : memref<216x384xf32, #tpu.memory_space<vmem>>, vector<24x384xf32>
    tpu.vector_store %arg12[%c0_122, %c0_123], %94 {strides = array<i32>} : memref<216x384xf32, #tpu.memory_space<vmem>>, vector<24x384xf32>,
    %c0_124 = arith.constant 0 : index
    %c108 = arith.constant 108 : index
    %96 = vector.load %arg11[%c0_124, %c108] : memref<24x640xf32, #tpu.memory_space<vmem>>, vector<24x384xf32>
    %c24_125 = arith.constant 24 : index
    %c0_126 = arith.constant 0 : index
    %97 = vector.load %arg12[%c24_125, %c0_126] : memref<216x384xf32, #tpu.memory_space<vmem>>, vector<24x384xf32>
    tpu.vector_store %arg12[%c24_125, %c0_126], %96 {strides = array<i32>} : memref<216x384xf32, #tpu.memory_space<vmem>>, vector<24x384xf32>,
    %c0_127 = arith.constant 0 : index
    %c109 = arith.constant 109 : index
    %98 = vector.load %arg11[%c0_127, %c109] : memref<24x640xf32, #tpu.memory_space<vmem>>, vector<24x384xf32>
    %c48_128 = arith.constant 48 : index
    %c0_129 = arith.constant 0 : index
    %99 = vector.load %arg12[%c48_128, %c0_129] : memref<216x384xf32, #tpu.memory_space<vmem>>, vector<24x384xf32>
    tpu.vector_store %arg12[%c48_128, %c0_129], %98 {strides = array<i32>} : memref<216x384xf32, #tpu.memory_space<vmem>>, vector<24x384xf32>,
    %c0_130 = arith.constant 0 : index
    %c127 = arith.constant 127 : index
    %100 = vector.load %arg11[%c0_130, %c127] : memref<24x640xf32, #tpu.memory_space<vmem>>, vector<24x384xf32>
    %c72_131 = arith.constant 72 : index
    %c0_132 = arith.constant 0 : index
    %101 = vector.load %arg12[%c72_131, %c0_132] : memref<216x384xf32, #tpu.memory_space<vmem>>, vector<24x384xf32>
    tpu.vector_store %arg12[%c72_131, %c0_132], %100 {strides = array<i32>} : memref<216x384xf32, #tpu.memory_space<vmem>>, vector<24x384xf32>,
    %c0_133 = arith.constant 0 : index
    %c128_134 = arith.constant 128 : index
    %102 = vector.load %arg11[%c0_133, %c128_134] : memref<24x640xf32, #tpu.memory_space<vmem>>, vector<24x384xf32>
    %c96_135 = arith.constant 96 : index
    %c0_136 = arith.constant 0 : index
    %103 = vector.load %arg12[%c96_135, %c0_136] : memref<216x384xf32, #tpu.memory_space<vmem>>, vector<24x384xf32>
    tpu.vector_store %arg12[%c96_135, %c0_136], %102 {strides = array<i32>} : memref<216x384xf32, #tpu.memory_space<vmem>>, vector<24x384xf32>,
    %c0_137 = arith.constant 0 : index
    %c129 = arith.constant 129 : index
    %104 = vector.load %arg11[%c0_137, %c129] : memref<24x640xf32, #tpu.memory_space<vmem>>, vector<24x384xf32>
    %c120_138 = arith.constant 120 : index
    %c0_139 = arith.constant 0 : index
    %105 = vector.load %arg12[%c120_138, %c0_139] : memref<216x384xf32, #tpu.memory_space<vmem>>, vector<24x384xf32>
    tpu.vector_store %arg12[%c120_138, %c0_139], %104 {strides = array<i32>} : memref<216x384xf32, #tpu.memory_space<vmem>>, vector<24x384xf32>,
    %c0_140 = arith.constant 0 : index
    %c147 = arith.constant 147 : index
    %106 = vector.load %arg11[%c0_140, %c147] : memref<24x640xf32, #tpu.memory_space<vmem>>, vector<24x384xf32>
    %c144_141 = arith.constant 144 : index
    %c0_142 = arith.constant 0 : index
    %107 = vector.load %arg12[%c144_141, %c0_142] : memref<216x384xf32, #tpu.memory_space<vmem>>, vector<24x384xf32>
    tpu.vector_store %arg12[%c144_141, %c0_142], %106 {strides = array<i32>} : memref<216x384xf32, #tpu.memory_space<vmem>>, vector<24x384xf32>,
    %c0_143 = arith.constant 0 : index
    %c148 = arith.constant 148 : index
    %108 = vector.load %arg11[%c0_143, %c148] : memref<24x640xf32, #tpu.memory_space<vmem>>, vector<24x384xf32>
    %c168_144 = arith.constant 168 : index
    %c0_145 = arith.constant 0 : index
    %109 = vector.load %arg12[%c168_144, %c0_145] : memref<216x384xf32, #tpu.memory_space<vmem>>, vector<24x384xf32>
    tpu.vector_store %arg12[%c168_144, %c0_145], %108 {strides = array<i32>} : memref<216x384xf32, #tpu.memory_space<vmem>>, vector<24x384xf32>,
    %c0_146 = arith.constant 0 : index
    %c149 = arith.constant 149 : index
    %110 = vector.load %arg11[%c0_146, %c149] : memref<24x640xf32, #tpu.memory_space<vmem>>, vector<24x384xf32>
    %c192_147 = arith.constant 192 : index
    %c0_148 = arith.constant 0 : index
    %111 = vector.load %arg12[%c192_147, %c0_148] : memref<216x384xf32, #tpu.memory_space<vmem>>, vector<24x384xf32>
    tpu.vector_store %arg12[%c192_147, %c0_148], %110 {strides = array<i32>} : memref<216x384xf32, #tpu.memory_space<vmem>>, vector<24x384xf32>,
    %c0_149 = arith.constant 0 : index
    %c0_150 = arith.constant 0 : index
    %c0_151 = arith.constant 0 : index
    %112 = vector.load %arg4[%c0_149, %c0_150, %c0_151] : memref<2x8x216xbf16, #tpu.memory_space<vmem>>, vector<1x8x216xbf16>
    %113 = vector.shape_cast %112 : vector<1x8x216xbf16> to vector<8x216xbf16>
    %c0_152 = arith.constant 0 : index
    %c0_153 = arith.constant 0 : index
    %114 = vector.load %arg12[%c0_152, %c0_153] : memref<216x384xf32, #tpu.memory_space<vmem>>, vector<216x384xf32>
    %115 = arith.truncf %114 : vector<216x384xf32> to vector<216x384xbf16>
    %cst_154 = arith.constant dense<0.000000e+00> : vector<8x384xf32>
    %116 = tpu.matmul %113, %115, %cst_154 {dimension_numbers = #tpu.dot_dimension_numbers<[1], [0], [0], [1], [0, 0, 1, 1], [], []>} : vector<8x216xbf16>, vector<216x384xbf16>, vector<8x384xf32> -> vector<8x384xf32>
    %c0_155 = arith.constant 0 : index
    %c0_156 = arith.constant 0 : index
    %c0_157 = arith.constant 0 : index
    %117 = vector.load %arg5[%c0_155, %c0_156, %c0_157] : memref<2x8x1xf32, #tpu.memory_space<vmem>>, vector<1x8x1xf32>
    %118 = vector.shape_cast %117 : vector<1x8x1xf32> to vector<8x1xf32>
    %119 = vector.broadcast %118 : vector<8x1xf32> to vector<8x384xf32>
    %120 = arith.addf %116, %119 : vector<8x384xf32>
    %c0_158 = arith.constant 0 : index
    %c0_159 = arith.constant 0 : index
    %c0_160 = arith.constant 0 : index
    %c42_161 = arith.constant 42 : index
    %121 = vector.load %arg1[%c0_158, %c0_159, %c0_160, %c42_161] : memref<2x1x8x512xf32, #tpu.memory_space<vmem>>, vector<1x1x8x384xf32>
    %122 = vector.shape_cast %121 : vector<1x1x8x384xf32> to vector<8x384xf32>
    %c1_162 = arith.constant 1 : index
    %c0_163 = arith.constant 0 : index
    %c0_164 = arith.constant 0 : index
    %c0_165 = arith.constant 0 : index
    %123 = vector.load %arg1[%c1_162, %c0_163, %c0_164, %c0_165] : memref<2x1x8x512xf32, #tpu.memory_space<vmem>>, vector<1x1x8x384xf32>
    %124 = vector.shape_cast %123 : vector<1x1x8x384xf32> to vector<8x384xf32>
    %c0_166 = arith.constant 0 : index
    %c0_167 = arith.constant 0 : index
    %125 = vector.load %arg10[%c0_166, %c0_167] : memref<200x384xf32, #tpu.memory_space<vmem>>, vector<8x384xf32>
    tpu.vector_store %arg10[%c0_166, %c0_167], %124 {strides = array<i32>} : memref<200x384xf32, #tpu.memory_space<vmem>>, vector<8x384xf32>,
    %c1_168 = arith.constant 1 : index
    %c0_169 = arith.constant 0 : index
    %c0_170 = arith.constant 0 : index
    %c1_171 = arith.constant 1 : index
    %126 = vector.load %arg1[%c1_168, %c0_169, %c0_170, %c1_171] : memref<2x1x8x512xf32, #tpu.memory_space<vmem>>, vector<1x1x8x384xf32>
    %127 = vector.shape_cast %126 : vector<1x1x8x384xf32> to vector<8x384xf32>
    %c8_172 = arith.constant 8 : index
    %c0_173 = arith.constant 0 : index
    %128 = vector.load %arg10[%c8_172, %c0_173] : memref<200x384xf32, #tpu.memory_space<vmem>>, vector<8x384xf32>
    tpu.vector_store %arg10[%c8_172, %c0_173], %127 {strides = array<i32>} : memref<200x384xf32, #tpu.memory_space<vmem>>, vector<8x384xf32>,
    %c1_174 = arith.constant 1 : index
    %c0_175 = arith.constant 0 : index
    %c0_176 = arith.constant 0 : index
    %c2_177 = arith.constant 2 : index
    %129 = vector.load %arg1[%c1_174, %c0_175, %c0_176, %c2_177] : memref<2x1x8x512xf32, #tpu.memory_space<vmem>>, vector<1x1x8x384xf32>
    %130 = vector.shape_cast %129 : vector<1x1x8x384xf32> to vector<8x384xf32>
    %c16_178 = arith.constant 16 : index
    %c0_179 = arith.constant 0 : index
    %131 = vector.load %arg10[%c16_178, %c0_179] : memref<200x384xf32, #tpu.memory_space<vmem>>, vector<8x384xf32>
    tpu.vector_store %arg10[%c16_178, %c0_179], %130 {strides = array<i32>} : memref<200x384xf32, #tpu.memory_space<vmem>>, vector<8x384xf32>,
    %c1_180 = arith.constant 1 : index
    %c0_181 = arith.constant 0 : index
    %c0_182 = arith.constant 0 : index
    %c3_183 = arith.constant 3 : index
    %132 = vector.load %arg1[%c1_180, %c0_181, %c0_182, %c3_183] : memref<2x1x8x512xf32, #tpu.memory_space<vmem>>, vector<1x1x8x384xf32>
    %133 = vector.shape_cast %132 : vector<1x1x8x384xf32> to vector<8x384xf32>
    %c24_184 = arith.constant 24 : index
    %c0_185 = arith.constant 0 : index
    %134 = vector.load %arg10[%c24_184, %c0_185] : memref<200x384xf32, #tpu.memory_space<vmem>>, vector<8x384xf32>
    tpu.vector_store %arg10[%c24_184, %c0_185], %133 {strides = array<i32>} : memref<200x384xf32, #tpu.memory_space<vmem>>, vector<8x384xf32>,
    %c1_186 = arith.constant 1 : index
    %c0_187 = arith.constant 0 : index
    %c0_188 = arith.constant 0 : index
    %c4_189 = arith.constant 4 : index
    %135 = vector.load %arg1[%c1_186, %c0_187, %c0_188, %c4_189] : memref<2x1x8x512xf32, #tpu.memory_space<vmem>>, vector<1x1x8x384xf32>
    %136 = vector.shape_cast %135 : vector<1x1x8x384xf32> to vector<8x384xf32>
    %c32_190 = arith.constant 32 : index
    %c0_191 = arith.constant 0 : index
    %137 = vector.load %arg10[%c32_190, %c0_191] : memref<200x384xf32, #tpu.memory_space<vmem>>, vector<8x384xf32>
    tpu.vector_store %arg10[%c32_190, %c0_191], %136 {strides = array<i32>} : memref<200x384xf32, #tpu.memory_space<vmem>>, vector<8x384xf32>,
    %c1_192 = arith.constant 1 : index
    %c0_193 = arith.constant 0 : index
    %c0_194 = arith.constant 0 : index
    %c20_195 = arith.constant 20 : index
    %138 = vector.load %arg1[%c1_192, %c0_193, %c0_194, %c20_195] : memref<2x1x8x512xf32, #tpu.memory_space<vmem>>, vector<1x1x8x384xf32>
    %139 = vector.shape_cast %138 : vector<1x1x8x384xf32> to vector<8x384xf32>
    %c40_196 = arith.constant 40 : index
    %c0_197 = arith.constant 0 : index
    %140 = vector.load %arg10[%c40_196, %c0_197] : memref<200x384xf32, #tpu.memory_space<vmem>>, vector<8x384xf32>
    tpu.vector_store %arg10[%c40_196, %c0_197], %139 {strides = array<i32>} : memref<200x384xf32, #tpu.memory_space<vmem>>, vector<8x384xf32>,
    %c1_198 = arith.constant 1 : index
    %c0_199 = arith.constant 0 : index
    %c0_200 = arith.constant 0 : index
    %c21_201 = arith.constant 21 : index
    %141 = vector.load %arg1[%c1_198, %c0_199, %c0_200, %c21_201] : memref<2x1x8x512xf32, #tpu.memory_space<vmem>>, vector<1x1x8x384xf32>
    %142 = vector.shape_cast %141 : vector<1x1x8x384xf32> to vector<8x384xf32>
    %c48_202 = arith.constant 48 : index
    %c0_203 = arith.constant 0 : index
    %143 = vector.load %arg10[%c48_202, %c0_203] : memref<200x384xf32, #tpu.memory_space<vmem>>, vector<8x384xf32>
    tpu.vector_store %arg10[%c48_202, %c0_203], %142 {strides = array<i32>} : memref<200x384xf32, #tpu.memory_space<vmem>>, vector<8x384xf32>,
    %c1_204 = arith.constant 1 : index
    %c0_205 = arith.constant 0 : index
    %c0_206 = arith.constant 0 : index
    %c22_207 = arith.constant 22 : index
    %144 = vector.load %arg1[%c1_204, %c0_205, %c0_206, %c22_207] : memref<2x1x8x512xf32, #tpu.memory_space<vmem>>, vector<1x1x8x384xf32>
    %145 = vector.shape_cast %144 : vector<1x1x8x384xf32> to vector<8x384xf32>
    %c56_208 = arith.constant 56 : index
    %c0_209 = arith.constant 0 : index
    %146 = vector.load %arg10[%c56_208, %c0_209] : memref<200x384xf32, #tpu.memory_space<vmem>>, vector<8x384xf32>
    tpu.vector_store %arg10[%c56_208, %c0_209], %145 {strides = array<i32>} : memref<200x384xf32, #tpu.memory_space<vmem>>, vector<8x384xf32>,
    %c1_210 = arith.constant 1 : index
    %c0_211 = arith.constant 0 : index
    %c0_212 = arith.constant 0 : index
    %c23_213 = arith.constant 23 : index
    %147 = vector.load %arg1[%c1_210, %c0_211, %c0_212, %c23_213] : memref<2x1x8x512xf32, #tpu.memory_space<vmem>>, vector<1x1x8x384xf32>
    %148 = vector.shape_cast %147 : vector<1x1x8x384xf32> to vector<8x384xf32>
    %c64_214 = arith.constant 64 : index
    %c0_215 = arith.constant 0 : index
    %149 = vector.load %arg10[%c64_214, %c0_215] : memref<200x384xf32, #tpu.memory_space<vmem>>, vector<8x384xf32>
    tpu.vector_store %arg10[%c64_214, %c0_215], %148 {strides = array<i32>} : memref<200x384xf32, #tpu.memory_space<vmem>>, vector<8x384xf32>,
    %c1_216 = arith.constant 1 : index
    %c0_217 = arith.constant 0 : index
    %c0_218 = arith.constant 0 : index
    %c24_219 = arith.constant 24 : index
    %150 = vector.load %arg1[%c1_216, %c0_217, %c0_218, %c24_219] : memref<2x1x8x512xf32, #tpu.memory_space<vmem>>, vector<1x1x8x384xf32>
    %151 = vector.shape_cast %150 : vector<1x1x8x384xf32> to vector<8x384xf32>
    %c72_220 = arith.constant 72 : index
    %c0_221 = arith.constant 0 : index
    %152 = vector.load %arg10[%c72_220, %c0_221] : memref<200x384xf32, #tpu.memory_space<vmem>>, vector<8x384xf32>
    tpu.vector_store %arg10[%c72_220, %c0_221], %151 {strides = array<i32>} : memref<200x384xf32, #tpu.memory_space<vmem>>, vector<8x384xf32>,
    %c1_222 = arith.constant 1 : index
    %c0_223 = arith.constant 0 : index
    %c0_224 = arith.constant 0 : index
    %c40_225 = arith.constant 40 : index
    %153 = vector.load %arg1[%c1_222, %c0_223, %c0_224, %c40_225] : memref<2x1x8x512xf32, #tpu.memory_space<vmem>>, vector<1x1x8x384xf32>
    %154 = vector.shape_cast %153 : vector<1x1x8x384xf32> to vector<8x384xf32>
    %c80_226 = arith.constant 80 : index
    %c0_227 = arith.constant 0 : index
    %155 = vector.load %arg10[%c80_226, %c0_227] : memref<200x384xf32, #tpu.memory_space<vmem>>, vector<8x384xf32>
    tpu.vector_store %arg10[%c80_226, %c0_227], %154 {strides = array<i32>} : memref<200x384xf32, #tpu.memory_space<vmem>>, vector<8x384xf32>,
    %c1_228 = arith.constant 1 : index
    %c0_229 = arith.constant 0 : index
    %c0_230 = arith.constant 0 : index
    %c41_231 = arith.constant 41 : index
    %156 = vector.load %arg1[%c1_228, %c0_229, %c0_230, %c41_231] : memref<2x1x8x512xf32, #tpu.memory_space<vmem>>, vector<1x1x8x384xf32>
    %157 = vector.shape_cast %156 : vector<1x1x8x384xf32> to vector<8x384xf32>
    %c88_232 = arith.constant 88 : index
    %c0_233 = arith.constant 0 : index
    %158 = vector.load %arg10[%c88_232, %c0_233] : memref<200x384xf32, #tpu.memory_space<vmem>>, vector<8x384xf32>
    tpu.vector_store %arg10[%c88_232, %c0_233], %157 {strides = array<i32>} : memref<200x384xf32, #tpu.memory_space<vmem>>, vector<8x384xf32>,
    %c1_234 = arith.constant 1 : index
    %c0_235 = arith.constant 0 : index
    %c0_236 = arith.constant 0 : index
    %c42_237 = arith.constant 42 : index
    %159 = vector.load %arg1[%c1_234, %c0_235, %c0_236, %c42_237] : memref<2x1x8x512xf32, #tpu.memory_space<vmem>>, vector<1x1x8x384xf32>
    %160 = vector.shape_cast %159 : vector<1x1x8x384xf32> to vector<8x384xf32>
    %c96_238 = arith.constant 96 : index
    %c0_239 = arith.constant 0 : index
    %161 = vector.load %arg10[%c96_238, %c0_239] : memref<200x384xf32, #tpu.memory_space<vmem>>, vector<8x384xf32>
    tpu.vector_store %arg10[%c96_238, %c0_239], %160 {strides = array<i32>} : memref<200x384xf32, #tpu.memory_space<vmem>>, vector<8x384xf32>,
    %c1_240 = arith.constant 1 : index
    %c0_241 = arith.constant 0 : index
    %c0_242 = arith.constant 0 : index
    %c43_243 = arith.constant 43 : index
    %162 = vector.load %arg1[%c1_240, %c0_241, %c0_242, %c43_243] : memref<2x1x8x512xf32, #tpu.memory_space<vmem>>, vector<1x1x8x384xf32>
    %163 = vector.shape_cast %162 : vector<1x1x8x384xf32> to vector<8x384xf32>
    %c104_244 = arith.constant 104 : index
    %c0_245 = arith.constant 0 : index
    %164 = vector.load %arg10[%c104_244, %c0_245] : memref<200x384xf32, #tpu.memory_space<vmem>>, vector<8x384xf32>
    tpu.vector_store %arg10[%c104_244, %c0_245], %163 {strides = array<i32>} : memref<200x384xf32, #tpu.memory_space<vmem>>, vector<8x384xf32>,
    %c1_246 = arith.constant 1 : index
    %c0_247 = arith.constant 0 : index
    %c0_248 = arith.constant 0 : index
    %c44_249 = arith.constant 44 : index
    %165 = vector.load %arg1[%c1_246, %c0_247, %c0_248, %c44_249] : memref<2x1x8x512xf32, #tpu.memory_space<vmem>>, vector<1x1x8x384xf32>
    %166 = vector.shape_cast %165 : vector<1x1x8x384xf32> to vector<8x384xf32>
    %c112_250 = arith.constant 112 : index
    %c0_251 = arith.constant 0 : index
    %167 = vector.load %arg10[%c112_250, %c0_251] : memref<200x384xf32, #tpu.memory_space<vmem>>, vector<8x384xf32>
    tpu.vector_store %arg10[%c112_250, %c0_251], %166 {strides = array<i32>} : memref<200x384xf32, #tpu.memory_space<vmem>>, vector<8x384xf32>,
    %c1_252 = arith.constant 1 : index
    %c0_253 = arith.constant 0 : index
    %c0_254 = arith.constant 0 : index
    %c60_255 = arith.constant 60 : index
    %168 = vector.load %arg1[%c1_252, %c0_253, %c0_254, %c60_255] : memref<2x1x8x512xf32, #tpu.memory_space<vmem>>, vector<1x1x8x384xf32>
    %169 = vector.shape_cast %168 : vector<1x1x8x384xf32> to vector<8x384xf32>
    %c120_256 = arith.constant 120 : index
    %c0_257 = arith.constant 0 : index
    %170 = vector.load %arg10[%c120_256, %c0_257] : memref<200x384xf32, #tpu.memory_space<vmem>>, vector<8x384xf32>
    tpu.vector_store %arg10[%c120_256, %c0_257], %169 {strides = array<i32>} : memref<200x384xf32, #tpu.memory_space<vmem>>, vector<8x384xf32>,
    %c1_258 = arith.constant 1 : index
    %c0_259 = arith.constant 0 : index
    %c0_260 = arith.constant 0 : index
    %c61_261 = arith.constant 61 : index
    %171 = vector.load %arg1[%c1_258, %c0_259, %c0_260, %c61_261] : memref<2x1x8x512xf32, #tpu.memory_space<vmem>>, vector<1x1x8x384xf32>
    %172 = vector.shape_cast %171 : vector<1x1x8x384xf32> to vector<8x384xf32>
    %c128_262 = arith.constant 128 : index
    %c0_263 = arith.constant 0 : index
    %173 = vector.load %arg10[%c128_262, %c0_263] : memref<200x384xf32, #tpu.memory_space<vmem>>, vector<8x384xf32>
    tpu.vector_store %arg10[%c128_262, %c0_263], %172 {strides = array<i32>} : memref<200x384xf32, #tpu.memory_space<vmem>>, vector<8x384xf32>,
    %c1_264 = arith.constant 1 : index
    %c0_265 = arith.constant 0 : index
    %c0_266 = arith.constant 0 : index
    %c62_267 = arith.constant 62 : index
    %174 = vector.load %arg1[%c1_264, %c0_265, %c0_266, %c62_267] : memref<2x1x8x512xf32, #tpu.memory_space<vmem>>, vector<1x1x8x384xf32>
    %175 = vector.shape_cast %174 : vector<1x1x8x384xf32> to vector<8x384xf32>
    %c136_268 = arith.constant 136 : index
    %c0_269 = arith.constant 0 : index
    %176 = vector.load %arg10[%c136_268, %c0_269] : memref<200x384xf32, #tpu.memory_space<vmem>>, vector<8x384xf32>
    tpu.vector_store %arg10[%c136_268, %c0_269], %175 {strides = array<i32>} : memref<200x384xf32, #tpu.memory_space<vmem>>, vector<8x384xf32>,
    %c1_270 = arith.constant 1 : index
    %c0_271 = arith.constant 0 : index
    %c0_272 = arith.constant 0 : index
    %c63_273 = arith.constant 63 : index
    %177 = vector.load %arg1[%c1_270, %c0_271, %c0_272, %c63_273] : memref<2x1x8x512xf32, #tpu.memory_space<vmem>>, vector<1x1x8x384xf32>
    %178 = vector.shape_cast %177 : vector<1x1x8x384xf32> to vector<8x384xf32>
    %c144_274 = arith.constant 144 : index
    %c0_275 = arith.constant 0 : index
    %179 = vector.load %arg10[%c144_274, %c0_275] : memref<200x384xf32, #tpu.memory_space<vmem>>, vector<8x384xf32>
    tpu.vector_store %arg10[%c144_274, %c0_275], %178 {strides = array<i32>} : memref<200x384xf32, #tpu.memory_space<vmem>>, vector<8x384xf32>,
    %c1_276 = arith.constant 1 : index
    %c0_277 = arith.constant 0 : index
    %c0_278 = arith.constant 0 : index
    %c64_279 = arith.constant 64 : index
    %180 = vector.load %arg1[%c1_276, %c0_277, %c0_278, %c64_279] : memref<2x1x8x512xf32, #tpu.memory_space<vmem>>, vector<1x1x8x384xf32>
    %181 = vector.shape_cast %180 : vector<1x1x8x384xf32> to vector<8x384xf32>
    %c152_280 = arith.constant 152 : index
    %c0_281 = arith.constant 0 : index
    %182 = vector.load %arg10[%c152_280, %c0_281] : memref<200x384xf32, #tpu.memory_space<vmem>>, vector<8x384xf32>
    tpu.vector_store %arg10[%c152_280, %c0_281], %181 {strides = array<i32>} : memref<200x384xf32, #tpu.memory_space<vmem>>, vector<8x384xf32>,
    %c1_282 = arith.constant 1 : index
    %c0_283 = arith.constant 0 : index
    %c0_284 = arith.constant 0 : index
    %c80_285 = arith.constant 80 : index
    %183 = vector.load %arg1[%c1_282, %c0_283, %c0_284, %c80_285] : memref<2x1x8x512xf32, #tpu.memory_space<vmem>>, vector<1x1x8x384xf32>
    %184 = vector.shape_cast %183 : vector<1x1x8x384xf32> to vector<8x384xf32>
    %c160_286 = arith.constant 160 : index
    %c0_287 = arith.constant 0 : index
    %185 = vector.load %arg10[%c160_286, %c0_287] : memref<200x384xf32, #tpu.memory_space<vmem>>, vector<8x384xf32>
    tpu.vector_store %arg10[%c160_286, %c0_287], %184 {strides = array<i32>} : memref<200x384xf32, #tpu.memory_space<vmem>>, vector<8x384xf32>,
    %c1_288 = arith.constant 1 : index
    %c0_289 = arith.constant 0 : index
    %c0_290 = arith.constant 0 : index
    %c81_291 = arith.constant 81 : index
    %186 = vector.load %arg1[%c1_288, %c0_289, %c0_290, %c81_291] : memref<2x1x8x512xf32, #tpu.memory_space<vmem>>, vector<1x1x8x384xf32>
    %187 = vector.shape_cast %186 : vector<1x1x8x384xf32> to vector<8x384xf32>
    %c168_292 = arith.constant 168 : index
    %c0_293 = arith.constant 0 : index
    %188 = vector.load %arg10[%c168_292, %c0_293] : memref<200x384xf32, #tpu.memory_space<vmem>>, vector<8x384xf32>
    tpu.vector_store %arg10[%c168_292, %c0_293], %187 {strides = array<i32>} : memref<200x384xf32, #tpu.memory_space<vmem>>, vector<8x384xf32>,
    %c1_294 = arith.constant 1 : index
    %c0_295 = arith.constant 0 : index
    %c0_296 = arith.constant 0 : index
    %c82_297 = arith.constant 82 : index
    %189 = vector.load %arg1[%c1_294, %c0_295, %c0_296, %c82_297] : memref<2x1x8x512xf32, #tpu.memory_space<vmem>>, vector<1x1x8x384xf32>
    %190 = vector.shape_cast %189 : vector<1x1x8x384xf32> to vector<8x384xf32>
    %c176_298 = arith.constant 176 : index
    %c0_299 = arith.constant 0 : index
    %191 = vector.load %arg10[%c176_298, %c0_299] : memref<200x384xf32, #tpu.memory_space<vmem>>, vector<8x384xf32>
    tpu.vector_store %arg10[%c176_298, %c0_299], %190 {strides = array<i32>} : memref<200x384xf32, #tpu.memory_space<vmem>>, vector<8x384xf32>,
    %c1_300 = arith.constant 1 : index
    %c0_301 = arith.constant 0 : index
    %c0_302 = arith.constant 0 : index
    %c83_303 = arith.constant 83 : index
    %192 = vector.load %arg1[%c1_300, %c0_301, %c0_302, %c83_303] : memref<2x1x8x512xf32, #tpu.memory_space<vmem>>, vector<1x1x8x384xf32>
    %193 = vector.shape_cast %192 : vector<1x1x8x384xf32> to vector<8x384xf32>
    %c184_304 = arith.constant 184 : index
    %c0_305 = arith.constant 0 : index
    %194 = vector.load %arg10[%c184_304, %c0_305] : memref<200x384xf32, #tpu.memory_space<vmem>>, vector<8x384xf32>
    tpu.vector_store %arg10[%c184_304, %c0_305], %193 {strides = array<i32>} : memref<200x384xf32, #tpu.memory_space<vmem>>, vector<8x384xf32>,
    %c1_306 = arith.constant 1 : index
    %c0_307 = arith.constant 0 : index
    %c0_308 = arith.constant 0 : index
    %c84_309 = arith.constant 84 : index
    %195 = vector.load %arg1[%c1_306, %c0_307, %c0_308, %c84_309] : memref<2x1x8x512xf32, #tpu.memory_space<vmem>>, vector<1x1x8x384xf32>
    %196 = vector.shape_cast %195 : vector<1x1x8x384xf32> to vector<8x384xf32>
    %c192_310 = arith.constant 192 : index
    %c0_311 = arith.constant 0 : index
    %197 = vector.load %arg10[%c192_310, %c0_311] : memref<200x384xf32, #tpu.memory_space<vmem>>, vector<8x384xf32>
    tpu.vector_store %arg10[%c192_310, %c0_311], %196 {strides = array<i32>} : memref<200x384xf32, #tpu.memory_space<vmem>>, vector<8x384xf32>,
    %c1_312 = arith.constant 1 : index
    %c0_313 = arith.constant 0 : index
    %c0_314 = arith.constant 0 : index
    %198 = vector.load %arg2[%c1_312, %c0_313, %c0_314] : memref<2x32x200xbf16, #tpu.memory_space<vmem>>, vector<1x32x200xbf16>
    %199 = vector.shape_cast %198 : vector<1x32x200xbf16> to vector<32x200xbf16>
    %c0_315 = arith.constant 0 : index
    %c0_316 = arith.constant 0 : index
    %200 = vector.load %arg10[%c0_315, %c0_316] : memref<200x384xf32, #tpu.memory_space<vmem>>, vector<200x384xf32>
    %201 = arith.truncf %200 : vector<200x384xf32> to vector<200x384xbf16>
    %cst_317 = arith.constant dense<0.000000e+00> : vector<32x384xf32>
    %202 = tpu.matmul %199, %201, %cst_317 {dimension_numbers = #tpu.dot_dimension_numbers<[1], [0], [0], [1], [0, 0, 1, 1], [], []>} : vector<32x200xbf16>, vector<200x384xbf16>, vector<32x384xf32> -> vector<32x384xf32>
    %c1_318 = arith.constant 1 : index
    %c0_319 = arith.constant 0 : index
    %c0_320 = arith.constant 0 : index
    %203 = vector.load %arg3[%c1_318, %c0_319, %c0_320] : memref<2x32x1xf32, #tpu.memory_space<vmem>>, vector<1x32x1xf32>
    %204 = vector.shape_cast %203 : vector<1x32x1xf32> to vector<32x1xf32>
    %205 = vector.broadcast %204 : vector<32x1xf32> to vector<32x384xf32>
    %206 = arith.addf %202, %205 : vector<32x384xf32>
    %207 = vector.extract_strided_slice %206 {offsets = [0, 0], sizes = [24, 384], strides = [1, 1]} : vector<32x384xf32> to vector<24x384xf32>
    %cst_321 = arith.constant 0.000000e+00 : f32
    %208 = vector.broadcast %cst_321 : f32 to vector<24x384xf32>
    %209 = arith.maximumf %207, %208 : vector<24x384xf32>
    %210 = vector.broadcast %0 : vector<1x384xf32> to vector<24x384xf32>
    %211 = arith.mulf %209, %210 : vector<24x384xf32>
    %212 = vector.extract_strided_slice %206 {offsets = [24, 0], sizes = [8, 384], strides = [1, 1]} : vector<32x384xf32> to vector<8x384xf32>
    %cst_322 = arith.constant 0.000000e+00 : f32
    %213 = vector.broadcast %cst_322 : f32 to vector<24x640xf32>
    %c0_323 = arith.constant 0 : index
    %c0_324 = arith.constant 0 : index
    %214 = vector.load %arg11[%c0_323, %c0_324] : memref<24x640xf32, #tpu.memory_space<vmem>>, vector<24x640xf32>
    tpu.vector_store %arg11[%c0_323, %c0_324], %213 {strides = array<i32>} : memref<24x640xf32, #tpu.memory_space<vmem>>, vector<24x640xf32>,
    %c0_325 = arith.constant 0 : index
    %c128_326 = arith.constant 128 : index
    %215 = vector.load %arg11[%c0_325, %c128_326] : memref<24x640xf32, #tpu.memory_space<vmem>>, vector<24x384xf32>
    tpu.vector_store %arg11[%c0_325, %c128_326], %211 {strides = array<i32>} : memref<24x640xf32, #tpu.memory_space<vmem>>, vector<24x384xf32>,
    %c0_327 = arith.constant 0 : index
    %c107_328 = arith.constant 107 : index
    %216 = vector.load %arg11[%c0_327, %c107_328] : memref<24x640xf32, #tpu.memory_space<vmem>>, vector<24x384xf32>
    %c0_329 = arith.constant 0 : index
    %c0_330 = arith.constant 0 : index
    %217 = vector.load %arg12[%c0_329, %c0_330] : memref<216x384xf32, #tpu.memory_space<vmem>>, vector<24x384xf32>
    tpu.vector_store %arg12[%c0_329, %c0_330], %216 {strides = array<i32>} : memref<216x384xf32, #tpu.memory_space<vmem>>, vector<24x384xf32>,
    %c0_331 = arith.constant 0 : index
    %c108_332 = arith.constant 108 : index
    %218 = vector.load %arg11[%c0_331, %c108_332] : memref<24x640xf32, #tpu.memory_space<vmem>>, vector<24x384xf32>
    %c24_333 = arith.constant 24 : index
    %c0_334 = arith.constant 0 : index
    %219 = vector.load %arg12[%c24_333, %c0_334] : memref<216x384xf32, #tpu.memory_space<vmem>>, vector<24x384xf32>
    tpu.vector_store %arg12[%c24_333, %c0_334], %218 {strides = array<i32>} : memref<216x384xf32, #tpu.memory_space<vmem>>, vector<24x384xf32>,
    %c0_335 = arith.constant 0 : index
    %c109_336 = arith.constant 109 : index
    %220 = vector.load %arg11[%c0_335, %c109_336] : memref<24x640xf32, #tpu.memory_space<vmem>>, vector<24x384xf32>
    %c48_337 = arith.constant 48 : index
    %c0_338 = arith.constant 0 : index
    %221 = vector.load %arg12[%c48_337, %c0_338] : memref<216x384xf32, #tpu.memory_space<vmem>>, vector<24x384xf32>
    tpu.vector_store %arg12[%c48_337, %c0_338], %220 {strides = array<i32>} : memref<216x384xf32, #tpu.memory_space<vmem>>, vector<24x384xf32>,
    %c0_339 = arith.constant 0 : index
    %c127_340 = arith.constant 127 : index
    %222 = vector.load %arg11[%c0_339, %c127_340] : memref<24x640xf32, #tpu.memory_space<vmem>>, vector<24x384xf32>
    %c72_341 = arith.constant 72 : index
    %c0_342 = arith.constant 0 : index
    %223 = vector.load %arg12[%c72_341, %c0_342] : memref<216x384xf32, #tpu.memory_space<vmem>>, vector<24x384xf32>
    tpu.vector_store %arg12[%c72_341, %c0_342], %222 {strides = array<i32>} : memref<216x384xf32, #tpu.memory_space<vmem>>, vector<24x384xf32>,
    %c0_343 = arith.constant 0 : index
    %c128_344 = arith.constant 128 : index
    %224 = vector.load %arg11[%c0_343, %c128_344] : memref<24x640xf32, #tpu.memory_space<vmem>>, vector<24x384xf32>
    %c96_345 = arith.constant 96 : index
    %c0_346 = arith.constant 0 : index
    %225 = vector.load %arg12[%c96_345, %c0_346] : memref<216x384xf32, #tpu.memory_space<vmem>>, vector<24x384xf32>
    tpu.vector_store %arg12[%c96_345, %c0_346], %224 {strides = array<i32>} : memref<216x384xf32, #tpu.memory_space<vmem>>, vector<24x384xf32>,
    %c0_347 = arith.constant 0 : index
    %c129_348 = arith.constant 129 : index
    %226 = vector.load %arg11[%c0_347, %c129_348] : memref<24x640xf32, #tpu.memory_space<vmem>>, vector<24x384xf32>
    %c120_349 = arith.constant 120 : index
    %c0_350 = arith.constant 0 : index
    %227 = vector.load %arg12[%c120_349, %c0_350] : memref<216x384xf32, #tpu.memory_space<vmem>>, vector<24x384xf32>
    tpu.vector_store %arg12[%c120_349, %c0_350], %226 {strides = array<i32>} : memref<216x384xf32, #tpu.memory_space<vmem>>, vector<24x384xf32>,
    %c0_351 = arith.constant 0 : index
    %c147_352 = arith.constant 147 : index
    %228 = vector.load %arg11[%c0_351, %c147_352] : memref<24x640xf32, #tpu.memory_space<vmem>>, vector<24x384xf32>
    %c144_353 = arith.constant 144 : index
    %c0_354 = arith.constant 0 : index
    %229 = vector.load %arg12[%c144_353, %c0_354] : memref<216x384xf32, #tpu.memory_space<vmem>>, vector<24x384xf32>
    tpu.vector_store %arg12[%c144_353, %c0_354], %228 {strides = array<i32>} : memref<216x384xf32, #tpu.memory_space<vmem>>, vector<24x384xf32>,
    %c0_355 = arith.constant 0 : index
    %c148_356 = arith.constant 148 : index
    %230 = vector.load %arg11[%c0_355, %c148_356] : memref<24x640xf32, #tpu.memory_space<vmem>>, vector<24x384xf32>
    %c168_357 = arith.constant 168 : index
    %c0_358 = arith.constant 0 : index
    %231 = vector.load %arg12[%c168_357, %c0_358] : memref<216x384xf32, #tpu.memory_space<vmem>>, vector<24x384xf32>
    tpu.vector_store %arg12[%c168_357, %c0_358], %230 {strides = array<i32>} : memref<216x384xf32, #tpu.memory_space<vmem>>, vector<24x384xf32>,
    %c0_359 = arith.constant 0 : index
    %c149_360 = arith.constant 149 : index
    %232 = vector.load %arg11[%c0_359, %c149_360] : memref<24x640xf32, #tpu.memory_space<vmem>>, vector<24x384xf32>
    %c192_361 = arith.constant 192 : index
    %c0_362 = arith.constant 0 : index
    %233 = vector.load %arg12[%c192_361, %c0_362] : memref<216x384xf32, #tpu.memory_space<vmem>>, vector<24x384xf32>
    tpu.vector_store %arg12[%c192_361, %c0_362], %232 {strides = array<i32>} : memref<216x384xf32, #tpu.memory_space<vmem>>, vector<24x384xf32>,
    %c1_363 = arith.constant 1 : index
    %c0_364 = arith.constant 0 : index
    %c0_365 = arith.constant 0 : index
    %234 = vector.load %arg4[%c1_363, %c0_364, %c0_365] : memref<2x8x216xbf16, #tpu.memory_space<vmem>>, vector<1x8x216xbf16>
    %235 = vector.shape_cast %234 : vector<1x8x216xbf16> to vector<8x216xbf16>
    %c0_366 = arith.constant 0 : index
    %c0_367 = arith.constant 0 : index
    %236 = vector.load %arg12[%c0_366, %c0_367] : memref<216x384xf32, #tpu.memory_space<vmem>>, vector<216x384xf32>
    %237 = arith.truncf %236 : vector<216x384xf32> to vector<216x384xbf16>
    %cst_368 = arith.constant dense<0.000000e+00> : vector<8x384xf32>
    %238 = tpu.matmul %235, %237, %cst_368 {dimension_numbers = #tpu.dot_dimension_numbers<[1], [0], [0], [1], [0, 0, 1, 1], [], []>} : vector<8x216xbf16>, vector<216x384xbf16>, vector<8x384xf32> -> vector<8x384xf32>
    %c1_369 = arith.constant 1 : index
    %c0_370 = arith.constant 0 : index
    %c0_371 = arith.constant 0 : index
    %239 = vector.load %arg5[%c1_369, %c0_370, %c0_371] : memref<2x8x1xf32, #tpu.memory_space<vmem>>, vector<1x8x1xf32>
    %240 = vector.shape_cast %239 : vector<1x8x1xf32> to vector<8x1xf32>
    %241 = vector.broadcast %240 : vector<8x1xf32> to vector<8x384xf32>
    %242 = arith.addf %238, %241 : vector<8x384xf32>
    %c1_372 = arith.constant 1 : index
    %c0_373 = arith.constant 0 : index
    %c0_374 = arith.constant 0 : index
    %c42_375 = arith.constant 42 : index
    %243 = vector.load %arg1[%c1_372, %c0_373, %c0_374, %c42_375] : memref<2x1x8x512xf32, #tpu.memory_space<vmem>>, vector<1x1x8x384xf32>
    %244 = vector.shape_cast %243 : vector<1x1x8x384xf32> to vector<8x384xf32>
    %245 = arith.negf %120 : vector<8x384xf32>
    %246 = math.exp %245 : vector<8x384xf32>
    %cst_376 = arith.constant 1.000000e+00 : f32
    %247 = vector.broadcast %cst_376 : f32 to vector<8x384xf32>
    %248 = arith.addf %247, %246 : vector<8x384xf32>
    %249 = arith.divf %247, %248 : vector<8x384xf32>
    %250 = arith.negf %212 : vector<8x384xf32>
    %251 = math.exp %250 : vector<8x384xf32>
    %cst_377 = arith.constant 1.000000e+00 : f32
    %252 = vector.broadcast %cst_377 : f32 to vector<8x384xf32>
    %253 = arith.addf %252, %251 : vector<8x384xf32>
    %254 = arith.divf %252, %253 : vector<8x384xf32>
    %255 = arith.addf %249, %254 : vector<8x384xf32>
    %cst_378 = arith.constant 1.000000e+00 : f32
    %256 = vector.broadcast %cst_378 : f32 to vector<8x384xf32>
    %257 = arith.addf %255, %256 : vector<8x384xf32>
    %258 = arith.mulf %244, %257 : vector<8x384xf32>
    %cst_379 = arith.constant dense<0.000000e+00> : vector<8xf32>
    %259 = vector.multi_reduction <add>, %258, %cst_379 [1] : vector<8x384xf32> to vector<8xf32>
    %260 = vector.shape_cast %259 : vector<8xf32> to vector<8x1xf32>
    %cst_380 = arith.constant 3.906250e-03 : f32
    %261 = vector.broadcast %cst_380 : f32 to vector<8x1xf32>
    %262 = arith.mulf %260, %261 : vector<8x1xf32>
    %c0_381 = arith.constant 0 : index
    %c0_382 = arith.constant 0 : index
    %c0_383 = arith.constant 0 : index
    %263 = vector.load %arg7[%c0_381, %c0_382, %c0_383] : memref<2x8x128xf32, #tpu.memory_space<vmem>>, vector<1x8x128xf32>
    %264 = vector.shape_cast %263 : vector<1x8x128xf32> to vector<8x128xf32>
    %265 = vector.broadcast %262 : vector<8x1xf32> to vector<8x128xf32>
    %266 = arith.mulf %264, %265 : vector<8x128xf32>
    %cst_384 = arith.constant dense<0.000000e+00> : vector<128xf32>
    %267 = vector.multi_reduction <add>, %266, %cst_384 [0] : vector<8x128xf32> to vector<128xf32>
    %268 = vector.shape_cast %267 : vector<128xf32> to vector<1x128xf32>
    %cst_385 = arith.constant 0.000000e+00 : f32
    %269 = vector.broadcast %cst_385 : f32 to vector<1x128xf32>
    %270 = arith.maximumf %268, %269 : vector<1x128xf32>
    %c0_386 = arith.constant 0 : index
    %c0_387 = arith.constant 0 : index
    %c0_388 = arith.constant 0 : index
    %271 = vector.load %arg8[%c0_386, %c0_387, %c0_388] : memref<2x1x128xf32, #tpu.memory_space<vmem>>, vector<1x1x128xf32>
    %272 = vector.shape_cast %271 : vector<1x1x128xf32> to vector<1x128xf32>
    %273 = arith.mulf %272, %270 : vector<1x128xf32>
    %cst_389 = arith.constant dense<0.000000e+00> : vector<1xf32>
    %274 = vector.multi_reduction <add>, %273, %cst_389 [1] : vector<1x128xf32> to vector<1xf32>
    %275 = vector.shape_cast %274 : vector<1xf32> to vector<1x1xf32>
    %cst_390 = arith.constant 0.000000e+00 : f32
    %276 = vector.broadcast %cst_390 : f32 to vector<1x1xf32>
    %277 = arith.maximumf %275, %276 : vector<1x1xf32>
    %278 = arith.negf %277 : vector<1x1xf32>
    %279 = math.exp %278 : vector<1x1xf32>
    %cst_391 = arith.constant 1.000000e+00 : f32
    %280 = vector.broadcast %cst_391 : f32 to vector<1x1xf32>
    %281 = arith.addf %280, %279 : vector<1x1xf32>
    %282 = arith.divf %280, %281 : vector<1x1xf32>
    %283 = vector.broadcast %282 : vector<1x1xf32> to vector<8x384xf32>
    %284 = arith.mulf %258, %283 : vector<8x384xf32>
    %285 = arith.negf %242 : vector<8x384xf32>
    %286 = math.exp %285 : vector<8x384xf32>
    %cst_392 = arith.constant 1.000000e+00 : f32
    %287 = vector.broadcast %cst_392 : f32 to vector<8x384xf32>
    %288 = arith.addf %287, %286 : vector<8x384xf32>
    %289 = arith.divf %287, %288 : vector<8x384xf32>
    %290 = arith.negf %90 : vector<8x384xf32>
    %291 = math.exp %290 : vector<8x384xf32>
    %cst_393 = arith.constant 1.000000e+00 : f32
    %292 = vector.broadcast %cst_393 : f32 to vector<8x384xf32>
    %293 = arith.addf %292, %291 : vector<8x384xf32>
    %294 = arith.divf %292, %293 : vector<8x384xf32>
    %295 = arith.addf %289, %294 : vector<8x384xf32>
    %cst_394 = arith.constant 1.000000e+00 : f32
    %296 = vector.broadcast %cst_394 : f32 to vector<8x384xf32>
    %297 = arith.addf %295, %296 : vector<8x384xf32>
    %298 = arith.mulf %122, %297 : vector<8x384xf32>
    %cst_395 = arith.constant dense<0.000000e+00> : vector<8xf32>
    %299 = vector.multi_reduction <add>, %298, %cst_395 [1] : vector<8x384xf32> to vector<8xf32>
    %300 = vector.shape_cast %299 : vector<8xf32> to vector<8x1xf32>
    %cst_396 = arith.constant 3.906250e-03 : f32
    %301 = vector.broadcast %cst_396 : f32 to vector<8x1xf32>
    %302 = arith.mulf %300, %301 : vector<8x1xf32>
    %c1_397 = arith.constant 1 : index
    %c0_398 = arith.constant 0 : index
    %c0_399 = arith.constant 0 : index
    %303 = vector.load %arg7[%c1_397, %c0_398, %c0_399] : memref<2x8x128xf32, #tpu.memory_space<vmem>>, vector<1x8x128xf32>
    %304 = vector.shape_cast %303 : vector<1x8x128xf32> to vector<8x128xf32>
    %305 = vector.broadcast %302 : vector<8x1xf32> to vector<8x128xf32>
    %306 = arith.mulf %304, %305 : vector<8x128xf32>
    %cst_400 = arith.constant dense<0.000000e+00> : vector<128xf32>
    %307 = vector.multi_reduction <add>, %306, %cst_400 [0] : vector<8x128xf32> to vector<128xf32>
    %308 = vector.shape_cast %307 : vector<128xf32> to vector<1x128xf32>
    %cst_401 = arith.constant 0.000000e+00 : f32
    %309 = vector.broadcast %cst_401 : f32 to vector<1x128xf32>
    %310 = arith.maximumf %308, %309 : vector<1x128xf32>
    %c1_402 = arith.constant 1 : index
    %c0_403 = arith.constant 0 : index
    %c0_404 = arith.constant 0 : index
    %311 = vector.load %arg8[%c1_402, %c0_403, %c0_404] : memref<2x1x128xf32, #tpu.memory_space<vmem>>, vector<1x1x128xf32>
    %312 = vector.shape_cast %311 : vector<1x1x128xf32> to vector<1x128xf32>
    %313 = arith.mulf %312, %310 : vector<1x128xf32>
    %cst_405 = arith.constant dense<0.000000e+00> : vector<1xf32>
    %314 = vector.multi_reduction <add>, %313, %cst_405 [1] : vector<1x128xf32> to vector<1xf32>
    %315 = vector.shape_cast %314 : vector<1xf32> to vector<1x1xf32>
    %cst_406 = arith.constant 0.000000e+00 : f32
    %316 = vector.broadcast %cst_406 : f32 to vector<1x1xf32>
    %317 = arith.maximumf %315, %316 : vector<1x1xf32>
    %318 = arith.negf %317 : vector<1x1xf32>
    %319 = math.exp %318 : vector<1x1xf32>
    %cst_407 = arith.constant 1.000000e+00 : f32
    %320 = vector.broadcast %cst_407 : f32 to vector<1x1xf32>
    %321 = arith.addf %320, %319 : vector<1x1xf32>
    %322 = arith.divf %320, %321 : vector<1x1xf32>
    %323 = vector.broadcast %322 : vector<1x1xf32> to vector<8x384xf32>
    %324 = arith.mulf %298, %323 : vector<8x384xf32>
    %325 = arith.addf %284, %324 : vector<8x384xf32>
    %c0_408 = arith.constant 0 : index
    %c0_409 = arith.constant 0 : index
    %c0_410 = arith.constant 0 : index
    %326 = vector.load %arg9[%c0_408, %c0_409, %c0_410] : memref<1x8x384xf32, #tpu.memory_space<vmem>>, vector<1x8x384xf32>
    %327 = vector.shape_cast %326 : vector<1x8x384xf32> to vector<8x384xf32>
    %328 = vector.shape_cast %325 : vector<8x384xf32> to vector<1x8x384xf32>
    tpu.vector_store %arg9[%c0_408, %c0_409, %c0_410], %328 {strides = array<i32>} : memref<1x8x384xf32, #tpu.memory_space<vmem>>, vector<1x8x384xf32>,
    return
  }
  func.func @transform_0(%arg0: i32) -> (i32, i32, i32, i32) {
    %c0_i32 = arith.constant 0 : i32
    %c0_i32_0 = arith.constant 0 : i32
    %c0_i32_1 = arith.constant 0 : i32
    %c0_i32_2 = arith.constant 0 : i32
    return %c0_i32, %arg0, %c0_i32_0, %c0_i32_1 : i32, i32, i32, i32
  }
  func.func @transform_1(%arg0: i32) -> (i32, i32, i32) {
    %c0_i32 = arith.constant 0 : i32
    %c0_i32_0 = arith.constant 0 : i32
    %c0_i32_1 = arith.constant 0 : i32
    %c0_i32_2 = arith.constant 0 : i32
    return %c0_i32, %c0_i32_0, %c0_i32_1 : i32, i32, i32
  }
  func.func @transform_2(%arg0: i32) -> (i32, i32, i32) {
    %c0_i32 = arith.constant 0 : i32
    %c0_i32_0 = arith.constant 0 : i32
    %c0_i32_1 = arith.constant 0 : i32
    %c0_i32_2 = arith.constant 0 : i32
    return %c0_i32, %c0_i32_0, %c0_i32_1 : i32, i32, i32
  }
  func.func @transform_3(%arg0: i32) -> (i32, i32, i32) {
    %c0_i32 = arith.constant 0 : i32
    %c0_i32_0 = arith.constant 0 : i32
    %c0_i32_1 = arith.constant 0 : i32
    %c0_i32_2 = arith.constant 0 : i32
    return %c0_i32, %c0_i32_0, %c0_i32_1 : i32, i32, i32
  }
  func.func @transform_4(%arg0: i32) -> (i32, i32, i32) {
    %c0_i32 = arith.constant 0 : i32
    %c0_i32_0 = arith.constant 0 : i32
    %c0_i32_1 = arith.constant 0 : i32
    %c0_i32_2 = arith.constant 0 : i32
    return %c0_i32, %c0_i32_0, %c0_i32_1 : i32, i32, i32
  }
  func.func @transform_5(%arg0: i32) -> (i32, i32) {
    %c0_i32 = arith.constant 0 : i32
    %c0_i32_0 = arith.constant 0 : i32
    %c0_i32_1 = arith.constant 0 : i32
    return %c0_i32, %c0_i32_0 : i32, i32
  }
  func.func @transform_6(%arg0: i32) -> (i32, i32, i32) {
    %c0_i32 = arith.constant 0 : i32
    %c0_i32_0 = arith.constant 0 : i32
    %c0_i32_1 = arith.constant 0 : i32
    %c0_i32_2 = arith.constant 0 : i32
    return %c0_i32, %c0_i32_0, %c0_i32_1 : i32, i32, i32
  }
  func.func @transform_7(%arg0: i32) -> (i32, i32, i32) {
    %c0_i32 = arith.constant 0 : i32
    %c0_i32_0 = arith.constant 0 : i32
    %c0_i32_1 = arith.constant 0 : i32
    %c0_i32_2 = arith.constant 0 : i32
    return %c0_i32, %c0_i32_0, %c0_i32_1 : i32, i32, i32
  }
  func.func @transform_8(%arg0: i32) -> (i32, i32, i32) {
    %c0_i32 = arith.constant 0 : i32
    %c0_i32_0 = arith.constant 0 : i32
    %c0_i32_1 = arith.constant 0 : i32
    return %arg0, %c0_i32, %c0_i32_0 : i32, i32, i32
  }
}

</mosaic_0001>

<llo_original>
// kernel: counter_attention_forward.1
$region0: #{counter_attention_forward.1}
  #allocation0 [shape = 'u32[]', space=smem, size = 0x4, offset = 0x4, fixed_abs, tag = 'smem constant byte address 0x4 - core index']
  #allocation1 [shape = 'u32[144,128]{1,0:T(1,128)}', space=vmem, size = 0x12000, scoped, tag = 'internal scratch']
  #allocation2 [shape = 'f32[200,384]{1,0:T(8,128)}', space=vmem, size = 0x4b000, scoped, tag = 'scratch operand']
  #allocation3 [shape = 'f32[24,640]{1,0:T(8,128)}', space=vmem, size = 0xf000, scoped, tag = 'scratch operand']
  #allocation4 [shape = 'f32[216,384]{1,0:T(8,128)}', space=vmem, size = 0x51000, scoped, tag = 'scratch operand']
  %s0 = inlined_call_operand.vmem [shape: f32[2,2,8,512], index: 0, kind: input, shape index: {}]
  %s1 = inlined_call_operand.vmem [shape: bf16[2,32,200], index: 1, kind: input, shape index: {}]
  %s2 = inlined_call_operand.vmem [shape: f32[2,32,1], index: 2, kind: input, shape index: {}]
  %s3 = inlined_call_operand.vmem [shape: bf16[2,8,216], index: 3, kind: input, shape index: {}]
  %s4 = inlined_call_operand.vmem [shape: f32[2,8,1], index: 4, kind: input, shape index: {}]
  %s5 = inlined_call_operand.vmem [shape: f32[1,384], index: 5, kind: input, shape index: {}]
  %s6 = inlined_call_operand.vmem [shape: f32[2,8,128], index: 6, kind: input, shape index: {}]
  %s7 = inlined_call_operand.vmem [shape: f32[2,1,128], index: 7, kind: input, shape index: {}]
  %s8 = inlined_call_operand.vmem [shape: f32[2,8,384], index: 8, kind: output, shape index: {}]
  %s9 = sld [smem:[#allocation0]]
  $region88: #{counter_attention_forward.1} parent=0
    _
  %s11 = ssub.s32 1, %s9
  %s12 = scalar_select 0, %s11, %s9
  $region1: #{counter_attention_forward.1} parent=0
    #allocation5 [shape = 'u8[65536]{0}', space=vmem, size = 0x10000, scoped, tag = 'input window, operand 0']
    loop: start=0, step=1, limit=4
    $region2: #{counter_attention_forward.1} parent=1 // loop_pre_header
      _
    $region3: #{counter_attention_forward.1} parent=1 // loop_header
      %s14 = sphi 0, %s18
      %p15 = scmp.ge.s32.totalorder %s14, 4
      %s24 = sphi 0, %s26
      %s27 = sphi 0, %s24
      %s28 = sphi 0, %s27
      %s44 = sphi 0, %s28
      %s48 = sphi 0, %s48
      %s50 = sphi 0, %s48
      %s51 = sphi 0, %s50
      %s65 = sphi 0, %s51
      %s69 = sphi 0, %s69
      %s71 = sphi 0, %s69
      %s72 = sphi 0, %s71
      %s86 = sphi 0, %s72
      %s90 = sphi 0, %s90
      %s92 = sphi 0, %s90
      %s93 = sphi 0, %s92
      %s107 = sphi 0, %s93
      %s111 = sphi 0, %s111
      %s113 = sphi 0, %s111
      %s114 = sphi 0, %s113
      %s128 = sphi 0, %s114
      %s132 = sphi 0, %s132
      %s134 = sphi 0, %s132
      %s135 = sphi 0, %s134
      %s149 = sphi 0, %s135
      %s153 = sphi 0, %s153
      %s155 = sphi 0, %s153
      %s156 = sphi 0, %s155
      %s170 = sphi 0, %s156
      %s174 = sphi 0, %s174
      %s176 = sphi 0, %s174
      %s177 = sphi 0, %s176
      %s191 = sphi 0, %s177
      %s197 = sphi 0, %s199
      %s200 = sphi 0, %s197
      %s201 = sphi 0, %s200
      %s217 = sphi 0, %s201
    $region4: #{counter_attention_forward.1} parent=1 // loop_header_branch
      %17 = sbr.rel (%p15) target = $region8
    $region5: #{counter_attention_forward.1} parent=1 // loop_body
      %s19 = ssub.s32 %s14, 1
      %s20 = ssub.s32 %s14, 2
      %s21 = sadd.s32 %s14, 1
      %s22 = ssub.s32 %s14, %s21
      %p23 = scmp.eq.s32.totalorder %s22, 0
      %s25 = sadd.s32 %s24, 1
      %s26 = scalar_select %p23, %s24, %s25
      %p29 = pneg %p23
      %p30 = scmp.eq.s32.totalorder %s14, 1
      %p31 = por %p29, %p30
      %p32 = scmp.ne.s32.totalorder %s24, %s27
      %p33 = scmp.eq.s32.totalorder %s14, 0
      %p34 = por %p32, %p33
      %p35 = scmp.ne.s32.totalorder %s24, %s27
      %p36 = scmp.eq.s32.totalorder %s19, 1
      %p37 = por %p35, %p36
      %p38 = scmp.ne.s32.totalorder %s27, %s28
      %p39 = scmp.eq.s32.totalorder %s19, 0
      %p40 = por %p38, %p39
      %p41 = scmp.ne.s32.totalorder %s27, %s28
      %p42 = scmp.eq.s32.totalorder %s20, 1
      %p43 = por %p41, %p42
      %p45 = scmp.ne.s32.totalorder %s28, %s44
      %p46 = scmp.eq.s32.totalorder %s20, 0
      %p47 = por %p45, %p46
      %s49 = sadd.s32 %s48, 1
      %p52 = scmp.eq.s32.totalorder %s14, 1
      %p53 = scmp.ne.s32.totalorder %s48, %s50
      %p54 = scmp.eq.s32.totalorder %s14, 0
      %p55 = por %p53, %p54
      %p56 = scmp.ne.s32.totalorder %s48, %s50
      %p57 = scmp.eq.s32.totalorder %s19, 1
      %p58 = por %p56, %p57
      %p59 = scmp.ne.s32.totalorder %s50, %s51
      %p60 = scmp.eq.s32.totalorder %s19, 0
      %p61 = por %p59, %p60
      %p62 = scmp.ne.s32.totalorder %s50, %s51
      %p63 = scmp.eq.s32.totalorder %s20, 1
      %p64 = por %p62, %p63
      %p66 = scmp.ne.s32.totalorder %s51, %s65
      %p67 = scmp.eq.s32.totalorder %s20, 0
      %p68 = por %p66, %p67
      %s70 = sadd.s32 %s69, 1
      %p73 = scmp.eq.s32.totalorder %s14, 1
      %p74 = scmp.ne.s32.totalorder %s69, %s71
      %p75 = scmp.eq.s32.totalorder %s14, 0
      %p76 = por %p74, %p75
      %p77 = scmp.ne.s32.totalorder %s69, %s71
      %p78 = scmp.eq.s32.totalorder %s19, 1
      %p79 = por %p77, %p78
      %p80 = scmp.ne.s32.totalorder %s71, %s72
      %p81 = scmp.eq.s32.totalorder %s19, 0
      %p82 = por %p80, %p81
      %p83 = scmp.ne.s32.totalorder %s71, %s72
      %p84 = scmp.eq.s32.totalorder %s20, 1
      %p85 = por %p83, %p84
      %p87 = scmp.ne.s32.totalorder %s72, %s86
      %p88 = scmp.eq.s32.totalorder %s20, 0
      %p89 = por %p87, %p88
      %s91 = sadd.s32 %s90, 1
      %p94 = scmp.eq.s32.totalorder %s14, 1
      %p95 = scmp.ne.s32.totalorder %s90, %s92
      %p96 = scmp.eq.s32.totalorder %s14, 0
      %p97 = por %p95, %p96
      %p98 = scmp.ne.s32.totalorder %s90, %s92
      %p99 = scmp.eq.s32.totalorder %s19, 1
      %p100 = por %p98, %p99
      %p101 = scmp.ne.s32.totalorder %s92, %s93
      %p102 = scmp.eq.s32.totalorder %s19, 0
      %p103 = por %p101, %p102
      %p104 = scmp.ne.s32.totalorder %s92, %s93
      %p105 = scmp.eq.s32.totalorder %s20, 1
      %p106 = por %p104, %p105
      %p108 = scmp.ne.s32.totalorder %s93, %s107
      %p109 = scmp.eq.s32.totalorder %s20, 0
      %p110 = por %p108, %p109
      %s112 = sadd.s32 %s111, 1
      %p115 = scmp.eq.s32.totalorder %s14, 1
      %p116 = scmp.ne.s32.totalorder %s111, %s113
      %p117 = scmp.eq.s32.totalorder %s14, 0
      %p118 = por %p116, %p117
      %p119 = scmp.ne.s32.totalorder %s111, %s113
      %p120 = scmp.eq.s32.totalorder %s19, 1
      %p121 = por %p119, %p120
      %p122 = scmp.ne.s32.totalorder %s113, %s114
      %p123 = scmp.eq.s32.totalorder %s19, 0
      %p124 = por %p122, %p123
      %p125 = scmp.ne.s32.totalorder %s113, %s114
      %p126 = scmp.eq.s32.totalorder %s20, 1
      %p127 = por %p125, %p126
      %p129 = scmp.ne.s32.totalorder %s114, %s128
      %p130 = scmp.eq.s32.totalorder %s20, 0
      %p131 = por %p129, %p130
      %s133 = sadd.s32 %s132, 1
      %p136 = scmp.eq.s32.totalorder %s14, 1
      %p137 = scmp.ne.s32.totalorder %s132, %s134
      %p138 = scmp.eq.s32.totalorder %s14, 0
      %p139 = por %p137, %p138
      %p140 = scmp.ne.s32.totalorder %s132, %s134
      %p141 = scmp.eq.s32.totalorder %s19, 1
      %p142 = por %p140, %p141
      %p143 = scmp.ne.s32.totalorder %s134, %s135
      %p144 = scmp.eq.s32.totalorder %s19, 0
      %p145 = por %p143, %p144
      %p146 = scmp.ne.s32.totalorder %s134, %s135
      %p147 = scmp.eq.s32.totalorder %s20, 1
      %p148 = por %p146, %p147
      %p150 = scmp.ne.s32.totalorder %s135, %s149
      %p151 = scmp.eq.s32.totalorder %s20, 0
      %p152 = por %p150, %p151
      %s154 = sadd.s32 %s153, 1
      %p157 = scmp.eq.s32.totalorder %s14, 1
      %p158 = scmp.ne.s32.totalorder %s153, %s155
      %p159 = scmp.eq.s32.totalorder %s14, 0
      %p160 = por %p158, %p159
      %p161 = scmp.ne.s32.totalorder %s153, %s155
      %p162 = scmp.eq.s32.totalorder %s19, 1
      %p163 = por %p161, %p162
      %p164 = scmp.ne.s32.totalorder %s155, %s156
      %p165 = scmp.eq.s32.totalorder %s19, 0
      %p166 = por %p164, %p165
      %p167 = scmp.ne.s32.totalorder %s155, %s156
      %p168 = scmp.eq.s32.totalorder %s20, 1
      %p169 = por %p167, %p168
      %p171 = scmp.ne.s32.totalorder %s156, %s170
      %p172 = scmp.eq.s32.totalorder %s20, 0
      %p173 = por %p171, %p172
      %s175 = sadd.s32 %s174, 1
      %p178 = scmp.eq.s32.totalorder %s14, 1
      %p179 = scmp.ne.s32.totalorder %s174, %s176
      %p180 = scmp.eq.s32.totalorder %s14, 0
      %p181 = por %p179, %p180
      %p182 = scmp.ne.s32.totalorder %s174, %s176
      %p183 = scmp.eq.s32.totalorder %s19, 1
      %p184 = por %p182, %p183
      %p185 = scmp.ne.s32.totalorder %s176, %s177
      %p186 = scmp.eq.s32.totalorder %s19, 0
      %p187 = por %p185, %p186
      %p188 = scmp.ne.s32.totalorder %s176, %s177
      %p189 = scmp.eq.s32.totalorder %s20, 1
      %p190 = por %p188, %p189
      %p192 = scmp.ne.s32.totalorder %s177, %s191
      %p193 = scmp.eq.s32.totalorder %s20, 0
      %p194 = por %p192, %p193
      %s195 = ssub.s32 %s14, %s21
      %p196 = scmp.eq.s32.totalorder %s195, 0
      %s198 = sadd.s32 %s197, 1
      %s199 = scalar_select %p196, %s197, %s198
      %p202 = pneg %p196
      %p203 = scmp.eq.s32.totalorder %s14, 1
      %p204 = por %p202, %p203
      %p205 = scmp.ne.s32.totalorder %s197, %s200
      %p206 = scmp.eq.s32.totalorder %s14, 0
      %p207 = por %p205, %p206
      %p208 = scmp.ne.s32.totalorder %s197, %s200
      %p209 = scmp.eq.s32.totalorder %s19, 1
      %p210 = por %p208, %p209
      %p211 = scmp.ne.s32.totalorder %s200, %s201
      %p212 = scmp.eq.s32.totalorder %s19, 0
      %p213 = por %p211, %p212
      %p214 = scmp.ne.s32.totalorder %s200, %s201
      %p215 = scmp.eq.s32.totalorder %s20, 1
      %p216 = por %p214, %p215
      %p218 = scmp.ne.s32.totalorder %s201, %s217
      %p219 = scmp.eq.s32.totalorder %s20, 0
      %p220 = por %p218, %p219
      %p221 = scmp.le.s32.totalorder 1, %s14
      %p222 = scmp.lt.s32.totalorder %s14, 3
      %p223 = pnand %p221, %p222
      %p224 = pneg %p223
      // Predicated region
      $region9: #{counter_attention_forward.1} parent=5 // pred_check
        _
      $region10: #{counter_attention_forward.1} parent=5 // pred_check_branch
        %226 = sbr.rel (%p223) target = $region12
      $region11: #{counter_attention_forward.1} parent=5 // pred_region
        %s227 = ssub.s32 %s14, 1
        // Predicated region
        $region13: #{counter_attention_forward.1} parent=11 // pred_check
          %p228 = pneg %p61
        $region14: #{counter_attention_forward.1} parent=11 // pred_check_branch
          %230 = sbr.rel (%p228) target = $region16
        $region15: #{counter_attention_forward.1} parent=11 // pred_region
          _
        $region16: #{counter_attention_forward.1} parent=11 // pred_fallthru
          _
        // Predicated region
        $region17: #{counter_attention_forward.1} parent=11 // pred_check
          %p231 = pneg %p82
        $region18: #{counter_attention_forward.1} parent=11 // pred_check_branch
          %233 = sbr.rel (%p231) target = $region20
        $region19: #{counter_attention_forward.1} parent=11 // pred_region
          _
        $region20: #{counter_attention_forward.1} parent=11 // pred_fallthru
          _
        // Predicated region
        $region21: #{counter_attention_forward.1} parent=11 // pred_check
          %p234 = pneg %p103
        $region22: #{counter_attention_forward.1} parent=11 // pred_check_branch
          %236 = sbr.rel (%p234) target = $region24
        $region23: #{counter_attention_forward.1} parent=11 // pred_region
          _
        $region24: #{counter_attention_forward.1} parent=11 // pred_fallthru
          _
        // Predicated region
        $region25: #{counter_attention_forward.1} parent=11 // pred_check
          %p237 = pneg %p124
        $region26: #{counter_attention_forward.1} parent=11 // pred_check_branch
          %239 = sbr.rel (%p237) target = $region28
        $region27: #{counter_attention_forward.1} parent=11 // pred_region
          _
        $region28: #{counter_attention_forward.1} parent=11 // pred_fallthru
          _
        // Predicated region
        $region29: #{counter_attention_forward.1} parent=11 // pred_check
          %p240 = pneg %p145
        $region30: #{counter_attention_forward.1} parent=11 // pred_check_branch
          %242 = sbr.rel (%p240) target = $region32
        $region31: #{counter_attention_forward.1} parent=11 // pred_region
          _
        $region32: #{counter_attention_forward.1} parent=11 // pred_fallthru
          _
        // Predicated region
        $region33: #{counter_attention_forward.1} parent=11 // pred_check
          %p243 = pneg %p166
        $region34: #{counter_attention_forward.1} parent=11 // pred_check_branch
          %245 = sbr.rel (%p243) target = $region36
        $region35: #{counter_attention_forward.1} parent=11 // pred_region
          _
        $region36: #{counter_attention_forward.1} parent=11 // pred_fallthru
          _
        // Predicated region
        $region37: #{counter_attention_forward.1} parent=11 // pred_check
          %p246 = pneg %p187
        $region38: #{counter_attention_forward.1} parent=11 // pred_check_branch
          %248 = sbr.rel (%p246) target = $region40
        $region39: #{counter_attention_forward.1} parent=11 // pred_region
          _
        $region40: #{counter_attention_forward.1} parent=11 // pred_fallthru
          _
      $region12: #{counter_attention_forward.1} parent=5 // pred_fallthru
        _
      %p249 = scmp.lt.s32.totalorder %s14, 2
      // Predicated region
      $region41: #{counter_attention_forward.1} parent=5 // pred_check
        %p250 = pneg %p249
      $region42: #{counter_attention_forward.1} parent=5 // pred_check_branch
        %252 = sbr.rel (%p250) target = $region44
      $region43: #{counter_attention_forward.1} parent=5 // pred_region
        // Predicated region
        $region45: #{counter_attention_forward.1} parent=43 // pred_check
          %p253 = pneg %p34
        $region46: #{counter_attention_forward.1} parent=43 // pred_check_branch
          %255 = sbr.rel (%p253) target = $region48
        $region47: #{counter_attention_forward.1} parent=43 // pred_region
          %s256 = sand.u32 %s24, 1
          %s257 = sand.u32 %s24, 1
          %s258 = smul.addr %s257, 64
          %s259 = scalar_lea.vmem [#allocation5], %s258
          %s260 = smul.addr %s14, 4
          %s261 = smul.addr %s260, 8
          %s262 = scalar_lea.vmem %s0, %s261
          // Predicated region
          $region49: #{counter_attention_forward.1} parent=47 // pred_check
            _
          $region50: #{counter_attention_forward.1} parent=47 // pred_check_branch
            %264 = sbr.rel (0) target = $region52
          $region51: #{counter_attention_forward.1} parent=47 // pred_region
            // Predicated region
            $region53: #{counter_attention_forward.1} parent=51 // pred_check
              _
            $region54: #{counter_attention_forward.1} parent=51 // pred_check_branch
              %266 = sbr.rel (0) target = $region56
            $region55: #{counter_attention_forward.1} parent=51 // pred_region
              loop: start=0, step=1, limit=1
              $region57: #{counter_attention_forward.1} parent=55 // loop_pre_header
                _
              $region58: #{counter_attention_forward.1} parent=55 // loop_header
                %s268 = sphi 0, %s272
                %p269 = scmp.ge.s32.totalorder %s268, 1
                %s273 = sphi %s262, %s262
                %s274 = sphi %s259, %s259
              $region59: #{counter_attention_forward.1} parent=55 // loop_header_branch
                %271 = sbr.rel (%p269) target = $region63
              $region60: #{counter_attention_forward.1} parent=55 // loop_body
                %v275 = vld [vmem:[%s273] sm:$0xff]
                %276 = vst [vmem:[%s274] sm:$0xff] %v275
                %v277 = vld [vmem:[%s273 + $0x8] sm:$0xff]
                %278 = vst [vmem:[%s274 + $0x8] sm:$0xff] %v277
                %v279 = vld [vmem:[%s273 + $0x10] sm:$0xff]
                %280 = vst [vmem:[%s274 + $0x10] sm:$0xff] %v279
                %v281 = vld [vmem:[%s273 + $0x18] sm:$0xff]
                %282 = vst [vmem:[%s274 + $0x18] sm:$0xff] %v281
                %v283 = vld [vmem:[%s273 + $0x40] sm:$0xff]
                %284 = vst [vmem:[%s274 + $0x20] sm:$0xff] %v283
                %v285 = vld [vmem:[%s273 + $0x48] sm:$0xff]
                %286 = vst [vmem:[%s274 + $0x28] sm:$0xff] %v285
                %v287 = vld [vmem:[%s273 + $0x50] sm:$0xff]
                %288 = vst [vmem:[%s274 + $0x30] sm:$0xff] %v287
                %v289 = vld [vmem:[%s273 + $0x58] sm:$0xff]
                %290 = vst [vmem:[%s274 + $0x38] sm:$0xff] %v289
              $region61: #{counter_attention_forward.1} parent=55 // loop_footer
                %s272 = sadd.s32 1, %s268
              $region62: #{counter_attention_forward.1} parent=55 // loop_footer_branch
                %267 = sbr.rel target = $region58
              $region63: #{counter_attention_forward.1} parent=55 // loop_exit
                _
            $region56: #{counter_attention_forward.1} parent=51 // pred_fallthru
              _
            // Predicated region
            $region64: #{counter_attention_forward.1} parent=51 // pred_check
              _
            $region65: #{counter_attention_forward.1} parent=51 // pred_check_branch
              %292 = sbr.rel target = $region67
            $region66: #{counter_attention_forward.1} parent=51 // pred_region
              _
            $region67: #{counter_attention_forward.1} parent=51 // pred_fallthru
              _
          $region52: #{counter_attention_forward.1} parent=47 // pred_fallthru
            _
          %293 = vnop
        $region48: #{counter_attention_forward.1} parent=43 // pred_fallthru
          _
      $region44: #{counter_attention_forward.1} parent=5 // pred_fallthru
        _
      %p294 = scmp.le.s32.totalorder 1, %s14
      %p295 = scmp.lt.s32.totalorder %s14, 3
      %p296 = pnand %p294, %p295
      %p297 = pneg %p296
      // Predicated region
      $region68: #{counter_attention_forward.1} parent=5 // pred_check
        _
      $region69: #{counter_attention_forward.1} parent=5 // pred_check_branch
        %299 = sbr.rel (%p296) target = $region71
      $region70: #{counter_attention_forward.1} parent=5 // pred_region
        %s300 = ssub.s32 %s14, 1
        %s301 = sand.u32 %s27, 1
        %s302 = sand.u32 %s27, 1
        %s303 = smul.addr %s302, 64
        %s304 = scalar_lea.vmem [#allocation5], %s303
        // Predicated region
        $region72: #{counter_attention_forward.1} parent=70 // pred_check
          %p305 = pneg %p40
        $region73: #{counter_attention_forward.1} parent=70 // pred_check_branch
          %307 = sbr.rel (%p305) target = $region75
        $region74: #{counter_attention_forward.1} parent=70 // pred_region
          _
        $region75: #{counter_attention_forward.1} parent=70 // pred_fallthru
          _
        %s308 = sand.u32 %s27, 1
        %s309 = sand.u32 %s27, 1
        %s310 = smul.addr %s309, 64
        %s311 = scalar_lea.vmem [#allocation5], %s310
        %p312 = pneg %p40
        %p313 = pneg %p37
        %p314 = pneg %p61
        %p315 = pneg %p58
        %p316 = pneg %p82
        %p317 = pneg %p79
        %p318 = pneg %p103
        %p319 = pneg %p100
        %p320 = pneg %p124
        %p321 = pneg %p121
        %p322 = pneg %p145
        %p323 = pneg %p142
        %p324 = pneg %p166
        %p325 = pneg %p163
        %p326 = pneg %p187
        %p327 = pneg %p184
        %p328 = pneg %p213
        %p329 = pneg %p210
        %p330 = scmp.lt.s32.totalorder %s19, 1
        %s331 = scalar_select %p330, %s19, 1
        %s332 = smul.addr %s331, 3
        %s333 = smul.addr %s332, 8
        %s334 = scalar_lea.vmem %s8, %s333
        %p335 = scmp.lt.s32.totalorder %s19, 1
        %s336 = scalar_select %p335, %s19, 1
        %s337 = smul.addr %s336, 3
        %s338 = smul.addr %s337, 8
        %s339 = scalar_lea.vmem %s8, %s338
        %v341 = vld [vmem:[%s5] sm:$0x7]
        %v342 = vld [vmem:[%s304] sm:$0xff]
        %v343 = vld [vmem:[%s304 + $0x8] sm:$0xff]
        %v344 = vld [vmem:[%s304 + $0x10] sm:$0xff]
        %345 = vst [vmem:[#allocation2] sm:$0xff] %v342
        %346 = vst [vmem:[#allocation2 + $0x8] sm:$0xff] %v343
        %347 = vst [vmem:[#allocation2 + $0x10] sm:$0xff] %v344
        %v348 = vld [vmem:[%s304] sm:$0xff]
        %v349 = vld [vmem:[%s304 + $0x8] sm:$0xff]
        %v350 = vld [vmem:[%s304 + $0x10] sm:$0xff]
        %v351 = vld [vmem:[%s304 + $0x18] sm:$0xff]
        %356 = vrot.lane.b32.xlu0 %v348, 127
        %v357 = vpop.permute.xlu0 %356
        %358 = vrot.lane.b32.xlu0 %v349, 127
        %v359 = vpop.permute.xlu0 %358
        %360 = vrot.lane.b32.xlu0 %v350, 127
        %v361 = vpop.permute.xlu0 %360
        %362 = vrot.lane.b32.xlu0 %v351, 127
        %v363 = vpop.permute.xlu0 %362
        %vm364 = vcmask 1039360
        %v365 = vsel %vm364, %v357, %v359
        %v366 = vsel %vm364, %v359, %v361
        %v367 = vsel %vm364, %v361, %v363
        %371 = vst [vmem:[#allocation2 + $0x18] sm:$0xff] %v365
        %372 = vst [vmem:[#allocation2 + $0x20] sm:$0xff] %v366
        %373 = vst [vmem:[#allocation2 + $0x28] sm:$0xff] %v367
        %v374 = vld [vmem:[%s304] sm:$0xff]
        %v375 = vld [vmem:[%s304 + $0x8] sm:$0xff]
        %v376 = vld [vmem:[%s304 + $0x10] sm:$0xff]
        %v377 = vld [vmem:[%s304 + $0x18] sm:$0xff]
        %382 = vrot.lane.b32.xlu0 %v374, 126
        %v383 = vpop.permute.xlu0 %382
        %384 = vrot.lane.b32.xlu0 %v375, 126
        %v385 = vpop.permute.xlu0 %384
        %386 = vrot.lane.b32.xlu0 %v376, 126
        %v387 = vpop.permute.xlu0 %386
        %388 = vrot.lane.b32.xlu0 %v377, 126
        %v389 = vpop.permute.xlu0 %388
        %vm390 = vcmask 1031168
        %v391 = vsel %vm390, %v383, %v385
        %v392 = vsel %vm390, %v385, %v387
        %v393 = vsel %vm390, %v387, %v389
        %397 = vst [vmem:[#allocation2 + $0x30] sm:$0xff] %v391
        %398 = vst [vmem:[#allocation2 + $0x38] sm:$0xff] %v392
        %399 = vst [vmem:[#allocation2 + $0x40] sm:$0xff] %v393
        %v400 = vld [vmem:[%s304] sm:$0xff]
        %v401 = vld [vmem:[%s304 + $0x8] sm:$0xff]
        %v402 = vld [vmem:[%s304 + $0x10] sm:$0xff]
        %v403 = vld [vmem:[%s304 + $0x18] sm:$0xff]
        %408 = vrot.lane.b32.xlu0 %v400, 125
        %v409 = vpop.permute.xlu0 %408
        %410 = vrot.lane.b32.xlu0 %v401, 125
        %v411 = vpop.permute.xlu0 %410
        %412 = vrot.lane.b32.xlu0 %v402, 125
        %v413 = vpop.permute.xlu0 %412
        %414 = vrot.lane.b32.xlu0 %v403, 125
        %v415 = vpop.permute.xlu0 %414
        %vm416 = vcmask 1022976
        %v417 = vsel %vm416, %v409, %v411
        %v418 = vsel %vm416, %v411, %v413
        %v419 = vsel %vm416, %v413, %v415
        %423 = vst [vmem:[#allocation2 + $0x48] sm:$0xff] %v417
        %424 = vst [vmem:[#allocation2 + $0x50] sm:$0xff] %v418
        %425 = vst [vmem:[#allocation2 + $0x58] sm:$0xff] %v419
        %v426 = vld [vmem:[%s304] sm:$0xff]
        %v427 = vld [vmem:[%s304 + $0x8] sm:$0xff]
        %v428 = vld [vmem:[%s304 + $0x10] sm:$0xff]
        %v429 = vld [vmem:[%s304 + $0x18] sm:$0xff]
        %434 = vrot.lane.b32.xlu0 %v426, 124
        %v435 = vpop.permute.xlu0 %434
        %436 = vrot.lane.b32.xlu0 %v427, 124
        %v437 = vpop.permute.xlu0 %436
        %438 = vrot.lane.b32.xlu0 %v428, 124
        %v439 = vpop.permute.xlu0 %438
        %440 = vrot.lane.b32.xlu0 %v429, 124
        %v441 = vpop.permute.xlu0 %440
        %vm442 = vcmask 1014784
        %v443 = vsel %vm442, %v435, %v437
        %v444 = vsel %vm442, %v437, %v439
        %v445 = vsel %vm442, %v439, %v441
        %449 = vst [vmem:[#allocation2 + $0x60] sm:$0xff] %v443
        %450 = vst [vmem:[#allocation2 + $0x68] sm:$0xff] %v444
        %451 = vst [vmem:[#allocation2 + $0x70] sm:$0xff] %v445
        %v452 = vld [vmem:[%s304] sm:$0xff]
        %v453 = vld [vmem:[%s304 + $0x8] sm:$0xff]
        %v454 = vld [vmem:[%s304 + $0x10] sm:$0xff]
        %v455 = vld [vmem:[%s304 + $0x18] sm:$0xff]
        %460 = vrot.lane.b32.xlu0 %v452, 108
        %v461 = vpop.permute.xlu0 %460
        %462 = vrot.lane.b32.xlu0 %v453, 108
        %v463 = vpop.permute.xlu0 %462
        %464 = vrot.lane.b32.xlu0 %v454, 108
        %v465 = vpop.permute.xlu0 %464
        %466 = vrot.lane.b32.xlu0 %v455, 108
        %v467 = vpop.permute.xlu0 %466
        %vm468 = vcmask 883712
        %v469 = vsel %vm468, %v461, %v463
        %v470 = vsel %vm468, %v463, %v465
        %v471 = vsel %vm468, %v465, %v467
        %475 = vst [vmem:[#allocation2 + $0x78] sm:$0xff] %v469
        %476 = vst [vmem:[#allocation2 + $0x80] sm:$0xff] %v470
        %477 = vst [vmem:[#allocation2 + $0x88] sm:$0xff] %v471
        %v478 = vld [vmem:[%s304] sm:$0xff]
        %v479 = vld [vmem:[%s304 + $0x8] sm:$0xff]
        %v480 = vld [vmem:[%s304 + $0x10] sm:$0xff]
        %v481 = vld [vmem:[%s304 + $0x18] sm:$0xff]
        %486 = vrot.lane.b32.xlu0 %v478, 107
        %v487 = vpop.permute.xlu0 %486
        %488 = vrot.lane.b32.xlu0 %v479, 107
        %v489 = vpop.permute.xlu0 %488
        %490 = vrot.lane.b32.xlu0 %v480, 107
        %v491 = vpop.permute.xlu0 %490
        %492 = vrot.lane.b32.xlu0 %v481, 107
        %v493 = vpop.permute.xlu0 %492
        %vm494 = vcmask 875520
        %v495 = vsel %vm494, %v487, %v489
        %v496 = vsel %vm494, %v489, %v491
        %v497 = vsel %vm494, %v491, %v493
        %501 = vst [vmem:[#allocation2 + $0x90] sm:$0xff] %v495
        %502 = vst [vmem:[#allocation2 + $0x98] sm:$0xff] %v496
        %503 = vst [vmem:[#allocation2 + $0xa0] sm:$0xff] %v497
        %v504 = vld [vmem:[%s304] sm:$0xff]
        %v505 = vld [vmem:[%s304 + $0x8] sm:$0xff]
        %v506 = vld [vmem:[%s304 + $0x10] sm:$0xff]
        %v507 = vld [vmem:[%s304 + $0x18] sm:$0xff]
        %512 = vrot.lane.b32.xlu0 %v504, 106
        %v513 = vpop.permute.xlu0 %512
        %514 = vrot.lane.b32.xlu0 %v505, 106
        %v515 = vpop.permute.xlu0 %514
        %516 = vrot.lane.b32.xlu0 %v506, 106
        %v517 = vpop.permute.xlu0 %516
        %518 = vrot.lane.b32.xlu0 %v507, 106
        %v519 = vpop.permute.xlu0 %518
        %vm520 = vcmask 867328
        %v521 = vsel %vm520, %v513, %v515
        %v522 = vsel %vm520, %v515, %v517
        %v523 = vsel %vm520, %v517, %v519
        %527 = vst [vmem:[#allocation2 + $0xa8] sm:$0xff] %v521
        %528 = vst [vmem:[#allocation2 + $0xb0] sm:$0xff] %v522
        %529 = vst [vmem:[#allocation2 + $0xb8] sm:$0xff] %v523
        %v530 = vld [vmem:[%s304] sm:$0xff]
        %v531 = vld [vmem:[%s304 + $0x8] sm:$0xff]
        %v532 = vld [vmem:[%s304 + $0x10] sm:$0xff]
        %v533 = vld [vmem:[%s304 + $0x18] sm:$0xff]
        %538 = vrot.lane.b32.xlu0 %v530, 105
        %v539 = vpop.permute.xlu0 %538
        %540 = vrot.lane.b32.xlu0 %v531, 105
        %v541 = vpop.permute.xlu0 %540
        %542 = vrot.lane.b32.xlu0 %v532, 105
        %v543 = vpop.permute.xlu0 %542
        %544 = vrot.lane.b32.xlu0 %v533, 105
        %v545 = vpop.permute.xlu0 %544
        %vm546 = vcmask 859136
        %v547 = vsel %vm546, %v539, %v541
        %v548 = vsel %vm546, %v541, %v543
        %v549 = vsel %vm546, %v543, %v545
        %553 = vst [vmem:[#allocation2 + $0xc0] sm:$0xff] %v547
        %554 = vst [vmem:[#allocation2 + $0xc8] sm:$0xff] %v548
        %555 = vst [vmem:[#allocation2 + $0xd0] sm:$0xff] %v549
        %v556 = vld [vmem:[%s304] sm:$0xff]
        %v557 = vld [vmem:[%s304 + $0x8] sm:$0xff]
        %v558 = vld [vmem:[%s304 + $0x10] sm:$0xff]
        %v559 = vld [vmem:[%s304 + $0x18] sm:$0xff]
        %564 = vrot.lane.b32.xlu0 %v556, 104
        %v565 = vpop.permute.xlu0 %564
        %566 = vrot.lane.b32.xlu0 %v557, 104
        %v567 = vpop.permute.xlu0 %566
        %568 = vrot.lane.b32.xlu0 %v558, 104
        %v569 = vpop.permute.xlu0 %568
        %570 = vrot.lane.b32.xlu0 %v559, 104
        %v571 = vpop.permute.xlu0 %570
        %vm572 = vcmask 850944
        %v573 = vsel %vm572, %v565, %v567
        %v574 = vsel %vm572, %v567, %v569
        %v575 = vsel %vm572, %v569, %v571
        %579 = vst [vmem:[#allocation2 + $0xd8] sm:$0xff] %v573
        %580 = vst [vmem:[#allocation2 + $0xe0] sm:$0xff] %v574
        %581 = vst [vmem:[#allocation2 + $0xe8] sm:$0xff] %v575
        %v582 = vld [vmem:[%s304] sm:$0xff]
        %v583 = vld [vmem:[%s304 + $0x8] sm:$0xff]
        %v584 = vld [vmem:[%s304 + $0x10] sm:$0xff]
        %v585 = vld [vmem:[%s304 + $0x18] sm:$0xff]
        %590 = vrot.lane.b32.xlu0 %v582, 88
        %v591 = vpop.permute.xlu0 %590
        %592 = vrot.lane.b32.xlu0 %v583, 88
        %v593 = vpop.permute.xlu0 %592
        %594 = vrot.lane.b32.xlu0 %v584, 88
        %v595 = vpop.permute.xlu0 %594
        %596 = vrot.lane.b32.xlu0 %v585, 88
        %v597 = vpop.permute.xlu0 %596
        %vm598 = vcmask 719872
        %v599 = vsel %vm598, %v591, %v593
        %v600 = vsel %vm598, %v593, %v595
        %v601 = vsel %vm598, %v595, %v597
        %605 = vst [vmem:[#allocation2 + $0xf0] sm:$0xff] %v599
        %606 = vst [vmem:[#allocation2 + $0xf8] sm:$0xff] %v600
        %607 = vst [vmem:[#allocation2 + $0x100] sm:$0xff] %v601
        %v608 = vld [vmem:[%s304] sm:$0xff]
        %v609 = vld [vmem:[%s304 + $0x8] sm:$0xff]
        %v610 = vld [vmem:[%s304 + $0x10] sm:$0xff]
        %v611 = vld [vmem:[%s304 + $0x18] sm:$0xff]
        %616 = vrot.lane.b32.xlu0 %v608, 87
        %v617 = vpop.permute.xlu0 %616
        %618 = vrot.lane.b32.xlu0 %v609, 87
        %v619 = vpop.permute.xlu0 %618
        %620 = vrot.lane.b32.xlu0 %v610, 87
        %v621 = vpop.permute.xlu0 %620
        %622 = vrot.lane.b32.xlu0 %v611, 87
        %v623 = vpop.permute.xlu0 %622
        %vm624 = vcmask 711680
        %v625 = vsel %vm624, %v617, %v619
        %v626 = vsel %vm624, %v619, %v621
        %v627 = vsel %vm624, %v621, %v623
        %631 = vst [vmem:[#allocation2 + $0x108] sm:$0xff] %v625
        %632 = vst [vmem:[#allocation2 + $0x110] sm:$0xff] %v626
        %633 = vst [vmem:[#allocation2 + $0x118] sm:$0xff] %v627
        %v634 = vld [vmem:[%s304] sm:$0xff]
        %v635 = vld [vmem:[%s304 + $0x8] sm:$0xff]
        %v636 = vld [vmem:[%s304 + $0x10] sm:$0xff]
        %v637 = vld [vmem:[%s304 + $0x18] sm:$0xff]
        %642 = vrot.lane.b32.xlu0 %v634, 86
        %v643 = vpop.permute.xlu0 %642
        %644 = vrot.lane.b32.xlu0 %v635, 86
        %v645 = vpop.permute.xlu0 %644
        %646 = vrot.lane.b32.xlu0 %v636, 86
        %v647 = vpop.permute.xlu0 %646
        %648 = vrot.lane.b32.xlu0 %v637, 86
        %v649 = vpop.permute.xlu0 %648
        %vm650 = vcmask 703488
        %v651 = vsel %vm650, %v643, %v645
        %v652 = vsel %vm650, %v645, %v647
        %v653 = vsel %vm650, %v647, %v649
        %657 = vst [vmem:[#allocation2 + $0x120] sm:$0xff] %v651
        %658 = vst [vmem:[#allocation2 + $0x128] sm:$0xff] %v652
        %659 = vst [vmem:[#allocation2 + $0x130] sm:$0xff] %v653
        %v660 = vld [vmem:[%s304] sm:$0xff]
        %v661 = vld [vmem:[%s304 + $0x8] sm:$0xff]
        %v662 = vld [vmem:[%s304 + $0x10] sm:$0xff]
        %v663 = vld [vmem:[%s304 + $0x18] sm:$0xff]
        %668 = vrot.lane.b32.xlu0 %v660, 85
        %v669 = vpop.permute.xlu0 %668
        %670 = vrot.lane.b32.xlu0 %v661, 85
        %v671 = vpop.permute.xlu0 %670
        %672 = vrot.lane.b32.xlu0 %v662, 85
        %v673 = vpop.permute.xlu0 %672
        %674 = vrot.lane.b32.xlu0 %v663, 85
        %v675 = vpop.permute.xlu0 %674
        %vm676 = vcmask 695296
        %v677 = vsel %vm676, %v669, %v671
        %v678 = vsel %vm676, %v671, %v673
        %v679 = vsel %vm676, %v673, %v675
        %683 = vst [vmem:[#allocation2 + $0x138] sm:$0xff] %v677
        %684 = vst [vmem:[#allocation2 + $0x140] sm:$0xff] %v678
        %685 = vst [vmem:[#allocation2 + $0x148] sm:$0xff] %v679
        %v686 = vld [vmem:[%s304] sm:$0xff]
        %v687 = vld [vmem:[%s304 + $0x8] sm:$0xff]
        %v688 = vld [vmem:[%s304 + $0x10] sm:$0xff]
        %v689 = vld [vmem:[%s304 + $0x18] sm:$0xff]
        %694 = vrot.lane.b32.xlu0 %v686, 84
        %v695 = vpop.permute.xlu0 %694
        %696 = vrot.lane.b32.xlu0 %v687, 84
        %v697 = vpop.permute.xlu0 %696
        %698 = vrot.lane.b32.xlu0 %v688, 84
        %v699 = vpop.permute.xlu0 %698
        %700 = vrot.lane.b32.xlu0 %v689, 84
        %v701 = vpop.permute.xlu0 %700
        %vm702 = vcmask 687104
        %v703 = vsel %vm702, %v695, %v697
        %v704 = vsel %vm702, %v697, %v699
        %v705 = vsel %vm702, %v699, %v701
        %709 = vst [vmem:[#allocation2 + $0x150] sm:$0xff] %v703
        %710 = vst [vmem:[#allocation2 + $0x158] sm:$0xff] %v704
        %711 = vst [vmem:[#allocation2 + $0x160] sm:$0xff] %v705
        %v712 = vld [vmem:[%s304] sm:$0xff]
        %v713 = vld [vmem:[%s304 + $0x8] sm:$0xff]
        %v714 = vld [vmem:[%s304 + $0x10] sm:$0xff]
        %v715 = vld [vmem:[%s304 + $0x18] sm:$0xff]
        %720 = vrot.lane.b32.xlu0 %v712, 68
        %v721 = vpop.permute.xlu0 %720
        %722 = vrot.lane.b32.xlu0 %v713, 68
        %v723 = vpop.permute.xlu0 %722
        %724 = vrot.lane.b32.xlu0 %v714, 68
        %v725 = vpop.permute.xlu0 %724
        %726 = vrot.lane.b32.xlu0 %v715, 68
        %v727 = vpop.permute.xlu0 %726
        %vm728 = vcmask 556032
        %v729 = vsel %vm728, %v721, %v723
        %v730 = vsel %vm728, %v723, %v725
        %v731 = vsel %vm728, %v725, %v727
        %735 = vst [vmem:[#allocation2 + $0x168] sm:$0xff] %v729
        %736 = vst [vmem:[#allocation2 + $0x170] sm:$0xff] %v730
        %737 = vst [vmem:[#allocation2 + $0x178] sm:$0xff] %v731
        %v738 = vld [vmem:[%s304] sm:$0xff]
        %v739 = vld [vmem:[%s304 + $0x8] sm:$0xff]
        %v740 = vld [vmem:[%s304 + $0x10] sm:$0xff]
        %v741 = vld [vmem:[%s304 + $0x18] sm:$0xff]
        %746 = vrot.lane.b32.xlu0 %v738, 67
        %v747 = vpop.permute.xlu0 %746
        %748 = vrot.lane.b32.xlu0 %v739, 67
        %v749 = vpop.permute.xlu0 %748
        %750 = vrot.lane.b32.xlu0 %v740, 67
        %v751 = vpop.permute.xlu0 %750
        %752 = vrot.lane.b32.xlu0 %v741, 67
        %v753 = vpop.permute.xlu0 %752
        %vm754 = vcmask 547840
        %v755 = vsel %vm754, %v747, %v749
        %v756 = vsel %vm754, %v749, %v751
        %v757 = vsel %vm754, %v751, %v753
        %761 = vst [vmem:[#allocation2 + $0x180] sm:$0xff] %v755
        %762 = vst [vmem:[#allocation2 + $0x188] sm:$0xff] %v756
        %763 = vst [vmem:[#allocation2 + $0x190] sm:$0xff] %v757
        %v764 = vld [vmem:[%s304] sm:$0xff]
        %v765 = vld [vmem:[%s304 + $0x8] sm:$0xff]
        %v766 = vld [vmem:[%s304 + $0x10] sm:$0xff]
        %v767 = vld [vmem:[%s304 + $0x18] sm:$0xff]
        %772 = vrot.lane.b32.xlu0 %v764, 66
        %v773 = vpop.permute.xlu0 %772
        %774 = vrot.lane.b32.xlu0 %v765, 66
        %v775 = vpop.permute.xlu0 %774
        %776 = vrot.lane.b32.xlu0 %v766, 66
        %v777 = vpop.permute.xlu0 %776
        %778 = vrot.lane.b32.xlu0 %v767, 66
        %v779 = vpop.permute.xlu0 %778
        %vm780 = vcmask 539648
        %v781 = vsel %vm780, %v773, %v775
        %v782 = vsel %vm780, %v775, %v777
        %v783 = vsel %vm780, %v777, %v779
        %787 = vst [vmem:[#allocation2 + $0x198] sm:$0xff] %v781
        %788 = vst [vmem:[#allocation2 + $0x1a0] sm:$0xff] %v782
        %789 = vst [vmem:[#allocation2 + $0x1a8] sm:$0xff] %v783
        %v790 = vld [vmem:[%s304] sm:$0xff]
        %v791 = vld [vmem:[%s304 + $0x8] sm:$0xff]
        %v792 = vld [vmem:[%s304 + $0x10] sm:$0xff]
        %v793 = vld [vmem:[%s304 + $0x18] sm:$0xff]
        %798 = vrot.lane.b32.xlu0 %v790, 65
        %v799 = vpop.permute.xlu0 %798
        %800 = vrot.lane.b32.xlu0 %v791, 65
        %v801 = vpop.permute.xlu0 %800
        %802 = vrot.lane.b32.xlu0 %v792, 65
        %v803 = vpop.permute.xlu0 %802
        %804 = vrot.lane.b32.xlu0 %v793, 65
        %v805 = vpop.permute.xlu0 %804
        %vm806 = vcmask 531456
        %v807 = vsel %vm806, %v799, %v801
        %v808 = vsel %vm806, %v801, %v803
        %v809 = vsel %vm806, %v803, %v805
        %813 = vst [vmem:[#allocation2 + $0x1b0] sm:$0xff] %v807
        %814 = vst [vmem:[#allocation2 + $0x1b8] sm:$0xff] %v808
        %815 = vst [vmem:[#allocation2 + $0x1c0] sm:$0xff] %v809
        %v816 = vld [vmem:[%s304] sm:$0xff]
        %v817 = vld [vmem:[%s304 + $0x8] sm:$0xff]
        %v818 = vld [vmem:[%s304 + $0x10] sm:$0xff]
        %v819 = vld [vmem:[%s304 + $0x18] sm:$0xff]
        %824 = vrot.lane.b32.xlu0 %v816, 64
        %v825 = vpop.permute.xlu0 %824
        %826 = vrot.lane.b32.xlu0 %v817, 64
        %v827 = vpop.permute.xlu0 %826
        %828 = vrot.lane.b32.xlu0 %v818, 64
        %v829 = vpop.permute.xlu0 %828
        %830 = vrot.lane.b32.xlu0 %v819, 64
        %v831 = vpop.permute.xlu0 %830
        %vm832 = vcmask 523264
        %v833 = vsel %vm832, %v825, %v827
        %v834 = vsel %vm832, %v827, %v829
        %v835 = vsel %vm832, %v829, %v831
        %839 = vst [vmem:[#allocation2 + $0x1c8] sm:$0xff] %v833
        %840 = vst [vmem:[#allocation2 + $0x1d0] sm:$0xff] %v834
        %841 = vst [vmem:[#allocation2 + $0x1d8] sm:$0xff] %v835
        %v842 = vld [vmem:[%s304] sm:$0xff]
        %v843 = vld [vmem:[%s304 + $0x8] sm:$0xff]
        %v844 = vld [vmem:[%s304 + $0x10] sm:$0xff]
        %v845 = vld [vmem:[%s304 + $0x18] sm:$0xff]
        %850 = vrot.lane.b32.xlu0 %v842, 48
        %v851 = vpop.permute.xlu0 %850
        %852 = vrot.lane.b32.xlu0 %v843, 48
        %v853 = vpop.permute.xlu0 %852
        %854 = vrot.lane.b32.xlu0 %v844, 48
        %v855 = vpop.permute.xlu0 %854
        %856 = vrot.lane.b32.xlu0 %v845, 48
        %v857 = vpop.permute.xlu0 %856
        %vm858 = vcmask 392192
        %v859 = vsel %vm858, %v851, %v853
        %v860 = vsel %vm858, %v853, %v855
        %v861 = vsel %vm858, %v855, %v857
        %865 = vst [vmem:[#allocation2 + $0x1e0] sm:$0xff] %v859
        %866 = vst [vmem:[#allocation2 + $0x1e8] sm:$0xff] %v860
        %867 = vst [vmem:[#allocation2 + $0x1f0] sm:$0xff] %v861
        %v868 = vld [vmem:[%s304] sm:$0xff]
        %v869 = vld [vmem:[%s304 + $0x8] sm:$0xff]
        %v870 = vld [vmem:[%s304 + $0x10] sm:$0xff]
        %v871 = vld [vmem:[%s304 + $0x18] sm:$0xff]
        %876 = vrot.lane.b32.xlu0 %v868, 47
        %v877 = vpop.permute.xlu0 %876
        %878 = vrot.lane.b32.xlu0 %v869, 47
        %v879 = vpop.permute.xlu0 %878
        %880 = vrot.lane.b32.xlu0 %v870, 47
        %v881 = vpop.permute.xlu0 %880
        %882 = vrot.lane.b32.xlu0 %v871, 47
        %v883 = vpop.permute.xlu0 %882
        %vm884 = vcmask 384000
        %v885 = vsel %vm884, %v877, %v879
        %v886 = vsel %vm884, %v879, %v881
        %v887 = vsel %vm884, %v881, %v883
        %891 = vst [vmem:[#allocation2 + $0x1f8] sm:$0xff] %v885
        %892 = vst [vmem:[#allocation2 + $0x200] sm:$0xff] %v886
        %893 = vst [vmem:[#allocation2 + $0x208] sm:$0xff] %v887
        %v894 = vld [vmem:[%s304] sm:$0xff]
        %v895 = vld [vmem:[%s304 + $0x8] sm:$0xff]
        %v896 = vld [vmem:[%s304 + $0x10] sm:$0xff]
        %v897 = vld [vmem:[%s304 + $0x18] sm:$0xff]
        %902 = vrot.lane.b32.xlu0 %v894, 46
        %v903 = vpop.permute.xlu0 %902
        %904 = vrot.lane.b32.xlu0 %v895, 46
        %v905 = vpop.permute.xlu0 %904
        %906 = vrot.lane.b32.xlu0 %v896, 46
        %v907 = vpop.permute.xlu0 %906
        %908 = vrot.lane.b32.xlu0 %v897, 46
        %v909 = vpop.permute.xlu0 %908
        %vm910 = vcmask 375808
        %v911 = vsel %vm910, %v903, %v905
        %v912 = vsel %vm910, %v905, %v907
        %v913 = vsel %vm910, %v907, %v909
        %917 = vst [vmem:[#allocation2 + $0x210] sm:$0xff] %v911
        %918 = vst [vmem:[#allocation2 + $0x218] sm:$0xff] %v912
        %919 = vst [vmem:[#allocation2 + $0x220] sm:$0xff] %v913
        %v920 = vld [vmem:[%s304] sm:$0xff]
        %v921 = vld [vmem:[%s304 + $0x8] sm:$0xff]
        %v922 = vld [vmem:[%s304 + $0x10] sm:$0xff]
        %v923 = vld [vmem:[%s304 + $0x18] sm:$0xff]
        %928 = vrot.lane.b32.xlu0 %v920, 45
        %v929 = vpop.permute.xlu0 %928
        %930 = vrot.lane.b32.xlu0 %v921, 45
        %v931 = vpop.permute.xlu0 %930
        %932 = vrot.lane.b32.xlu0 %v922, 45
        %v933 = vpop.permute.xlu0 %932
        %934 = vrot.lane.b32.xlu0 %v923, 45
        %v935 = vpop.permute.xlu0 %934
        %vm936 = vcmask 367616
        %v937 = vsel %vm936, %v929, %v931
        %v938 = vsel %vm936, %v931, %v933
        %v939 = vsel %vm936, %v933, %v935
        %943 = vst [vmem:[#allocation2 + $0x228] sm:$0xff] %v937
        %944 = vst [vmem:[#allocation2 + $0x230] sm:$0xff] %v938
        %945 = vst [vmem:[#allocation2 + $0x238] sm:$0xff] %v939
        %v946 = vld [vmem:[%s304] sm:$0xff]
        %v947 = vld [vmem:[%s304 + $0x8] sm:$0xff]
        %v948 = vld [vmem:[%s304 + $0x10] sm:$0xff]
        %v949 = vld [vmem:[%s304 + $0x18] sm:$0xff]
        %954 = vrot.lane.b32.xlu0 %v946, 44
        %v955 = vpop.permute.xlu0 %954
        %956 = vrot.lane.b32.xlu0 %v947, 44
        %v957 = vpop.permute.xlu0 %956
        %958 = vrot.lane.b32.xlu0 %v948, 44
        %v959 = vpop.permute.xlu0 %958
        %960 = vrot.lane.b32.xlu0 %v949, 44
        %v961 = vpop.permute.xlu0 %960
        %vm962 = vcmask 359424
        %v963 = vsel %vm962, %v955, %v957
        %v964 = vsel %vm962, %v957, %v959
        %v965 = vsel %vm962, %v959, %v961
        %969 = vst [vmem:[#allocation2 + $0x240] sm:$0xff] %v963
        %970 = vst [vmem:[#allocation2 + $0x248] sm:$0xff] %v964
        %971 = vst [vmem:[#allocation2 + $0x250] sm:$0xff] %v965
        %v972 = vld [vmem:[%s1] sm:$0xff]
        %v973 = vld [vmem:[%s1 + $0x8] sm:$0xff]
        %v974 = vld [vmem:[%s1 + $0x10] sm:$0xff]
        %v975 = vld [vmem:[%s1 + $0x18] sm:$0xff]
        %v976 = vld [vmem:[#allocation2] sm:$0xff]
        %v977 = vld [vmem:[#allocation2 + $0x8] sm:$0xff]
        %v978 = vld [vmem:[#allocation2 + $0x10] sm:$0xff]
        %v979 = vld [vmem:[#allocation2 + $0x18] sm:$0xff]
        %v980 = vld [vmem:[#allocation2 + $0x20] sm:$0xff]
        %v981 = vld [vmem:[#allocation2 + $0x28] sm:$0xff]
        %v982 = vld [vmem:[#allocation2 + $0x30] sm:$0xff]
        %v983 = vld [vmem:[#allocation2 + $0x38] sm:$0xff]
        %v984 = vld [vmem:[#allocation2 + $0x40] sm:$0xff]
        %v985 = vld [vmem:[#allocation2 + $0x48] sm:$0xff]
        %v986 = vld [vmem:[#allocation2 + $0x50] sm:$0xff]
        %v987 = vld [vmem:[#allocation2 + $0x58] sm:$0xff]
        %v988 = vld [vmem:[#allocation2 + $0x60] sm:$0xff]
        %v989 = vld [vmem:[#allocation2 + $0x68] sm:$0xff]
        %v990 = vld [vmem:[#allocation2 + $0x70] sm:$0xff]
        %v991 = vld [vmem:[#allocation2 + $0x78] sm:$0xff]
        %v992 = vld [vmem:[#allocation2 + $0x80] sm:$0xff]
        %v993 = vld [vmem:[#allocation2 + $0x88] sm:$0xff]
        %v994 = vld [vmem:[#allocation2 + $0x90] sm:$0xff]
        %v995 = vld [vmem:[#allocation2 + $0x98] sm:$0xff]
        %v996 = vld [vmem:[#allocation2 + $0xa0] sm:$0xff]
        %v997 = vld [vmem:[#allocation2 + $0xa8] sm:$0xff]
        %v998 = vld [vmem:[#allocation2 + $0xb0] sm:$0xff]
        %v999 = vld [vmem:[#allocation2 + $0xb8] sm:$0xff]
        %v1000 = vld [vmem:[#allocation2 + $0xc0] sm:$0xff]
        %v1001 = vld [vmem:[#allocation2 + $0xc8] sm:$0xff]
        %v1002 = vld [vmem:[#allocation2 + $0xd0] sm:$0xff]
        %v1003 = vld [vmem:[#allocation2 + $0xd8] sm:$0xff]
        %v1004 = vld [vmem:[#allocation2 + $0xe0] sm:$0xff]
        %v1005 = vld [vmem:[#allocation2 + $0xe8] sm:$0xff]
        %v1006 = vld [vmem:[#allocation2 + $0xf0] sm:$0xff]
        %v1007 = vld [vmem:[#allocation2 + $0xf8] sm:$0xff]
        %v1008 = vld [vmem:[#allocation2 + $0x100] sm:$0xff]
        %v1009 = vld [vmem:[#allocation2 + $0x108] sm:$0xff]
        %v1010 = vld [vmem:[#allocation2 + $0x110] sm:$0xff]
        %v1011 = vld [vmem:[#allocation2 + $0x118] sm:$0xff]
        %v1012 = vld [vmem:[#allocation2 + $0x120] sm:$0xff]
        %v1013 = vld [vmem:[#allocation2 + $0x128] sm:$0xff]
        %v1014 = vld [vmem:[#allocation2 + $0x130] sm:$0xff]
        %v1015 = vld [vmem:[#allocation2 + $0x138] sm:$0xff]
        %v1016 = vld [vmem:[#allocation2 + $0x140] sm:$0xff]
        %v1017 = vld [vmem:[#allocation2 + $0x148] sm:$0xff]
        %v1018 = vld [vmem:[#allocation2 + $0x150] sm:$0xff]
        %v1019 = vld [vmem:[#allocation2 + $0x158] sm:$0xff]
        %v1020 = vld [vmem:[#allocation2 + $0x160] sm:$0xff]
        %v1021 = vld [vmem:[#allocation2 + $0x168] sm:$0xff]
        %v1022 = vld [vmem:[#allocation2 + $0x170] sm:$0xff]
        %v1023 = vld [vmem:[#allocation2 + $0x178] sm:$0xff]
        %v1024 = vld [vmem:[#allocation2 + $0x180] sm:$0xff]
        %v1025 = vld [vmem:[#allocation2 + $0x188] sm:$0xff]
        %v1026 = vld [vmem:[#allocation2 + $0x190] sm:$0xff]
        %v1027 = vld [vmem:[#allocation2 + $0x198] sm:$0xff]
        %v1028 = vld [vmem:[#allocation2 + $0x1a0] sm:$0xff]
        %v1029 = vld [vmem:[#allocation2 + $0x1a8] sm:$0xff]
        %v1030 = vld [vmem:[#allocation2 + $0x1b0] sm:$0xff]
        %v1031 = vld [vmem:[#allocation2 + $0x1b8] sm:$0xff]
        %v1032 = vld [vmem:[#allocation2 + $0x1c0] sm:$0xff]
        %v1033 = vld [vmem:[#allocation2 + $0x1c8] sm:$0xff]
        %v1034 = vld [vmem:[#allocation2 + $0x1d0] sm:$0xff]
        %v1035 = vld [vmem:[#allocation2 + $0x1d8] sm:$0xff]
        %v1036 = vld [vmem:[#allocation2 + $0x1e0] sm:$0xff]
        %v1037 = vld [vmem:[#allocation2 + $0x1e8] sm:$0xff]
        %v1038 = vld [vmem:[#allocation2 + $0x1f0] sm:$0xff]
        %v1039 = vld [vmem:[#allocation2 + $0x1f8] sm:$0xff]
        %v1040 = vld [vmem:[#allocation2 + $0x200] sm:$0xff]
        %v1041 = vld [vmem:[#allocation2 + $0x208] sm:$0xff]
        %v1042 = vld [vmem:[#allocation2 + $0x210] sm:$0xff]
        %v1043 = vld [vmem:[#allocation2 + $0x218] sm:$0xff]
        %v1044 = vld [vmem:[#allocation2 + $0x220] sm:$0xff]
        %v1045 = vld [vmem:[#allocation2 + $0x228] sm:$0xff]
        %v1046 = vld [vmem:[#allocation2 + $0x230] sm:$0xff]
        %v1047 = vld [vmem:[#allocation2 + $0x238] sm:$0xff]
        %v1048 = vld [vmem:[#allocation2 + $0x240] sm:$0xff]
        %v1049 = vld [vmem:[#allocation2 + $0x248] sm:$0xff]
        %v1050 = vld [vmem:[#allocation2 + $0x250] sm:$0xff]
        %v1051 = vpack.c.bf16 %v979, %v976
        %v1052 = vpack.c.bf16 %v980, %v977
        %v1053 = vpack.c.bf16 %v981, %v978
        %v1054 = vpack.c.bf16 %v985, %v982
        %v1055 = vpack.c.bf16 %v986, %v983
        %v1056 = vpack.c.bf16 %v987, %v984
        %v1057 = vpack.c.bf16 %v991, %v988
        %v1058 = vpack.c.bf16 %v992, %v989
        %v1059 = vpack.c.bf16 %v993, %v990
        %v1060 = vpack.c.bf16 %v997, %v994
        %v1061 = vpack.c.bf16 %v998, %v995
        %v1062 = vpack.c.bf16 %v999, %v996
        %v1063 = vpack.c.bf16 %v1003, %v1000
        %v1064 = vpack.c.bf16 %v1004, %v1001
        %v1065 = vpack.c.bf16 %v1005, %v1002
        %v1066 = vpack.c.bf16 %v1009, %v1006
        %v1067 = vpack.c.bf16 %v1010, %v1007
        %v1068 = vpack.c.bf16 %v1011, %v1008
        %v1069 = vpack.c.bf16 %v1015, %v1012
        %v1070 = vpack.c.bf16 %v1016, %v1013
        %v1071 = vpack.c.bf16 %v1017, %v1014
        %v1072 = vpack.c.bf16 %v1021, %v1018
        %v1073 = vpack.c.bf16 %v1022, %v1019
        %v1074 = vpack.c.bf16 %v1023, %v1020
        %v1075 = vpack.c.bf16 %v1027, %v1024
        %v1076 = vpack.c.bf16 %v1028, %v1025
        %v1077 = vpack.c.bf16 %v1029, %v1026
        %v1078 = vpack.c.bf16 %v1033, %v1030
        %v1079 = vpack.c.bf16 %v1034, %v1031
        %v1080 = vpack.c.bf16 %v1035, %v1032
        %v1081 = vpack.c.bf16 %v1039, %v1036
        %v1082 = vpack.c.bf16 %v1040, %v1037
        %v1083 = vpack.c.bf16 %v1041, %v1038
        %v1084 = vpack.c.bf16 %v1045, %v1042
        %v1085 = vpack.c.bf16 %v1046, %v1043
        %v1086 = vpack.c.bf16 %v1047, %v1044
        %v1087 = vpack.c.bf16 %v1048, %v1048
        %v1088 = vpack.c.bf16 %v1049, %v1049
        %v1089 = vpack.c.bf16 %v1050, %v1050
        %v1090 = vld [vmem:[%s2] sm:$0xff]
        %v1091 = vld [vmem:[%s2 + $0x8] sm:$0xff]
        %v1092 = vld [vmem:[%s2 + $0x10] sm:$0xff]
        %v1093 = vld [vmem:[%s2 + $0x18] sm:$0xff]
        %1095 = vset.pattern.permute.xlu0 0
        %1096 = vperm.xlu0 %1095, %v1090
        %v1097 = vpop.permute.xlu0 %1096
        %1100 = vset.pattern.permute.xlu0 0
        %1101 = vperm.xlu0 %1100, %v1091
        %v1102 = vpop.permute.xlu0 %1101
        %1105 = vset.pattern.permute.xlu0 0
        %1106 = vperm.xlu0 %1105, %v1092
        %v1107 = vpop.permute.xlu0 %1106
        %1110 = vset.pattern.permute.xlu0 0
        %1111 = vperm.xlu0 %1110, %v1093
        %v1112 = vpop.permute.xlu0 %1111
        %v1118 = vunpack.c.l.b16 %v972
        %v1119 = vunpack.c.h.b16 %v972
        %v1120 = vunpack.c.l.b16 %v973
        %v1121 = vunpack.c.h.b16 %v973
        %v1122 = vunpack.c.l.b16 %v974
        %v1123 = vunpack.c.h.b16 %v974
        %v1124 = vunpack.c.l.b16 %v975
        %v1125 = vunpack.c.h.b16 %v975
        %v1126 = vpack.c.b16 %v1120, %v1118
        %v1127 = vpack.c.b16 %v1121, %v1119
        %v1128 = vpack.c.b16 %v1124, %v1122
        %v1129 = vpack.c.b16 %v1125, %v1123
        %vm1132 = vcmask 588800
        %v1134 = vsel %vm1132, %v1127, 0
        %v1137 = vsel %vm1132, %v1129, 0
        %vm1139 = vcmask 1043456
        %v1141 = vsel %vm1139, %v1087, 0
        %v1144 = vsel %vm1139, %v1088, 0
        %v1147 = vsel %vm1139, %v1089, 0
        %1149 = vmatprep.subr.bf16.mxu0 %v1073
        %1150 = vmatpush1.bf16.msra.mxu0 %v1072
        %1151 = vmatprep.subr.bf16.mxu0 %v1070
        %1152 = vmatpush1.bf16.msra.mxu0 %v1069
        %1153 = vmatprep.subr.bf16.mxu0 %v1067
        %1154 = vmatpush1.bf16.msra.mxu0 %v1066
        %1155 = vmatprep.subr.bf16.mxu0 %v1064
        %1156 = vmatpush1.bf16.msra.mxu0 %v1063
        %1157 = vmatprep.subr.bf16.mxu0 %v1061
        %1158 = vmatpush1.bf16.msra.mxu0 %v1060
        %1159 = vmatprep.subr.bf16.mxu0 %v1058
        %1160 = vmatpush1.bf16.msra.mxu0 %v1057
        %1161 = vmatprep.subr.bf16.mxu0 %v1055
        %1162 = vmatpush1.bf16.msra.mxu0 %v1054
        %1163 = vmatprep.subr.bf16.mxu0 %v1052
        %1164 = vmatpush1.bf16.msra.mxu0 %v1051
        %1165 = vmatprep.subr.bf16.mxu0 0
        %1166 = vmatpush2.bf16.msra.mxu0 0
        %1167 = vmatprep.subr.bf16.mxu0 0
        %1168 = vmatpush2.bf16.msra.mxu0 0
        %1169 = vmatprep.subr.bf16.mxu0 0
        %1170 = vmatpush2.bf16.msra.mxu0 0
        %1171 = vmatprep.subr.bf16.mxu0 %v1144
        %1172 = vmatpush2.bf16.msra.mxu0 %v1141
        %1173 = vmatprep.subr.bf16.mxu0 %v1085
        %1174 = vmatpush2.bf16.msra.mxu0 %v1084
        %1175 = vmatprep.subr.bf16.mxu0 %v1082
        %1176 = vmatpush2.bf16.msra.mxu0 %v1081
        %1177 = vmatprep.subr.bf16.mxu0 %v1079
        %1178 = vmatpush2.bf16.msra.mxu0 %v1078
        %1179 = vmatprep.subr.bf16.mxu0 %v1076
        %1180 = vmatpush2.bf16.msra.mxu0 %v1075
        %1181 = vmatprep.mubr.bf16.mxu0 %v1134
        %1182 = vmatmul.mubr.bf16.gmra.mxu0 %v1126
        %v1183 = vpop.f32.mrf.mxu0
        %v1184 = vadd.f32 %v1097, %v1183
        %v1185 = vpop.f32.mrf.mxu0
        %v1186 = vadd.f32 %v1097, %v1185
        %v1187 = vpop.f32.mrf.mxu0
        %v1188 = vadd.f32 %v1102, %v1187
        %v1189 = vpop.f32.mrf.mxu0
        %v1190 = vadd.f32 %v1102, %v1189
        %1191 = vmatprep.mubr.bf16.mxu0 %v1137
        %1192 = vmatmul.mubr.bf16.gmra.mxu0 %v1128
        %v1193 = vpop.f32.mrf.mxu0
        %v1194 = vadd.f32 %v1107, %v1193
        %v1195 = vpop.f32.mrf.mxu0
        %v1196 = vadd.f32 %v1107, %v1195
        %v1197 = vpop.f32.mrf.mxu0
        %v1198 = vadd.f32 %v1112, %v1197
        %v1199 = vpop.f32.mrf.mxu0
        %v1200 = vadd.f32 %v1112, %v1199
        %1201 = vdwg.mxu0
        %1202 = vmatprep.subr.bf16.mxu0 0
        %1203 = vmatpush1.bf16.msra.mxu0 %v1074
        %1204 = vmatprep.subr.bf16.mxu0 0
        %1205 = vmatpush1.bf16.msra.mxu0 %v1071
        %1206 = vmatprep.subr.bf16.mxu0 0
        %1207 = vmatpush1.bf16.msra.mxu0 %v1068
        %1208 = vmatprep.subr.bf16.mxu0 0
        %1209 = vmatpush1.bf16.msra.mxu0 %v1065
        %1210 = vmatprep.subr.bf16.mxu0 0
        %1211 = vmatpush1.bf16.msra.mxu0 %v1062
        %1212 = vmatprep.subr.bf16.mxu0 0
        %1213 = vmatpush1.bf16.msra.mxu0 %v1059
        %1214 = vmatprep.subr.bf16.mxu0 0
        %1215 = vmatpush1.bf16.msra.mxu0 %v1056
        %1216 = vmatprep.subr.bf16.mxu0 0
        %1217 = vmatpush1.bf16.msra.mxu0 %v1053
        %1218 = vmatprep.subr.bf16.mxu0 0
        %1219 = vmatpush2.bf16.msra.mxu0 0
        %1220 = vmatprep.subr.bf16.mxu0 0
        %1221 = vmatpush2.bf16.msra.mxu0 0
        %1222 = vmatprep.subr.bf16.mxu0 0
        %1223 = vmatpush2.bf16.msra.mxu0 0
        %1224 = vmatprep.subr.bf16.mxu0 0
        %1225 = vmatpush2.bf16.msra.mxu0 %v1147
        %1226 = vmatprep.subr.bf16.mxu0 0
        %1227 = vmatpush2.bf16.msra.mxu0 %v1086
        %1228 = vmatprep.subr.bf16.mxu0 0
        %1229 = vmatpush2.bf16.msra.mxu0 %v1083
        %1230 = vmatprep.subr.bf16.mxu0 0
        %1231 = vmatpush2.bf16.msra.mxu0 %v1080
        %1232 = vmatprep.subr.bf16.mxu0 0
        %1233 = vmatpush2.bf16.msra.mxu0 %v1077
        %1234 = vmatprep.mubr.bf16.mxu0 %v1134
        %1235 = vmatmul.mubr.bf16.gmra.mxu0 %v1126
        %v1236 = vpop.f32.mrf.mxu0
        %v1237 = vadd.f32 %v1097, %v1236
        %v1238 = vpop.f32.mrf.mxu0
        %v1239 = vpop.f32.mrf.mxu0
        %v1240 = vadd.f32 %v1102, %v1239
        %v1241 = vpop.f32.mrf.mxu0
        %1242 = vmatprep.mubr.bf16.mxu0 %v1137
        %1243 = vmatmul.mubr.bf16.gmra.mxu0 %v1128
        %v1244 = vpop.f32.mrf.mxu0
        %v1245 = vadd.f32 %v1107, %v1244
        %v1246 = vpop.f32.mrf.mxu0
        %v1247 = vpop.f32.mrf.mxu0
        %v1248 = vadd.f32 %v1112, %v1247
        %v1249 = vpop.f32.mrf.mxu0
        %1250 = vdwg.mxu0
        %v1251 = vmax.f32 %v1184, 0.0
        %v1252 = vmax.f32 %v1186, 0.0
        %v1253 = vmax.f32 %v1237, 0.0
        %v1254 = vmax.f32 %v1188, 0.0
        %v1255 = vmax.f32 %v1190, 0.0
        %v1256 = vmax.f32 %v1240, 0.0
        %v1257 = vmax.f32 %v1194, 0.0
        %v1258 = vmax.f32 %v1196, 0.0
        %v1259 = vmax.f32 %v1245, 0.0
        %v1261 = vlaneseq
        %v1262 = vshrl.u32 %v1261, 7
        %v1263 = vsub.s32 0, %v1262
        %v1264 = vrot.slane %v341, %v1263
        %v1265 = vlaneseq
        %v1266 = vshrl.u32 %v1265, 7
        %v1267 = vsub.s32 1, %v1266
        %v1268 = vrot.slane %v341, %v1267
        %v1269 = vlaneseq
        %v1270 = vshrl.u32 %v1269, 7
        %v1271 = vsub.s32 2, %v1270
        %v1272 = vrot.slane %v341, %v1271
        %v1276 = vmul.f32 %v1251, %v1264
        %v1277 = vmul.f32 %v1252, %v1268
        %v1278 = vmul.f32 %v1253, %v1272
        %v1279 = vmul.f32 %v1254, %v1264
        %v1280 = vmul.f32 %v1255, %v1268
        %v1281 = vmul.f32 %v1256, %v1272
        %v1282 = vmul.f32 %v1257, %v1264
        %v1283 = vmul.f32 %v1258, %v1268
        %v1284 = vmul.f32 %v1259, %v1272
        %1285 = vst [vmem:[#allocation3] sm:$0xff] 0.0
        %1286 = vst [vmem:[#allocation3 + $0x8] sm:$0xff] 0.0
        %1287 = vst [vmem:[#allocation3 + $0x10] sm:$0xff] 0.0
        %1288 = vst [vmem:[#allocation3 + $0x18] sm:$0xff] 0.0
        %1289 = vst [vmem:[#allocation3 + $0x20] sm:$0xff] 0.0
        %1290 = vst [vmem:[#allocation3 + $0x28] sm:$0xff] 0.0
        %1291 = vst [vmem:[#allocation3 + $0x30] sm:$0xff] 0.0
        %1292 = vst [vmem:[#allocation3 + $0x38] sm:$0xff] 0.0
        %1293 = vst [vmem:[#allocation3 + $0x40] sm:$0xff] 0.0
        %1294 = vst [vmem:[#allocation3 + $0x48] sm:$0xff] 0.0
        %1295 = vst [vmem:[#allocation3 + $0x50] sm:$0xff] 0.0
        %1296 = vst [vmem:[#allocation3 + $0x58] sm:$0xff] 0.0
        %1297 = vst [vmem:[#allocation3 + $0x60] sm:$0xff] 0.0
        %1298 = vst [vmem:[#allocation3 + $0x68] sm:$0xff] 0.0
        %1299 = vst [vmem:[#allocation3 + $0x70] sm:$0xff] 0.0
        %1300 = vst [vmem:[#allocation3 + $0x8] sm:$0xff] %v1276
        %1301 = vst [vmem:[#allocation3 + $0x10] sm:$0xff] %v1277
        %1302 = vst [vmem:[#allocation3 + $0x18] sm:$0xff] %v1278
        %1303 = vst [vmem:[#allocation3 + $0x30] sm:$0xff] %v1279
        %1304 = vst [vmem:[#allocation3 + $0x38] sm:$0xff] %v1280
        %1305 = vst [vmem:[#allocation3 + $0x40] sm:$0xff] %v1281
        %1306 = vst [vmem:[#allocation3 + $0x58] sm:$0xff] %v1282
        %1307 = vst [vmem:[#allocation3 + $0x60] sm:$0xff] %v1283
        %1308 = vst [vmem:[#allocation3 + $0x68] sm:$0xff] %v1284
        %v1309 = vld [vmem:[#allocation3] sm:$0xff]
        %v1310 = vld [vmem:[#allocation3 + $0x8] sm:$0xff]
        %v1311 = vld [vmem:[#allocation3 + $0x10] sm:$0xff]
        %v1312 = vld [vmem:[#allocation3 + $0x18] sm:$0xff]
        %v1313 = vld [vmem:[#allocation3 + $0x28] sm:$0xff]
        %v1314 = vld [vmem:[#allocation3 + $0x30] sm:$0xff]
        %v1315 = vld [vmem:[#allocation3 + $0x38] sm:$0xff]
        %v1316 = vld [vmem:[#allocation3 + $0x40] sm:$0xff]
        %v1317 = vld [vmem:[#allocation3 + $0x50] sm:$0xff]
        %v1318 = vld [vmem:[#allocation3 + $0x58] sm:$0xff]
        %v1319 = vld [vmem:[#allocation3 + $0x60] sm:$0xff]
        %v1320 = vld [vmem:[#allocation3 + $0x68] sm:$0xff]
        %1333 = vrot.lane.b32.xlu0 %v1309, 21
        %v1334 = vpop.permute.xlu0 %1333
        %1335 = vrot.lane.b32.xlu0 %v1310, 21
        %v1336 = vpop.permute.xlu0 %1335
        %1337 = vrot.lane.b32.xlu0 %v1311, 21
        %v1338 = vpop.permute.xlu0 %1337
        %1339 = vrot.lane.b32.xlu0 %v1312, 21
        %v1340 = vpop.permute.xlu0 %1339
        %1341 = vrot.lane.b32.xlu0 %v1313, 21
        %v1342 = vpop.permute.xlu0 %1341
        %1343 = vrot.lane.b32.xlu0 %v1314, 21
        %v1344 = vpop.permute.xlu0 %1343
        %1345 = vrot.lane.b32.xlu0 %v1315, 21
        %v1346 = vpop.permute.xlu0 %1345
        %1347 = vrot.lane.b32.xlu0 %v1316, 21
        %v1348 = vpop.permute.xlu0 %1347
        %1349 = vrot.lane.b32.xlu0 %v1317, 21
        %v1350 = vpop.permute.xlu0 %1349
        %1351 = vrot.lane.b32.xlu0 %v1318, 21
        %v1352 = vpop.permute.xlu0 %1351
        %1353 = vrot.lane.b32.xlu0 %v1319, 21
        %v1354 = vpop.permute.xlu0 %1353
        %1355 = vrot.lane.b32.xlu0 %v1320, 21
        %v1356 = vpop.permute.xlu0 %1355
        %vm1357 = vcmask 171008
        %v1358 = vsel %vm1357, %v1334, %v1336
        %v1359 = vsel %vm1357, %v1336, %v1338
        %v1360 = vsel %vm1357, %v1338, %v1340
        %v1361 = vsel %vm1357, %v1342, %v1344
        %v1362 = vsel %vm1357, %v1344, %v1346
        %v1363 = vsel %vm1357, %v1346, %v1348
        %v1364 = vsel %vm1357, %v1350, %v1352
        %v1365 = vsel %vm1357, %v1352, %v1354
        %v1366 = vsel %vm1357, %v1354, %v1356
        %1376 = vst [vmem:[#allocation4] sm:$0xff] %v1358
        %1377 = vst [vmem:[#allocation4 + $0x8] sm:$0xff] %v1359
        %1378 = vst [vmem:[#allocation4 + $0x10] sm:$0xff] %v1360
        %1379 = vst [vmem:[#allocation4 + $0x18] sm:$0xff] %v1361
        %1380 = vst [vmem:[#allocation4 + $0x20] sm:$0xff] %v1362
        %1381 = vst [vmem:[#allocation4 + $0x28] sm:$0xff] %v1363
        %1382 = vst [vmem:[#allocation4 + $0x30] sm:$0xff] %v1364
        %1383 = vst [vmem:[#allocation4 + $0x38] sm:$0xff] %v1365
        %1384 = vst [vmem:[#allocation4 + $0x40] sm:$0xff] %v1366
        %v1385 = vld [vmem:[#allocation3] sm:$0xff]
        %v1386 = vld [vmem:[#allocation3 + $0x8] sm:$0xff]
        %v1387 = vld [vmem:[#allocation3 + $0x10] sm:$0xff]
        %v1388 = vld [vmem:[#allocation3 + $0x18] sm:$0xff]
        %v1389 = vld [vmem:[#allocation3 + $0x28] sm:$0xff]
        %v1390 = vld [vmem:[#allocation3 + $0x30] sm:$0xff]
        %v1391 = vld [vmem:[#allocation3 + $0x38] sm:$0xff]
        %v1392 = vld [vmem:[#allocation3 + $0x40] sm:$0xff]
        %v1393 = vld [vmem:[#allocation3 + $0x50] sm:$0xff]
        %v1394 = vld [vmem:[#allocation3 + $0x58] sm:$0xff]
        %v1395 = vld [vmem:[#allocation3 + $0x60] sm:$0xff]
        %v1396 = vld [vmem:[#allocation3 + $0x68] sm:$0xff]
        %1409 = vrot.lane.b32.xlu0 %v1385, 20
        %v1410 = vpop.permute.xlu0 %1409
        %1411 = vrot.lane.b32.xlu0 %v1386, 20
        %v1412 = vpop.permute.xlu0 %1411
        %1413 = vrot.lane.b32.xlu0 %v1387, 20
        %v1414 = vpop.permute.xlu0 %1413
        %1415 = vrot.lane.b32.xlu0 %v1388, 20
        %v1416 = vpop.permute.xlu0 %1415
        %1417 = vrot.lane.b32.xlu0 %v1389, 20
        %v1418 = vpop.permute.xlu0 %1417
        %1419 = vrot.lane.b32.xlu0 %v1390, 20
        %v1420 = vpop.permute.xlu0 %1419
        %1421 = vrot.lane.b32.xlu0 %v1391, 20
        %v1422 = vpop.permute.xlu0 %1421
        %1423 = vrot.lane.b32.xlu0 %v1392, 20
        %v1424 = vpop.permute.xlu0 %1423
        %1425 = vrot.lane.b32.xlu0 %v1393, 20
        %v1426 = vpop.permute.xlu0 %1425
        %1427 = vrot.lane.b32.xlu0 %v1394, 20
        %v1428 = vpop.permute.xlu0 %1427
        %1429 = vrot.lane.b32.xlu0 %v1395, 20
        %v1430 = vpop.permute.xlu0 %1429
        %1431 = vrot.lane.b32.xlu0 %v1396, 20
        %v1432 = vpop.permute.xlu0 %1431
        %vm1433 = vcmask 162816
        %v1434 = vsel %vm1433, %v1410, %v1412
        %v1435 = vsel %vm1433, %v1412, %v1414
        %v1436 = vsel %vm1433, %v1414, %v1416
        %v1437 = vsel %vm1433, %v1418, %v1420
        %v1438 = vsel %vm1433, %v1420, %v1422
        %v1439 = vsel %vm1433, %v1422, %v1424
        %v1440 = vsel %vm1433, %v1426, %v1428
        %v1441 = vsel %vm1433, %v1428, %v1430
        %v1442 = vsel %vm1433, %v1430, %v1432
        %1452 = vst [vmem:[#allocation4 + $0x48] sm:$0xff] %v1434
        %1453 = vst [vmem:[#allocation4 + $0x50] sm:$0xff] %v1435
        %1454 = vst [vmem:[#allocation4 + $0x58] sm:$0xff] %v1436
        %1455 = vst [vmem:[#allocation4 + $0x60] sm:$0xff] %v1437
        %1456 = vst [vmem:[#allocation4 + $0x68] sm:$0xff] %v1438
        %1457 = vst [vmem:[#allocation4 + $0x70] sm:$0xff] %v1439
        %1458 = vst [vmem:[#allocation4 + $0x78] sm:$0xff] %v1440
        %1459 = vst [vmem:[#allocation4 + $0x80] sm:$0xff] %v1441
        %1460 = vst [vmem:[#allocation4 + $0x88] sm:$0xff] %v1442
        %v1461 = vld [vmem:[#allocation3] sm:$0xff]
        %v1462 = vld [vmem:[#allocation3 + $0x8] sm:$0xff]
        %v1463 = vld [vmem:[#allocation3 + $0x10] sm:$0xff]
        %v1464 = vld [vmem:[#allocation3 + $0x18] sm:$0xff]
        %v1465 = vld [vmem:[#allocation3 + $0x28] sm:$0xff]
        %v1466 = vld [vmem:[#allocation3 + $0x30] sm:$0xff]
        %v1467 = vld [vmem:[#allocation3 + $0x38] sm:$0xff]
        %v1468 = vld [vmem:[#allocation3 + $0x40] sm:$0xff]
        %v1469 = vld [vmem:[#allocation3 + $0x50] sm:$0xff]
        %v1470 = vld [vmem:[#allocation3 + $0x58] sm:$0xff]
        %v1471 = vld [vmem:[#allocation3 + $0x60] sm:$0xff]
        %v1472 = vld [vmem:[#allocation3 + $0x68] sm:$0xff]
        %1485 = vrot.lane.b32.xlu0 %v1461, 19
        %v1486 = vpop.permute.xlu0 %1485
        %1487 = vrot.lane.b32.xlu0 %v1462, 19
        %v1488 = vpop.permute.xlu0 %1487
        %1489 = vrot.lane.b32.xlu0 %v1463, 19
        %v1490 = vpop.permute.xlu0 %1489
        %1491 = vrot.lane.b32.xlu0 %v1464, 19
        %v1492 = vpop.permute.xlu0 %1491
        %1493 = vrot.lane.b32.xlu0 %v1465, 19
        %v1494 = vpop.permute.xlu0 %1493
        %1495 = vrot.lane.b32.xlu0 %v1466, 19
        %v1496 = vpop.permute.xlu0 %1495
        %1497 = vrot.lane.b32.xlu0 %v1467, 19
        %v1498 = vpop.permute.xlu0 %1497
        %1499 = vrot.lane.b32.xlu0 %v1468, 19
        %v1500 = vpop.permute.xlu0 %1499
        %1501 = vrot.lane.b32.xlu0 %v1469, 19
        %v1502 = vpop.permute.xlu0 %1501
        %1503 = vrot.lane.b32.xlu0 %v1470, 19
        %v1504 = vpop.permute.xlu0 %1503
        %1505 = vrot.lane.b32.xlu0 %v1471, 19
        %v1506 = vpop.permute.xlu0 %1505
        %1507 = vrot.lane.b32.xlu0 %v1472, 19
        %v1508 = vpop.permute.xlu0 %1507
        %vm1509 = vcmask 154624
        %v1510 = vsel %vm1509, %v1486, %v1488
        %v1511 = vsel %vm1509, %v1488, %v1490
        %v1512 = vsel %vm1509, %v1490, %v1492
        %v1513 = vsel %vm1509, %v1494, %v1496
        %v1514 = vsel %vm1509, %v1496, %v1498
        %v1515 = vsel %vm1509, %v1498, %v1500
        %v1516 = vsel %vm1509, %v1502, %v1504
        %v1517 = vsel %vm1509, %v1504, %v1506
        %v1518 = vsel %vm1509, %v1506, %v1508
        %1528 = vst [vmem:[#allocation4 + $0x90] sm:$0xff] %v1510
        %1529 = vst [vmem:[#allocation4 + $0x98] sm:$0xff] %v1511
        %1530 = vst [vmem:[#allocation4 + $0xa0] sm:$0xff] %v1512
        %1531 = vst [vmem:[#allocation4 + $0xa8] sm:$0xff] %v1513
        %1532 = vst [vmem:[#allocation4 + $0xb0] sm:$0xff] %v1514
        %1533 = vst [vmem:[#allocation4 + $0xb8] sm:$0xff] %v1515
        %1534 = vst [vmem:[#allocation4 + $0xc0] sm:$0xff] %v1516
        %1535 = vst [vmem:[#allocation4 + $0xc8] sm:$0xff] %v1517
        %1536 = vst [vmem:[#allocation4 + $0xd0] sm:$0xff] %v1518
        %v1537 = vld [vmem:[#allocation3] sm:$0xff]
        %v1538 = vld [vmem:[#allocation3 + $0x8] sm:$0xff]
        %v1539 = vld [vmem:[#allocation3 + $0x10] sm:$0xff]
        %v1540 = vld [vmem:[#allocation3 + $0x18] sm:$0xff]
        %v1541 = vld [vmem:[#allocation3 + $0x28] sm:$0xff]
        %v1542 = vld [vmem:[#allocation3 + $0x30] sm:$0xff]
        %v1543 = vld [vmem:[#allocation3 + $0x38] sm:$0xff]
        %v1544 = vld [vmem:[#allocation3 + $0x40] sm:$0xff]
        %v1545 = vld [vmem:[#allocation3 + $0x50] sm:$0xff]
        %v1546 = vld [vmem:[#allocation3 + $0x58] sm:$0xff]
        %v1547 = vld [vmem:[#allocation3 + $0x60] sm:$0xff]
        %v1548 = vld [vmem:[#allocation3 + $0x68] sm:$0xff]
        %1561 = vrot.lane.b32.xlu0 %v1537, 1
        %v1562 = vpop.permute.xlu0 %1561
        %1563 = vrot.lane.b32.xlu0 %v1538, 1
        %v1564 = vpop.permute.xlu0 %1563
        %1565 = vrot.lane.b32.xlu0 %v1539, 1
        %v1566 = vpop.permute.xlu0 %1565
        %1567 = vrot.lane.b32.xlu0 %v1540, 1
        %v1568 = vpop.permute.xlu0 %1567
        %1569 = vrot.lane.b32.xlu0 %v1541, 1
        %v1570 = vpop.permute.xlu0 %1569
        %1571 = vrot.lane.b32.xlu0 %v1542, 1
        %v1572 = vpop.permute.xlu0 %1571
        %1573 = vrot.lane.b32.xlu0 %v1543, 1
        %v1574 = vpop.permute.xlu0 %1573
        %1575 = vrot.lane.b32.xlu0 %v1544, 1
        %v1576 = vpop.permute.xlu0 %1575
        %1577 = vrot.lane.b32.xlu0 %v1545, 1
        %v1578 = vpop.permute.xlu0 %1577
        %1579 = vrot.lane.b32.xlu0 %v1546, 1
        %v1580 = vpop.permute.xlu0 %1579
        %1581 = vrot.lane.b32.xlu0 %v1547, 1
        %v1582 = vpop.permute.xlu0 %1581
        %1583 = vrot.lane.b32.xlu0 %v1548, 1
        %v1584 = vpop.permute.xlu0 %1583
        %vm1585 = vcmask 7168
        %v1586 = vsel %vm1585, %v1562, %v1564
        %v1587 = vsel %vm1585, %v1564, %v1566
        %v1588 = vsel %vm1585, %v1566, %v1568
        %v1589 = vsel %vm1585, %v1570, %v1572
        %v1590 = vsel %vm1585, %v1572, %v1574
        %v1591 = vsel %vm1585, %v1574, %v1576
        %v1592 = vsel %vm1585, %v1578, %v1580
        %v1593 = vsel %vm1585, %v1580, %v1582
        %v1594 = vsel %vm1585, %v1582, %v1584
        %1604 = vst [vmem:[#allocation4 + $0xd8] sm:$0xff] %v1586
        %1605 = vst [vmem:[#allocation4 + $0xe0] sm:$0xff] %v1587
        %1606 = vst [vmem:[#allocation4 + $0xe8] sm:$0xff] %v1588
        %1607 = vst [vmem:[#allocation4 + $0xf0] sm:$0xff] %v1589
        %1608 = vst [vmem:[#allocation4 + $0xf8] sm:$0xff] %v1590
        %1609 = vst [vmem:[#allocation4 + $0x100] sm:$0xff] %v1591
        %1610 = vst [vmem:[#allocation4 + $0x108] sm:$0xff] %v1592
        %1611 = vst [vmem:[#allocation4 + $0x110] sm:$0xff] %v1593
        %1612 = vst [vmem:[#allocation4 + $0x118] sm:$0xff] %v1594
        %v1613 = vld [vmem:[#allocation3 + $0x8] sm:$0xff]
        %v1614 = vld [vmem:[#allocation3 + $0x10] sm:$0xff]
        %v1615 = vld [vmem:[#allocation3 + $0x18] sm:$0xff]
        %v1616 = vld [vmem:[#allocation3 + $0x30] sm:$0xff]
        %v1617 = vld [vmem:[#allocation3 + $0x38] sm:$0xff]
        %v1618 = vld [vmem:[#allocation3 + $0x40] sm:$0xff]
        %v1619 = vld [vmem:[#allocation3 + $0x58] sm:$0xff]
        %v1620 = vld [vmem:[#allocation3 + $0x60] sm:$0xff]
        %v1621 = vld [vmem:[#allocation3 + $0x68] sm:$0xff]
        %1622 = vst [vmem:[#allocation4 + $0x120] sm:$0xff] %v1613
        %1623 = vst [vmem:[#allocation4 + $0x128] sm:$0xff] %v1614
        %1624 = vst [vmem:[#allocation4 + $0x130] sm:$0xff] %v1615
        %1625 = vst [vmem:[#allocation4 + $0x138] sm:$0xff] %v1616
        %1626 = vst [vmem:[#allocation4 + $0x140] sm:$0xff] %v1617
        %1627 = vst [vmem:[#allocation4 + $0x148] sm:$0xff] %v1618
        %1628 = vst [vmem:[#allocation4 + $0x150] sm:$0xff] %v1619
        %1629 = vst [vmem:[#allocation4 + $0x158] sm:$0xff] %v1620
        %1630 = vst [vmem:[#allocation4 + $0x160] sm:$0xff] %v1621
        %v1631 = vld [vmem:[#allocation3 + $0x8] sm:$0xff]
        %v1632 = vld [vmem:[#allocation3 + $0x10] sm:$0xff]
        %v1633 = vld [vmem:[#allocation3 + $0x18] sm:$0xff]
        %v1634 = vld [vmem:[#allocation3 + $0x20] sm:$0xff]
        %v1635 = vld [vmem:[#allocation3 + $0x30] sm:$0xff]
        %v1636 = vld [vmem:[#allocation3 + $0x38] sm:$0xff]
        %v1637 = vld [vmem:[#allocation3 + $0x40] sm:$0xff]
        %v1638 = vld [vmem:[#allocation3 + $0x48] sm:$0xff]
        %v1639 = vld [vmem:[#allocation3 + $0x58] sm:$0xff]
        %v1640 = vld [vmem:[#allocation3 + $0x60] sm:$0xff]
        %v1641 = vld [vmem:[#allocation3 + $0x68] sm:$0xff]
        %v1642 = vld [vmem:[#allocation3 + $0x70] sm:$0xff]
        %1655 = vrot.lane.b32.xlu0 %v1631, 127
        %v1656 = vpop.permute.xlu0 %1655
        %1657 = vrot.lane.b32.xlu0 %v1632, 127
        %v1658 = vpop.permute.xlu0 %1657
        %1659 = vrot.lane.b32.xlu0 %v1633, 127
        %v1660 = vpop.permute.xlu0 %1659
        %1661 = vrot.lane.b32.xlu0 %v1634, 127
        %v1662 = vpop.permute.xlu0 %1661
        %1663 = vrot.lane.b32.xlu0 %v1635, 127
        %v1664 = vpop.permute.xlu0 %1663
        %1665 = vrot.lane.b32.xlu0 %v1636, 127
        %v1666 = vpop.permute.xlu0 %1665
        %1667 = vrot.lane.b32.xlu0 %v1637, 127
        %v1668 = vpop.permute.xlu0 %1667
        %1669 = vrot.lane.b32.xlu0 %v1638, 127
        %v1670 = vpop.permute.xlu0 %1669
        %1671 = vrot.lane.b32.xlu0 %v1639, 127
        %v1672 = vpop.permute.xlu0 %1671
        %1673 = vrot.lane.b32.xlu0 %v1640, 127
        %v1674 = vpop.permute.xlu0 %1673
        %1675 = vrot.lane.b32.xlu0 %v1641, 127
        %v1676 = vpop.permute.xlu0 %1675
        %1677 = vrot.lane.b32.xlu0 %v1642, 127
        %v1678 = vpop.permute.xlu0 %1677
        %v1679 = vsel %vm364, %v1656, %v1658
        %v1680 = vsel %vm364, %v1658, %v1660
        %v1681 = vsel %vm364, %v1660, %v1662
        %v1682 = vsel %vm364, %v1664, %v1666
        %v1683 = vsel %vm364, %v1666, %v1668
        %v1684 = vsel %vm364, %v1668, %v1670
        %v1685 = vsel %vm364, %v1672, %v1674
        %v1686 = vsel %vm364, %v1674, %v1676
        %v1687 = vsel %vm364, %v1676, %v1678
        %1697 = vst [vmem:[#allocation4 + $0x168] sm:$0xff] %v1679
        %1698 = vst [vmem:[#allocation4 + $0x170] sm:$0xff] %v1680
        %1699 = vst [vmem:[#allocation4 + $0x178] sm:$0xff] %v1681
        %1700 = vst [vmem:[#allocation4 + $0x180] sm:$0xff] %v1682
        %1701 = vst [vmem:[#allocation4 + $0x188] sm:$0xff] %v1683
        %1702 = vst [vmem:[#allocation4 + $0x190] sm:$0xff] %v1684
        %1703 = vst [vmem:[#allocation4 + $0x198] sm:$0xff] %v1685
        %1704 = vst [vmem:[#allocation4 + $0x1a0] sm:$0xff] %v1686
        %1705 = vst [vmem:[#allocation4 + $0x1a8] sm:$0xff] %v1687
        %v1706 = vld [vmem:[#allocation3 + $0x8] sm:$0xff]
        %v1707 = vld [vmem:[#allocation3 + $0x10] sm:$0xff]
        %v1708 = vld [vmem:[#allocation3 + $0x18] sm:$0xff]
        %v1709 = vld [vmem:[#allocation3 + $0x20] sm:$0xff]
        %v1710 = vld [vmem:[#allocation3 + $0x30] sm:$0xff]
        %v1711 = vld [vmem:[#allocation3 + $0x38] sm:$0xff]
        %v1712 = vld [vmem:[#allocation3 + $0x40] sm:$0xff]
        %v1713 = vld [vmem:[#allocation3 + $0x48] sm:$0xff]
        %v1714 = vld [vmem:[#allocation3 + $0x58] sm:$0xff]
        %v1715 = vld [vmem:[#allocation3 + $0x60] sm:$0xff]
        %v1716 = vld [vmem:[#allocation3 + $0x68] sm:$0xff]
        %v1717 = vld [vmem:[#allocation3 + $0x70] sm:$0xff]
        %1730 = vrot.lane.b32.xlu0 %v1706, 109
        %v1731 = vpop.permute.xlu0 %1730
        %1732 = vrot.lane.b32.xlu0 %v1707, 109
        %v1733 = vpop.permute.xlu0 %1732
        %1734 = vrot.lane.b32.xlu0 %v1708, 109
        %v1735 = vpop.permute.xlu0 %1734
        %1736 = vrot.lane.b32.xlu0 %v1709, 109
        %v1737 = vpop.permute.xlu0 %1736
        %1738 = vrot.lane.b32.xlu0 %v1710, 109
        %v1739 = vpop.permute.xlu0 %1738
        %1740 = vrot.lane.b32.xlu0 %v1711, 109
        %v1741 = vpop.permute.xlu0 %1740
        %1742 = vrot.lane.b32.xlu0 %v1712, 109
        %v1743 = vpop.permute.xlu0 %1742
        %1744 = vrot.lane.b32.xlu0 %v1713, 109
        %v1745 = vpop.permute.xlu0 %1744
        %1746 = vrot.lane.b32.xlu0 %v1714, 109
        %v1747 = vpop.permute.xlu0 %1746
        %1748 = vrot.lane.b32.xlu0 %v1715, 109
        %v1749 = vpop.permute.xlu0 %1748
        %1750 = vrot.lane.b32.xlu0 %v1716, 109
        %v1751 = vpop.permute.xlu0 %1750
        %1752 = vrot.lane.b32.xlu0 %v1717, 109
        %v1753 = vpop.permute.xlu0 %1752
        %vm1754 = vcmask 891904
        %v1755 = vsel %vm1754, %v1731, %v1733
        %v1756 = vsel %vm1754, %v1733, %v1735
        %v1757 = vsel %vm1754, %v1735, %v1737
        %v1758 = vsel %vm1754, %v1739, %v1741
        %v1759 = vsel %vm1754, %v1741, %v1743
        %v1760 = vsel %vm1754, %v1743, %v1745
        %v1761 = vsel %vm1754, %v1747, %v1749
        %v1762 = vsel %vm1754, %v1749, %v1751
        %v1763 = vsel %vm1754, %v1751, %v1753
        %1773 = vst [vmem:[#allocation4 + $0x1b0] sm:$0xff] %v1755
        %1774 = vst [vmem:[#allocation4 + $0x1b8] sm:$0xff] %v1756
        %1775 = vst [vmem:[#allocation4 + $0x1c0] sm:$0xff] %v1757
        %1776 = vst [vmem:[#allocation4 + $0x1c8] sm:$0xff] %v1758
        %1777 = vst [vmem:[#allocation4 + $0x1d0] sm:$0xff] %v1759
        %1778 = vst [vmem:[#allocation4 + $0x1d8] sm:$0xff] %v1760
        %1779 = vst [vmem:[#allocation4 + $0x1e0] sm:$0xff] %v1761
        %1780 = vst [vmem:[#allocation4 + $0x1e8] sm:$0xff] %v1762
        %1781 = vst [vmem:[#allocation4 + $0x1f0] sm:$0xff] %v1763
        %v1782 = vld [vmem:[#allocation3 + $0x8] sm:$0xff]
        %v1783 = vld [vmem:[#allocation3 + $0x10] sm:$0xff]
        %v1784 = vld [vmem:[#allocation3 + $0x18] sm:$0xff]
        %v1785 = vld [vmem:[#allocation3 + $0x20] sm:$0xff]
        %v1786 = vld [vmem:[#allocation3 + $0x30] sm:$0xff]
        %v1787 = vld [vmem:[#allocation3 + $0x38] sm:$0xff]
        %v1788 = vld [vmem:[#allocation3 + $0x40] sm:$0xff]
        %v1789 = vld [vmem:[#allocation3 + $0x48] sm:$0xff]
        %v1790 = vld [vmem:[#allocation3 + $0x58] sm:$0xff]
        %v1791 = vld [vmem:[#allocation3 + $0x60] sm:$0xff]
        %v1792 = vld [vmem:[#allocation3 + $0x68] sm:$0xff]
        %v1793 = vld [vmem:[#allocation3 + $0x70] sm:$0xff]
        %1806 = vrot.lane.b32.xlu0 %v1782, 108
        %v1807 = vpop.permute.xlu0 %1806
        %1808 = vrot.lane.b32.xlu0 %v1783, 108
        %v1809 = vpop.permute.xlu0 %1808
        %1810 = vrot.lane.b32.xlu0 %v1784, 108
        %v1811 = vpop.permute.xlu0 %1810
        %1812 = vrot.lane.b32.xlu0 %v1785, 108
        %v1813 = vpop.permute.xlu0 %1812
        %1814 = vrot.lane.b32.xlu0 %v1786, 108
        %v1815 = vpop.permute.xlu0 %1814
        %1816 = vrot.lane.b32.xlu0 %v1787, 108
        %v1817 = vpop.permute.xlu0 %1816
        %1818 = vrot.lane.b32.xlu0 %v1788, 108
        %v1819 = vpop.permute.xlu0 %1818
        %1820 = vrot.lane.b32.xlu0 %v1789, 108
        %v1821 = vpop.permute.xlu0 %1820
        %1822 = vrot.lane.b32.xlu0 %v1790, 108
        %v1823 = vpop.permute.xlu0 %1822
        %1824 = vrot.lane.b32.xlu0 %v1791, 108
        %v1825 = vpop.permute.xlu0 %1824
        %1826 = vrot.lane.b32.xlu0 %v1792, 108
        %v1827 = vpop.permute.xlu0 %1826
        %1828 = vrot.lane.b32.xlu0 %v1793, 108
        %v1829 = vpop.permute.xlu0 %1828
        %v1830 = vsel %vm468, %v1807, %v1809
        %v1831 = vsel %vm468, %v1809, %v1811
        %v1832 = vsel %vm468, %v1811, %v1813
        %v1833 = vsel %vm468, %v1815, %v1817
        %v1834 = vsel %vm468, %v1817, %v1819
        %v1835 = vsel %vm468, %v1819, %v1821
        %v1836 = vsel %vm468, %v1823, %v1825
        %v1837 = vsel %vm468, %v1825, %v1827
        %v1838 = vsel %vm468, %v1827, %v1829
        %1848 = vst [vmem:[#allocation4 + $0x1f8] sm:$0xff] %v1830
        %1849 = vst [vmem:[#allocation4 + $0x200] sm:$0xff] %v1831
        %1850 = vst [vmem:[#allocation4 + $0x208] sm:$0xff] %v1832
        %1851 = vst [vmem:[#allocation4 + $0x210] sm:$0xff] %v1833
        %1852 = vst [vmem:[#allocation4 + $0x218] sm:$0xff] %v1834
        %1853 = vst [vmem:[#allocation4 + $0x220] sm:$0xff] %v1835
        %1854 = vst [vmem:[#allocation4 + $0x228] sm:$0xff] %v1836
        %1855 = vst [vmem:[#allocation4 + $0x230] sm:$0xff] %v1837
        %1856 = vst [vmem:[#allocation4 + $0x238] sm:$0xff] %v1838
        %v1857 = vld [vmem:[#allocation3 + $0x8] sm:$0xff]
        %v1858 = vld [vmem:[#allocation3 + $0x10] sm:$0xff]
        %v1859 = vld [vmem:[#allocation3 + $0x18] sm:$0xff]
        %v1860 = vld [vmem:[#allocation3 + $0x20] sm:$0xff]
        %v1861 = vld [vmem:[#allocation3 + $0x30] sm:$0xff]
        %v1862 = vld [vmem:[#allocation3 + $0x38] sm:$0xff]
        %v1863 = vld [vmem:[#allocation3 + $0x40] sm:$0xff]
        %v1864 = vld [vmem:[#allocation3 + $0x48] sm:$0xff]
        %v1865 = vld [vmem:[#allocation3 + $0x58] sm:$0xff]
        %v1866 = vld [vmem:[#allocation3 + $0x60] sm:$0xff]
        %v1867 = vld [vmem:[#allocation3 + $0x68] sm:$0xff]
        %v1868 = vld [vmem:[#allocation3 + $0x70] sm:$0xff]
        %1881 = vrot.lane.b32.xlu0 %v1857, 107
        %v1882 = vpop.permute.xlu0 %1881
        %1883 = vrot.lane.b32.xlu0 %v1858, 107
        %v1884 = vpop.permute.xlu0 %1883
        %1885 = vrot.lane.b32.xlu0 %v1859, 107
        %v1886 = vpop.permute.xlu0 %1885
        %1887 = vrot.lane.b32.xlu0 %v1860, 107
        %v1888 = vpop.permute.xlu0 %1887
        %1889 = vrot.lane.b32.xlu0 %v1861, 107
        %v1890 = vpop.permute.xlu0 %1889
        %1891 = vrot.lane.b32.xlu0 %v1862, 107
        %v1892 = vpop.permute.xlu0 %1891
        %1893 = vrot.lane.b32.xlu0 %v1863, 107
        %v1894 = vpop.permute.xlu0 %1893
        %1895 = vrot.lane.b32.xlu0 %v1864, 107
        %v1896 = vpop.permute.xlu0 %1895
        %1897 = vrot.lane.b32.xlu0 %v1865, 107
        %v1898 = vpop.permute.xlu0 %1897
        %1899 = vrot.lane.b32.xlu0 %v1866, 107
        %v1900 = vpop.permute.xlu0 %1899
        %1901 = vrot.lane.b32.xlu0 %v1867, 107
        %v1902 = vpop.permute.xlu0 %1901
        %1903 = vrot.lane.b32.xlu0 %v1868, 107
        %v1904 = vpop.permute.xlu0 %1903
        %v1905 = vsel %vm494, %v1882, %v1884
        %v1906 = vsel %vm494, %v1884, %v1886
        %v1907 = vsel %vm494, %v1886, %v1888
        %v1908 = vsel %vm494, %v1890, %v1892
        %v1909 = vsel %vm494, %v1892, %v1894
        %v1910 = vsel %vm494, %v1894, %v1896
        %v1911 = vsel %vm494, %v1898, %v1900
        %v1912 = vsel %vm494, %v1900, %v1902
        %v1913 = vsel %vm494, %v1902, %v1904
        %1923 = vst [vmem:[#allocation4 + $0x240] sm:$0xff] %v1905
        %1924 = vst [vmem:[#allocation4 + $0x248] sm:$0xff] %v1906
        %1925 = vst [vmem:[#allocation4 + $0x250] sm:$0xff] %v1907
        %1926 = vst [vmem:[#allocation4 + $0x258] sm:$0xff] %v1908
        %1927 = vst [vmem:[#allocation4 + $0x260] sm:$0xff] %v1909
        %1928 = vst [vmem:[#allocation4 + $0x268] sm:$0xff] %v1910
        %1929 = vst [vmem:[#allocation4 + $0x270] sm:$0xff] %v1911
        %1930 = vst [vmem:[#allocation4 + $0x278] sm:$0xff] %v1912
        %1931 = vst [vmem:[#allocation4 + $0x280] sm:$0xff] %v1913
        %v1932 = vld [vmem:[%s3] sm:$0xff]
        %v1933 = vld [vmem:[#allocation4] sm:$0xff]
        %v1934 = vld [vmem:[#allocation4 + $0x8] sm:$0xff]
        %v1935 = vld [vmem:[#allocation4 + $0x10] sm:$0xff]
        %v1936 = vld [vmem:[#allocation4 + $0x18] sm:$0xff]
        %v1937 = vld [vmem:[#allocation4 + $0x20] sm:$0xff]
        %v1938 = vld [vmem:[#allocation4 + $0x28] sm:$0xff]
        %v1939 = vld [vmem:[#allocation4 + $0x30] sm:$0xff]
        %v1940 = vld [vmem:[#allocation4 + $0x38] sm:$0xff]
        %v1941 = vld [vmem:[#allocation4 + $0x40] sm:$0xff]
        %v1942 = vld [vmem:[#allocation4 + $0x48] sm:$0xff]
        %v1943 = vld [vmem:[#allocation4 + $0x50] sm:$0xff]
        %v1944 = vld [vmem:[#allocation4 + $0x58] sm:$0xff]
        %v1945 = vld [vmem:[#allocation4 + $0x60] sm:$0xff]
        %v1946 = vld [vmem:[#allocation4 + $0x68] sm:$0xff]
        %v1947 = vld [vmem:[#allocation4 + $0x70] sm:$0xff]
        %v1948 = vld [vmem:[#allocation4 + $0x78] sm:$0xff]
        %v1949 = vld [vmem:[#allocation4 + $0x80] sm:$0xff]
        %v1950 = vld [vmem:[#allocation4 + $0x88] sm:$0xff]
        %v1951 = vld [vmem:[#allocation4 + $0x90] sm:$0xff]
        %v1952 = vld [vmem:[#allocation4 + $0x98] sm:$0xff]
        %v1953 = vld [vmem:[#allocation4 + $0xa0] sm:$0xff]
        %v1954 = vld [vmem:[#allocation4 + $0xa8] sm:$0xff]
        %v1955 = vld [vmem:[#allocation4 + $0xb0] sm:$0xff]
        %v1956 = vld [vmem:[#allocation4 + $0xb8] sm:$0xff]
        %v1957 = vld [vmem:[#allocation4 + $0xc0] sm:$0xff]
        %v1958 = vld [vmem:[#allocation4 + $0xc8] sm:$0xff]
        %v1959 = vld [vmem:[#allocation4 + $0xd0] sm:$0xff]
        %v1960 = vld [vmem:[#allocation4 + $0xd8] sm:$0xff]
        %v1961 = vld [vmem:[#allocation4 + $0xe0] sm:$0xff]
        %v1962 = vld [vmem:[#allocation4 + $0xe8] sm:$0xff]
        %v1963 = vld [vmem:[#allocation4 + $0xf0] sm:$0xff]
        %v1964 = vld [vmem:[#allocation4 + $0xf8] sm:$0xff]
        %v1965 = vld [vmem:[#allocation4 + $0x100] sm:$0xff]
        %v1966 = vld [vmem:[#allocation4 + $0x108] sm:$0xff]
        %v1967 = vld [vmem:[#allocation4 + $0x110] sm:$0xff]
        %v1968 = vld [vmem:[#allocation4 + $0x118] sm:$0xff]
        %v1969 = vld [vmem:[#allocation4 + $0x120] sm:$0xff]
        %v1970 = vld [vmem:[#allocation4 + $0x128] sm:$0xff]
        %v1971 = vld [vmem:[#allocation4 + $0x130] sm:$0xff]
        %v1972 = vld [vmem:[#allocation4 + $0x138] sm:$0xff]
        %v1973 = vld [vmem:[#allocation4 + $0x140] sm:$0xff]
        %v1974 = vld [vmem:[#allocation4 + $0x148] sm:$0xff]
        %v1975 = vld [vmem:[#allocation4 + $0x150] sm:$0xff]
        %v1976 = vld [vmem:[#allocation4 + $0x158] sm:$0xff]
        %v1977 = vld [vmem:[#allocation4 + $0x160] sm:$0xff]
        %v1978 = vld [vmem:[#allocation4 + $0x168] sm:$0xff]
        %v1979 = vld [vmem:[#allocation4 + $0x170] sm:$0xff]
        %v1980 = vld [vmem:[#allocation4 + $0x178] sm:$0xff]
        %v1981 = vld [vmem:[#allocation4 + $0x180] sm:$0xff]
        %v1982 = vld [vmem:[#allocation4 + $0x188] sm:$0xff]
        %v1983 = vld [vmem:[#allocation4 + $0x190] sm:$0xff]
        %v1984 = vld [vmem:[#allocation4 + $0x198] sm:$0xff]
        %v1985 = vld [vmem:[#allocation4 + $0x1a0] sm:$0xff]
        %v1986 = vld [vmem:[#allocation4 + $0x1a8] sm:$0xff]
        %v1987 = vld [vmem:[#allocation4 + $0x1b0] sm:$0xff]
        %v1988 = vld [vmem:[#allocation4 + $0x1b8] sm:$0xff]
        %v1989 = vld [vmem:[#allocation4 + $0x1c0] sm:$0xff]
        %v1990 = vld [vmem:[#allocation4 + $0x1c8] sm:$0xff]
        %v1991 = vld [vmem:[#allocation4 + $0x1d0] sm:$0xff]
        %v1992 = vld [vmem:[#allocation4 + $0x1d8] sm:$0xff]
        %v1993 = vld [vmem:[#allocation4 + $0x1e0] sm:$0xff]
        %v1994 = vld [vmem:[#allocation4 + $0x1e8] sm:$0xff]
        %v1995 = vld [vmem:[#allocation4 + $0x1f0] sm:$0xff]
        %v1996 = vld [vmem:[#allocation4 + $0x1f8] sm:$0xff]
        %v1997 = vld [vmem:[#allocation4 + $0x200] sm:$0xff]
        %v1998 = vld [vmem:[#allocation4 + $0x208] sm:$0xff]
        %v1999 = vld [vmem:[#allocation4 + $0x210] sm:$0xff]
        %v2000 = vld [vmem:[#allocation4 + $0x218] sm:$0xff]
        %v2001 = vld [vmem:[#allocation4 + $0x220] sm:$0xff]
        %v2002 = vld [vmem:[#allocation4 + $0x228] sm:$0xff]
        %v2003 = vld [vmem:[#allocation4 + $0x230] sm:$0xff]
        %v2004 = vld [vmem:[#allocation4 + $0x238] sm:$0xff]
        %v2005 = vld [vmem:[#allocation4 + $0x240] sm:$0xff]
        %v2006 = vld [vmem:[#allocation4 + $0x248] sm:$0xff]
        %v2007 = vld [vmem:[#allocation4 + $0x250] sm:$0xff]
        %v2008 = vld [vmem:[#allocation4 + $0x258] sm:$0xff]
        %v2009 = vld [vmem:[#allocation4 + $0x260] sm:$0xff]
        %v2010 = vld [vmem:[#allocation4 + $0x268] sm:$0xff]
        %v2011 = vld [vmem:[#allocation4 + $0x270] sm:$0xff]
        %v2012 = vld [vmem:[#allocation4 + $0x278] sm:$0xff]
        %v2013 = vld [vmem:[#allocation4 + $0x280] sm:$0xff]
        %v2014 = vpack.c.bf16 %v1936, %v1933
        %v2015 = vpack.c.bf16 %v1937, %v1934
        %v2016 = vpack.c.bf16 %v1938, %v1935
        %v2017 = vpack.c.bf16 %v1942, %v1939
        %v2018 = vpack.c.bf16 %v1943, %v1940
        %v2019 = vpack.c.bf16 %v1944, %v1941
        %v2020 = vpack.c.bf16 %v1948, %v1945
        %v2021 = vpack.c.bf16 %v1949, %v1946
        %v2022 = vpack.c.bf16 %v1950, %v1947
        %v2023 = vpack.c.bf16 %v1954, %v1951
        %v2024 = vpack.c.bf16 %v1955, %v1952
        %v2025 = vpack.c.bf16 %v1956, %v1953
        %v2026 = vpack.c.bf16 %v1960, %v1957
        %v2027 = vpack.c.bf16 %v1961, %v1958
        %v2028 = vpack.c.bf16 %v1962, %v1959
        %v2029 = vpack.c.bf16 %v1966, %v1963
        %v2030 = vpack.c.bf16 %v1967, %v1964
        %v2031 = vpack.c.bf16 %v1968, %v1965
        %v2032 = vpack.c.bf16 %v1972, %v1969
        %v2033 = vpack.c.bf16 %v1973, %v1970
        %v2034 = vpack.c.bf16 %v1974, %v1971
        %v2035 = vpack.c.bf16 %v1978, %v1975
        %v2036 = vpack.c.bf16 %v1979, %v1976
        %v2037 = vpack.c.bf16 %v1980, %v1977
        %v2038 = vpack.c.bf16 %v1984, %v1981
        %v2039 = vpack.c.bf16 %v1985, %v1982
        %v2040 = vpack.c.bf16 %v1986, %v1983
        %v2041 = vpack.c.bf16 %v1990, %v1987
        %v2042 = vpack.c.bf16 %v1991, %v1988
        %v2043 = vpack.c.bf16 %v1992, %v1989
        %v2044 = vpack.c.bf16 %v1996, %v1993
        %v2045 = vpack.c.bf16 %v1997, %v1994
        %v2046 = vpack.c.bf16 %v1998, %v1995
        %v2047 = vpack.c.bf16 %v2002, %v1999
        %v2048 = vpack.c.bf16 %v2003, %v2000
        %v2049 = vpack.c.bf16 %v2004, %v2001
        %v2050 = vpack.c.bf16 %v2008, %v2005
        %v2051 = vpack.c.bf16 %v2009, %v2006
        %v2052 = vpack.c.bf16 %v2010, %v2007
        %v2053 = vpack.c.bf16 %v2011, %v2011
        %v2054 = vpack.c.bf16 %v2012, %v2012
        %v2055 = vpack.c.bf16 %v2013, %v2013
        %v2056 = vld [vmem:[%s4] sm:$0xff]
        %2058 = vset.pattern.permute.xlu0 0
        %2059 = vperm.xlu0 %2058, %v2056
        %v2060 = vpop.permute.xlu0 %2059
        %v2063 = vunpack.c.l.b16 %v1932
        %v2064 = vunpack.c.h.b16 %v1932
        %v2065 = vpack.c.b16 %v2063, %v2063
        %v2066 = vpack.c.b16 %v2064, %v2064
        %v2069 = vsel %vm598, %v2066, 0
        %v2072 = vsel %vm1139, %v2053, 0
        %v2075 = vsel %vm1139, %v2054, 0
        %v2078 = vsel %vm1139, %v2055, 0
        %2080 = vmatprep.subr.bf16.mxu0 %v2036
        %2081 = vmatpush1.bf16.msra.mxu0 %v2035
        %2082 = vmatprep.subr.bf16.mxu0 %v2033
        %2083 = vmatpush1.bf16.msra.mxu0 %v2032
        %2084 = vmatprep.subr.bf16.mxu0 %v2030
        %2085 = vmatpush1.bf16.msra.mxu0 %v2029
        %2086 = vmatprep.subr.bf16.mxu0 %v2027
        %2087 = vmatpush1.bf16.msra.mxu0 %v2026
        %2088 = vmatprep.subr.bf16.mxu0 %v2024
        %2089 = vmatpush1.bf16.msra.mxu0 %v2023
        %2090 = vmatprep.subr.bf16.mxu0 %v2021
        %2091 = vmatpush1.bf16.msra.mxu0 %v2020
        %2092 = vmatprep.subr.bf16.mxu0 %v2018
        %2093 = vmatpush1.bf16.msra.mxu0 %v2017
        %2094 = vmatprep.subr.bf16.mxu0 %v2015
        %2095 = vmatpush1.bf16.msra.mxu0 %v2014
        %2096 = vmatprep.subr.bf16.mxu0 0
        %2097 = vmatpush2.bf16.msra.mxu0 0
        %2098 = vmatprep.subr.bf16.mxu0 0
        %2099 = vmatpush2.bf16.msra.mxu0 0
        %2100 = vmatprep.subr.bf16.mxu0 %v2075
        %2101 = vmatpush2.bf16.msra.mxu0 %v2072
        %2102 = vmatprep.subr.bf16.mxu0 %v2051
        %2103 = vmatpush2.bf16.msra.mxu0 %v2050
        %2104 = vmatprep.subr.bf16.mxu0 %v2048
        %2105 = vmatpush2.bf16.msra.mxu0 %v2047
        %2106 = vmatprep.subr.bf16.mxu0 %v2045
        %2107 = vmatpush2.bf16.msra.mxu0 %v2044
        %2108 = vmatprep.subr.bf16.mxu0 %v2042
        %2109 = vmatpush2.bf16.msra.mxu0 %v2041
        %2110 = vmatprep.subr.bf16.mxu0 %v2039
        %2111 = vmatpush2.bf16.msra.mxu0 %v2038
        %2112 = vmatprep.mubr.bf16.mxu0 %v2069
        %2113 = vmatmul.mubr.bf16.gmra.mxu0 %v2065
        %v2114 = vpop.f32.mrf.mxu0
        %v2115 = vadd.f32 %v2060, %v2114
        %v2116 = vpop.f32.mrf.mxu0
        %v2117 = vadd.f32 %v2060, %v2116
        %v2118 = vpop.f32.mrf.mxu0
        %v2119 = vpop.f32.mrf.mxu0
        %2120 = vdwg.mxu0
        %2121 = vmatprep.subr.bf16.mxu0 0
        %2122 = vmatpush1.bf16.msra.mxu0 %v2037
        %2123 = vmatprep.subr.bf16.mxu0 0
        %2124 = vmatpush1.bf16.msra.mxu0 %v2034
        %2125 = vmatprep.subr.bf16.mxu0 0
        %2126 = vmatpush1.bf16.msra.mxu0 %v2031
        %2127 = vmatprep.subr.bf16.mxu0 0
        %2128 = vmatpush1.bf16.msra.mxu0 %v2028
        %2129 = vmatprep.subr.bf16.mxu0 0
        %2130 = vmatpush1.bf16.msra.mxu0 %v2025
        %2131 = vmatprep.subr.bf16.mxu0 0
        %2132 = vmatpush1.bf16.msra.mxu0 %v2022
        %2133 = vmatprep.subr.bf16.mxu0 0
        %2134 = vmatpush1.bf16.msra.mxu0 %v2019
        %2135 = vmatprep.subr.bf16.mxu0 0
        %2136 = vmatpush1.bf16.msra.mxu0 %v2016
        %2137 = vmatprep.subr.bf16.mxu0 0
        %2138 = vmatpush2.bf16.msra.mxu0 0
        %2139 = vmatprep.subr.bf16.mxu0 0
        %2140 = vmatpush2.bf16.msra.mxu0 0
        %2141 = vmatprep.subr.bf16.mxu0 0
        %2142 = vmatpush2.bf16.msra.mxu0 %v2078
        %2143 = vmatprep.subr.bf16.mxu0 0
        %2144 = vmatpush2.bf16.msra.mxu0 %v2052
        %2145 = vmatprep.subr.bf16.mxu0 0
        %2146 = vmatpush2.bf16.msra.mxu0 %v2049
        %2147 = vmatprep.subr.bf16.mxu0 0
        %2148 = vmatpush2.bf16.msra.mxu0 %v2046
        %2149 = vmatprep.subr.bf16.mxu0 0
        %2150 = vmatpush2.bf16.msra.mxu0 %v2043
        %2151 = vmatprep.subr.bf16.mxu0 0
        %2152 = vmatpush2.bf16.msra.mxu0 %v2040
        %2153 = vmatprep.mubr.bf16.mxu0 %v2069
        %2154 = vmatmul.mubr.bf16.gmra.mxu0 %v2065
        %v2155 = vpop.f32.mrf.mxu0
        %v2156 = vadd.f32 %v2060, %v2155
        %v2157 = vpop.f32.mrf.mxu0
        %v2158 = vpop.f32.mrf.mxu0
        %v2159 = vpop.f32.mrf.mxu0
        %2160 = vdwg.mxu0
        %v2161 = vld [vmem:[%s304] sm:$0xff]
        %v2162 = vld [vmem:[%s304 + $0x8] sm:$0xff]
        %v2163 = vld [vmem:[%s304 + $0x10] sm:$0xff]
        %v2164 = vld [vmem:[%s304 + $0x18] sm:$0xff]
        %s2165 = scalar_lea.vmem %s304, 32 [#allocation5]
        %v2166 = vld [vmem:[%s2165] sm:$0xff]
        %v2167 = vld [vmem:[%s2165 + $0x8] sm:$0xff]
        %v2168 = vld [vmem:[%s2165 + $0x10] sm:$0xff]
        %2169 = vst [vmem:[#allocation2] sm:$0xff] %v2166
        %2170 = vst [vmem:[#allocation2 + $0x8] sm:$0xff] %v2167
        %2171 = vst [vmem:[#allocation2 + $0x10] sm:$0xff] %v2168
        %v2172 = vld [vmem:[%s2165] sm:$0xff]
        %v2173 = vld [vmem:[%s2165 + $0x8] sm:$0xff]
        %v2174 = vld [vmem:[%s2165 + $0x10] sm:$0xff]
        %v2175 = vld [vmem:[%s2165 + $0x18] sm:$0xff]
        %2180 = vrot.lane.b32.xlu0 %v2172, 127
        %v2181 = vpop.permute.xlu0 %2180
        %2182 = vrot.lane.b32.xlu0 %v2173, 127
        %v2183 = vpop.permute.xlu0 %2182
        %2184 = vrot.lane.b32.xlu0 %v2174, 127
        %v2185 = vpop.permute.xlu0 %2184
        %2186 = vrot.lane.b32.xlu0 %v2175, 127
        %v2187 = vpop.permute.xlu0 %2186
        %v2188 = vsel %vm364, %v2181, %v2183
        %v2189 = vsel %vm364, %v2183, %v2185
        %v2190 = vsel %vm364, %v2185, %v2187
        %2194 = vst [vmem:[#allocation2 + $0x18] sm:$0xff] %v2188
        %2195 = vst [vmem:[#allocation2 + $0x20] sm:$0xff] %v2189
        %2196 = vst [vmem:[#allocation2 + $0x28] sm:$0xff] %v2190
        %v2197 = vld [vmem:[%s2165] sm:$0xff]
        %v2198 = vld [vmem:[%s2165 + $0x8] sm:$0xff]
        %v2199 = vld [vmem:[%s2165 + $0x10] sm:$0xff]
        %v2200 = vld [vmem:[%s2165 + $0x18] sm:$0xff]
        %2205 = vrot.lane.b32.xlu0 %v2197, 126
        %v2206 = vpop.permute.xlu0 %2205
        %2207 = vrot.lane.b32.xlu0 %v2198, 126
        %v2208 = vpop.permute.xlu0 %2207
        %2209 = vrot.lane.b32.xlu0 %v2199, 126
        %v2210 = vpop.permute.xlu0 %2209
        %2211 = vrot.lane.b32.xlu0 %v2200, 126
        %v2212 = vpop.permute.xlu0 %2211
        %v2213 = vsel %vm390, %v2206, %v2208
        %v2214 = vsel %vm390, %v2208, %v2210
        %v2215 = vsel %vm390, %v2210, %v2212
        %2219 = vst [vmem:[#allocation2 + $0x30] sm:$0xff] %v2213
        %2220 = vst [vmem:[#allocation2 + $0x38] sm:$0xff] %v2214
        %2221 = vst [vmem:[#allocation2 + $0x40] sm:$0xff] %v2215
        %v2222 = vld [vmem:[%s2165] sm:$0xff]
        %v2223 = vld [vmem:[%s2165 + $0x8] sm:$0xff]
        %v2224 = vld [vmem:[%s2165 + $0x10] sm:$0xff]
        %v2225 = vld [vmem:[%s2165 + $0x18] sm:$0xff]
        %2230 = vrot.lane.b32.xlu0 %v2222, 125
        %v2231 = vpop.permute.xlu0 %2230
        %2232 = vrot.lane.b32.xlu0 %v2223, 125
        %v2233 = vpop.permute.xlu0 %2232
        %2234 = vrot.lane.b32.xlu0 %v2224, 125
        %v2235 = vpop.permute.xlu0 %2234
        %2236 = vrot.lane.b32.xlu0 %v2225, 125
        %v2237 = vpop.permute.xlu0 %2236
        %v2238 = vsel %vm416, %v2231, %v2233
        %v2239 = vsel %vm416, %v2233, %v2235
        %v2240 = vsel %vm416, %v2235, %v2237
        %2244 = vst [vmem:[#allocation2 + $0x48] sm:$0xff] %v2238
        %2245 = vst [vmem:[#allocation2 + $0x50] sm:$0xff] %v2239
        %2246 = vst [vmem:[#allocation2 + $0x58] sm:$0xff] %v2240
        %v2247 = vld [vmem:[%s2165] sm:$0xff]
        %v2248 = vld [vmem:[%s2165 + $0x8] sm:$0xff]
        %v2249 = vld [vmem:[%s2165 + $0x10] sm:$0xff]
        %v2250 = vld [vmem:[%s2165 + $0x18] sm:$0xff]
        %2255 = vrot.lane.b32.xlu0 %v2247, 124
        %v2256 = vpop.permute.xlu0 %2255
        %2257 = vrot.lane.b32.xlu0 %v2248, 124
        %v2258 = vpop.permute.xlu0 %2257
        %2259 = vrot.lane.b32.xlu0 %v2249, 124
        %v2260 = vpop.permute.xlu0 %2259
        %2261 = vrot.lane.b32.xlu0 %v2250, 124
        %v2262 = vpop.permute.xlu0 %2261
        %v2263 = vsel %vm442, %v2256, %v2258
        %v2264 = vsel %vm442, %v2258, %v2260
        %v2265 = vsel %vm442, %v2260, %v2262
        %2269 = vst [vmem:[#allocation2 + $0x60] sm:$0xff] %v2263
        %2270 = vst [vmem:[#allocation2 + $0x68] sm:$0xff] %v2264
        %2271 = vst [vmem:[#allocation2 + $0x70] sm:$0xff] %v2265
        %v2272 = vld [vmem:[%s2165] sm:$0xff]
        %v2273 = vld [vmem:[%s2165 + $0x8] sm:$0xff]
        %v2274 = vld [vmem:[%s2165 + $0x10] sm:$0xff]
        %v2275 = vld [vmem:[%s2165 + $0x18] sm:$0xff]
        %2280 = vrot.lane.b32.xlu0 %v2272, 108
        %v2281 = vpop.permute.xlu0 %2280
        %2282 = vrot.lane.b32.xlu0 %v2273, 108
        %v2283 = vpop.permute.xlu0 %2282
        %2284 = vrot.lane.b32.xlu0 %v2274, 108
        %v2285 = vpop.permute.xlu0 %2284
        %2286 = vrot.lane.b32.xlu0 %v2275, 108
        %v2287 = vpop.permute.xlu0 %2286
        %v2288 = vsel %vm468, %v2281, %v2283
        %v2289 = vsel %vm468, %v2283, %v2285
        %v2290 = vsel %vm468, %v2285, %v2287
        %2294 = vst [vmem:[#allocation2 + $0x78] sm:$0xff] %v2288
        %2295 = vst [vmem:[#allocation2 + $0x80] sm:$0xff] %v2289
        %2296 = vst [vmem:[#allocation2 + $0x88] sm:$0xff] %v2290
        %v2297 = vld [vmem:[%s2165] sm:$0xff]
        %v2298 = vld [vmem:[%s2165 + $0x8] sm:$0xff]
        %v2299 = vld [vmem:[%s2165 + $0x10] sm:$0xff]
        %v2300 = vld [vmem:[%s2165 + $0x18] sm:$0xff]
        %2305 = vrot.lane.b32.xlu0 %v2297, 107
        %v2306 = vpop.permute.xlu0 %2305
        %2307 = vrot.lane.b32.xlu0 %v2298, 107
        %v2308 = vpop.permute.xlu0 %2307
        %2309 = vrot.lane.b32.xlu0 %v2299, 107
        %v2310 = vpop.permute.xlu0 %2309
        %2311 = vrot.lane.b32.xlu0 %v2300, 107
        %v2312 = vpop.permute.xlu0 %2311
        %v2313 = vsel %vm494, %v2306, %v2308
        %v2314 = vsel %vm494, %v2308, %v2310
        %v2315 = vsel %vm494, %v2310, %v2312
        %2319 = vst [vmem:[#allocation2 + $0x90] sm:$0xff] %v2313
        %2320 = vst [vmem:[#allocation2 + $0x98] sm:$0xff] %v2314
        %2321 = vst [vmem:[#allocation2 + $0xa0] sm:$0xff] %v2315
        %v2322 = vld [vmem:[%s2165] sm:$0xff]
        %v2323 = vld [vmem:[%s2165 + $0x8] sm:$0xff]
        %v2324 = vld [vmem:[%s2165 + $0x10] sm:$0xff]
        %v2325 = vld [vmem:[%s2165 + $0x18] sm:$0xff]
        %2330 = vrot.lane.b32.xlu0 %v2322, 106
        %v2331 = vpop.permute.xlu0 %2330
        %2332 = vrot.lane.b32.xlu0 %v2323, 106
        %v2333 = vpop.permute.xlu0 %2332
        %2334 = vrot.lane.b32.xlu0 %v2324, 106
        %v2335 = vpop.permute.xlu0 %2334
        %2336 = vrot.lane.b32.xlu0 %v2325, 106
        %v2337 = vpop.permute.xlu0 %2336
        %v2338 = vsel %vm520, %v2331, %v2333
        %v2339 = vsel %vm520, %v2333, %v2335
        %v2340 = vsel %vm520, %v2335, %v2337
        %2344 = vst [vmem:[#allocation2 + $0xa8] sm:$0xff] %v2338
        %2345 = vst [vmem:[#allocation2 + $0xb0] sm:$0xff] %v2339
        %2346 = vst [vmem:[#allocation2 + $0xb8] sm:$0xff] %v2340
        %v2347 = vld [vmem:[%s2165] sm:$0xff]
        %v2348 = vld [vmem:[%s2165 + $0x8] sm:$0xff]
        %v2349 = vld [vmem:[%s2165 + $0x10] sm:$0xff]
        %v2350 = vld [vmem:[%s2165 + $0x18] sm:$0xff]
        %2355 = vrot.lane.b32.xlu0 %v2347, 105
        %v2356 = vpop.permute.xlu0 %2355
        %2357 = vrot.lane.b32.xlu0 %v2348, 105
        %v2358 = vpop.permute.xlu0 %2357
        %2359 = vrot.lane.b32.xlu0 %v2349, 105
        %v2360 = vpop.permute.xlu0 %2359
        %2361 = vrot.lane.b32.xlu0 %v2350, 105
        %v2362 = vpop.permute.xlu0 %2361
        %v2363 = vsel %vm546, %v2356, %v2358
        %v2364 = vsel %vm546, %v2358, %v2360
        %v2365 = vsel %vm546, %v2360, %v2362
        %2369 = vst [vmem:[#allocation2 + $0xc0] sm:$0xff] %v2363
        %2370 = vst [vmem:[#allocation2 + $0xc8] sm:$0xff] %v2364
        %2371 = vst [vmem:[#allocation2 + $0xd0] sm:$0xff] %v2365
        %v2372 = vld [vmem:[%s2165] sm:$0xff]
        %v2373 = vld [vmem:[%s2165 + $0x8] sm:$0xff]
        %v2374 = vld [vmem:[%s2165 + $0x10] sm:$0xff]
        %v2375 = vld [vmem:[%s2165 + $0x18] sm:$0xff]
        %2380 = vrot.lane.b32.xlu0 %v2372, 104
        %v2381 = vpop.permute.xlu0 %2380
        %2382 = vrot.lane.b32.xlu0 %v2373, 104
        %v2383 = vpop.permute.xlu0 %2382
        %2384 = vrot.lane.b32.xlu0 %v2374, 104
        %v2385 = vpop.permute.xlu0 %2384
        %2386 = vrot.lane.b32.xlu0 %v2375, 104
        %v2387 = vpop.permute.xlu0 %2386
        %v2388 = vsel %vm572, %v2381, %v2383
        %v2389 = vsel %vm572, %v2383, %v2385
        %v2390 = vsel %vm572, %v2385, %v2387
        %2394 = vst [vmem:[#allocation2 + $0xd8] sm:$0xff] %v2388
        %2395 = vst [vmem:[#allocation2 + $0xe0] sm:$0xff] %v2389
        %2396 = vst [vmem:[#allocation2 + $0xe8] sm:$0xff] %v2390
        %v2397 = vld [vmem:[%s2165] sm:$0xff]
        %v2398 = vld [vmem:[%s2165 + $0x8] sm:$0xff]
        %v2399 = vld [vmem:[%s2165 + $0x10] sm:$0xff]
        %v2400 = vld [vmem:[%s2165 + $0x18] sm:$0xff]
        %2405 = vrot.lane.b32.xlu0 %v2397, 88
        %v2406 = vpop.permute.xlu0 %2405
        %2407 = vrot.lane.b32.xlu0 %v2398, 88
        %v2408 = vpop.permute.xlu0 %2407
        %2409 = vrot.lane.b32.xlu0 %v2399, 88
        %v2410 = vpop.permute.xlu0 %2409
        %2411 = vrot.lane.b32.xlu0 %v2400, 88
        %v2412 = vpop.permute.xlu0 %2411
        %v2413 = vsel %vm598, %v2406, %v2408
        %v2414 = vsel %vm598, %v2408, %v2410
        %v2415 = vsel %vm598, %v2410, %v2412
        %2419 = vst [vmem:[#allocation2 + $0xf0] sm:$0xff] %v2413
        %2420 = vst [vmem:[#allocation2 + $0xf8] sm:$0xff] %v2414
        %2421 = vst [vmem:[#allocation2 + $0x100] sm:$0xff] %v2415
        %v2422 = vld [vmem:[%s2165] sm:$0xff]
        %v2423 = vld [vmem:[%s2165 + $0x8] sm:$0xff]
        %v2424 = vld [vmem:[%s2165 + $0x10] sm:$0xff]
        %v2425 = vld [vmem:[%s2165 + $0x18] sm:$0xff]
        %2430 = vrot.lane.b32.xlu0 %v2422, 87
        %v2431 = vpop.permute.xlu0 %2430
        %2432 = vrot.lane.b32.xlu0 %v2423, 87
        %v2433 = vpop.permute.xlu0 %2432
        %2434 = vrot.lane.b32.xlu0 %v2424, 87
        %v2435 = vpop.permute.xlu0 %2434
        %2436 = vrot.lane.b32.xlu0 %v2425, 87
        %v2437 = vpop.permute.xlu0 %2436
        %v2438 = vsel %vm624, %v2431, %v2433
        %v2439 = vsel %vm624, %v2433, %v2435
        %v2440 = vsel %vm624, %v2435, %v2437
        %2444 = vst [vmem:[#allocation2 + $0x108] sm:$0xff] %v2438
        %2445 = vst [vmem:[#allocation2 + $0x110] sm:$0xff] %v2439
        %2446 = vst [vmem:[#allocation2 + $0x118] sm:$0xff] %v2440
        %v2447 = vld [vmem:[%s2165] sm:$0xff]
        %v2448 = vld [vmem:[%s2165 + $0x8] sm:$0xff]
        %v2449 = vld [vmem:[%s2165 + $0x10] sm:$0xff]
        %v2450 = vld [vmem:[%s2165 + $0x18] sm:$0xff]
        %2455 = vrot.lane.b32.xlu0 %v2447, 86
        %v2456 = vpop.permute.xlu0 %2455
        %2457 = vrot.lane.b32.xlu0 %v2448, 86
        %v2458 = vpop.permute.xlu0 %2457
        %2459 = vrot.lane.b32.xlu0 %v2449, 86
        %v2460 = vpop.permute.xlu0 %2459
        %2461 = vrot.lane.b32.xlu0 %v2450, 86
        %v2462 = vpop.permute.xlu0 %2461
        %v2463 = vsel %vm650, %v2456, %v2458
        %v2464 = vsel %vm650, %v2458, %v2460
        %v2465 = vsel %vm650, %v2460, %v2462
        %2469 = vst [vmem:[#allocation2 + $0x120] sm:$0xff] %v2463
        %2470 = vst [vmem:[#allocation2 + $0x128] sm:$0xff] %v2464
        %2471 = vst [vmem:[#allocation2 + $0x130] sm:$0xff] %v2465
        %v2472 = vld [vmem:[%s2165] sm:$0xff]
        %v2473 = vld [vmem:[%s2165 + $0x8] sm:$0xff]
        %v2474 = vld [vmem:[%s2165 + $0x10] sm:$0xff]
        %v2475 = vld [vmem:[%s2165 + $0x18] sm:$0xff]
        %2480 = vrot.lane.b32.xlu0 %v2472, 85
        %v2481 = vpop.permute.xlu0 %2480
        %2482 = vrot.lane.b32.xlu0 %v2473, 85
        %v2483 = vpop.permute.xlu0 %2482
        %2484 = vrot.lane.b32.xlu0 %v2474, 85
        %v2485 = vpop.permute.xlu0 %2484
        %2486 = vrot.lane.b32.xlu0 %v2475, 85
        %v2487 = vpop.permute.xlu0 %2486
        %v2488 = vsel %vm676, %v2481, %v2483
        %v2489 = vsel %vm676, %v2483, %v2485
        %v2490 = vsel %vm676, %v2485, %v2487
        %2494 = vst [vmem:[#allocation2 + $0x138] sm:$0xff] %v2488
        %2495 = vst [vmem:[#allocation2 + $0x140] sm:$0xff] %v2489
        %2496 = vst [vmem:[#allocation2 + $0x148] sm:$0xff] %v2490
        %v2497 = vld [vmem:[%s2165] sm:$0xff]
        %v2498 = vld [vmem:[%s2165 + $0x8] sm:$0xff]
        %v2499 = vld [vmem:[%s2165 + $0x10] sm:$0xff]
        %v2500 = vld [vmem:[%s2165 + $0x18] sm:$0xff]
        %2505 = vrot.lane.b32.xlu0 %v2497, 84
        %v2506 = vpop.permute.xlu0 %2505
        %2507 = vrot.lane.b32.xlu0 %v2498, 84
        %v2508 = vpop.permute.xlu0 %2507
        %2509 = vrot.lane.b32.xlu0 %v2499, 84
        %v2510 = vpop.permute.xlu0 %2509
        %2511 = vrot.lane.b32.xlu0 %v2500, 84
        %v2512 = vpop.permute.xlu0 %2511
        %v2513 = vsel %vm702, %v2506, %v2508
        %v2514 = vsel %vm702, %v2508, %v2510
        %v2515 = vsel %vm702, %v2510, %v2512
        %2519 = vst [vmem:[#allocation2 + $0x150] sm:$0xff] %v2513
        %2520 = vst [vmem:[#allocation2 + $0x158] sm:$0xff] %v2514
        %2521 = vst [vmem:[#allocation2 + $0x160] sm:$0xff] %v2515
        %v2522 = vld [vmem:[%s2165] sm:$0xff]
        %v2523 = vld [vmem:[%s2165 + $0x8] sm:$0xff]
        %v2524 = vld [vmem:[%s2165 + $0x10] sm:$0xff]
        %v2525 = vld [vmem:[%s2165 + $0x18] sm:$0xff]
        %2530 = vrot.lane.b32.xlu0 %v2522, 68
        %v2531 = vpop.permute.xlu0 %2530
        %2532 = vrot.lane.b32.xlu0 %v2523, 68
        %v2533 = vpop.permute.xlu0 %2532
        %2534 = vrot.lane.b32.xlu0 %v2524, 68
        %v2535 = vpop.permute.xlu0 %2534
        %2536 = vrot.lane.b32.xlu0 %v2525, 68
        %v2537 = vpop.permute.xlu0 %2536
        %v2538 = vsel %vm728, %v2531, %v2533
        %v2539 = vsel %vm728, %v2533, %v2535
        %v2540 = vsel %vm728, %v2535, %v2537
        %2544 = vst [vmem:[#allocation2 + $0x168] sm:$0xff] %v2538
        %2545 = vst [vmem:[#allocation2 + $0x170] sm:$0xff] %v2539
        %2546 = vst [vmem:[#allocation2 + $0x178] sm:$0xff] %v2540
        %v2547 = vld [vmem:[%s2165] sm:$0xff]
        %v2548 = vld [vmem:[%s2165 + $0x8] sm:$0xff]
        %v2549 = vld [vmem:[%s2165 + $0x10] sm:$0xff]
        %v2550 = vld [vmem:[%s2165 + $0x18] sm:$0xff]
        %2555 = vrot.lane.b32.xlu0 %v2547, 67
        %v2556 = vpop.permute.xlu0 %2555
        %2557 = vrot.lane.b32.xlu0 %v2548, 67
        %v2558 = vpop.permute.xlu0 %2557
        %2559 = vrot.lane.b32.xlu0 %v2549, 67
        %v2560 = vpop.permute.xlu0 %2559
        %2561 = vrot.lane.b32.xlu0 %v2550, 67
        %v2562 = vpop.permute.xlu0 %2561
        %v2563 = vsel %vm754, %v2556, %v2558
        %v2564 = vsel %vm754, %v2558, %v2560
        %v2565 = vsel %vm754, %v2560, %v2562
        %2569 = vst [vmem:[#allocation2 + $0x180] sm:$0xff] %v2563
        %2570 = vst [vmem:[#allocation2 + $0x188] sm:$0xff] %v2564
        %2571 = vst [vmem:[#allocation2 + $0x190] sm:$0xff] %v2565
        %v2572 = vld [vmem:[%s2165] sm:$0xff]
        %v2573 = vld [vmem:[%s2165 + $0x8] sm:$0xff]
        %v2574 = vld [vmem:[%s2165 + $0x10] sm:$0xff]
        %v2575 = vld [vmem:[%s2165 + $0x18] sm:$0xff]
        %2580 = vrot.lane.b32.xlu0 %v2572, 66
        %v2581 = vpop.permute.xlu0 %2580
        %2582 = vrot.lane.b32.xlu0 %v2573, 66
        %v2583 = vpop.permute.xlu0 %2582
        %2584 = vrot.lane.b32.xlu0 %v2574, 66
        %v2585 = vpop.permute.xlu0 %2584
        %2586 = vrot.lane.b32.xlu0 %v2575, 66
        %v2587 = vpop.permute.xlu0 %2586
        %v2588 = vsel %vm780, %v2581, %v2583
        %v2589 = vsel %vm780, %v2583, %v2585
        %v2590 = vsel %vm780, %v2585, %v2587
        %2594 = vst [vmem:[#allocation2 + $0x198] sm:$0xff] %v2588
        %2595 = vst [vmem:[#allocation2 + $0x1a0] sm:$0xff] %v2589
        %2596 = vst [vmem:[#allocation2 + $0x1a8] sm:$0xff] %v2590
        %v2597 = vld [vmem:[%s2165] sm:$0xff]
        %v2598 = vld [vmem:[%s2165 + $0x8] sm:$0xff]
        %v2599 = vld [vmem:[%s2165 + $0x10] sm:$0xff]
        %v2600 = vld [vmem:[%s2165 + $0x18] sm:$0xff]
        %2605 = vrot.lane.b32.xlu0 %v2597, 65
        %v2606 = vpop.permute.xlu0 %2605
        %2607 = vrot.lane.b32.xlu0 %v2598, 65
        %v2608 = vpop.permute.xlu0 %2607
        %2609 = vrot.lane.b32.xlu0 %v2599, 65
        %v2610 = vpop.permute.xlu0 %2609
        %2611 = vrot.lane.b32.xlu0 %v2600, 65
        %v2612 = vpop.permute.xlu0 %2611
        %v2613 = vsel %vm806, %v2606, %v2608
        %v2614 = vsel %vm806, %v2608, %v2610
        %v2615 = vsel %vm806, %v2610, %v2612
        %2619 = vst [vmem:[#allocation2 + $0x1b0] sm:$0xff] %v2613
        %2620 = vst [vmem:[#allocation2 + $0x1b8] sm:$0xff] %v2614
        %2621 = vst [vmem:[#allocation2 + $0x1c0] sm:$0xff] %v2615
        %v2622 = vld [vmem:[%s2165] sm:$0xff]
        %v2623 = vld [vmem:[%s2165 + $0x8] sm:$0xff]
        %v2624 = vld [vmem:[%s2165 + $0x10] sm:$0xff]
        %v2625 = vld [vmem:[%s2165 + $0x18] sm:$0xff]
        %2630 = vrot.lane.b32.xlu0 %v2622, 64
        %v2631 = vpop.permute.xlu0 %2630
        %2632 = vrot.lane.b32.xlu0 %v2623, 64
        %v2633 = vpop.permute.xlu0 %2632
        %2634 = vrot.lane.b32.xlu0 %v2624, 64
        %v2635 = vpop.permute.xlu0 %2634
        %2636 = vrot.lane.b32.xlu0 %v2625, 64
        %v2637 = vpop.permute.xlu0 %2636
        %v2638 = vsel %vm832, %v2631, %v2633
        %v2639 = vsel %vm832, %v2633, %v2635
        %v2640 = vsel %vm832, %v2635, %v2637
        %2644 = vst [vmem:[#allocation2 + $0x1c8] sm:$0xff] %v2638
        %2645 = vst [vmem:[#allocation2 + $0x1d0] sm:$0xff] %v2639
        %2646 = vst [vmem:[#allocation2 + $0x1d8] sm:$0xff] %v2640
        %v2647 = vld [vmem:[%s2165] sm:$0xff]
        %v2648 = vld [vmem:[%s2165 + $0x8] sm:$0xff]
        %v2649 = vld [vmem:[%s2165 + $0x10] sm:$0xff]
        %v2650 = vld [vmem:[%s2165 + $0x18] sm:$0xff]
        %2655 = vrot.lane.b32.xlu0 %v2647, 48
        %v2656 = vpop.permute.xlu0 %2655
        %2657 = vrot.lane.b32.xlu0 %v2648, 48
        %v2658 = vpop.permute.xlu0 %2657
        %2659 = vrot.lane.b32.xlu0 %v2649, 48
        %v2660 = vpop.permute.xlu0 %2659
        %2661 = vrot.lane.b32.xlu0 %v2650, 48
        %v2662 = vpop.permute.xlu0 %2661
        %v2663 = vsel %vm858, %v2656, %v2658
        %v2664 = vsel %vm858, %v2658, %v2660
        %v2665 = vsel %vm858, %v2660, %v2662
        %2669 = vst [vmem:[#allocation2 + $0x1e0] sm:$0xff] %v2663
        %2670 = vst [vmem:[#allocation2 + $0x1e8] sm:$0xff] %v2664
        %2671 = vst [vmem:[#allocation2 + $0x1f0] sm:$0xff] %v2665
        %v2672 = vld [vmem:[%s2165] sm:$0xff]
        %v2673 = vld [vmem:[%s2165 + $0x8] sm:$0xff]
        %v2674 = vld [vmem:[%s2165 + $0x10] sm:$0xff]
        %v2675 = vld [vmem:[%s2165 + $0x18] sm:$0xff]
        %2680 = vrot.lane.b32.xlu0 %v2672, 47
        %v2681 = vpop.permute.xlu0 %2680
        %2682 = vrot.lane.b32.xlu0 %v2673, 47
        %v2683 = vpop.permute.xlu0 %2682
        %2684 = vrot.lane.b32.xlu0 %v2674, 47
        %v2685 = vpop.permute.xlu0 %2684
        %2686 = vrot.lane.b32.xlu0 %v2675, 47
        %v2687 = vpop.permute.xlu0 %2686
        %v2688 = vsel %vm884, %v2681, %v2683
        %v2689 = vsel %vm884, %v2683, %v2685
        %v2690 = vsel %vm884, %v2685, %v2687
        %2694 = vst [vmem:[#allocation2 + $0x1f8] sm:$0xff] %v2688
        %2695 = vst [vmem:[#allocation2 + $0x200] sm:$0xff] %v2689
        %2696 = vst [vmem:[#allocation2 + $0x208] sm:$0xff] %v2690
        %v2697 = vld [vmem:[%s2165] sm:$0xff]
        %v2698 = vld [vmem:[%s2165 + $0x8] sm:$0xff]
        %v2699 = vld [vmem:[%s2165 + $0x10] sm:$0xff]
        %v2700 = vld [vmem:[%s2165 + $0x18] sm:$0xff]
        %2705 = vrot.lane.b32.xlu0 %v2697, 46
        %v2706 = vpop.permute.xlu0 %2705
        %2707 = vrot.lane.b32.xlu0 %v2698, 46
        %v2708 = vpop.permute.xlu0 %2707
        %2709 = vrot.lane.b32.xlu0 %v2699, 46
        %v2710 = vpop.permute.xlu0 %2709
        %2711 = vrot.lane.b32.xlu0 %v2700, 46
        %v2712 = vpop.permute.xlu0 %2711
        %v2713 = vsel %vm910, %v2706, %v2708
        %v2714 = vsel %vm910, %v2708, %v2710
        %v2715 = vsel %vm910, %v2710, %v2712
        %2719 = vst [vmem:[#allocation2 + $0x210] sm:$0xff] %v2713
        %2720 = vst [vmem:[#allocation2 + $0x218] sm:$0xff] %v2714
        %2721 = vst [vmem:[#allocation2 + $0x220] sm:$0xff] %v2715
        %v2722 = vld [vmem:[%s2165] sm:$0xff]
        %v2723 = vld [vmem:[%s2165 + $0x8] sm:$0xff]
        %v2724 = vld [vmem:[%s2165 + $0x10] sm:$0xff]
        %v2725 = vld [vmem:[%s2165 + $0x18] sm:$0xff]
        %2730 = vrot.lane.b32.xlu0 %v2722, 45
        %v2731 = vpop.permute.xlu0 %2730
        %2732 = vrot.lane.b32.xlu0 %v2723, 45
        %v2733 = vpop.permute.xlu0 %2732
        %2734 = vrot.lane.b32.xlu0 %v2724, 45
        %v2735 = vpop.permute.xlu0 %2734
        %2736 = vrot.lane.b32.xlu0 %v2725, 45
        %v2737 = vpop.permute.xlu0 %2736
        %v2738 = vsel %vm936, %v2731, %v2733
        %v2739 = vsel %vm936, %v2733, %v2735
        %v2740 = vsel %vm936, %v2735, %v2737
        %2744 = vst [vmem:[#allocation2 + $0x228] sm:$0xff] %v2738
        %2745 = vst [vmem:[#allocation2 + $0x230] sm:$0xff] %v2739
        %2746 = vst [vmem:[#allocation2 + $0x238] sm:$0xff] %v2740
        %v2747 = vld [vmem:[%s2165] sm:$0xff]
        %v2748 = vld [vmem:[%s2165 + $0x8] sm:$0xff]
        %v2749 = vld [vmem:[%s2165 + $0x10] sm:$0xff]
        %v2750 = vld [vmem:[%s2165 + $0x18] sm:$0xff]
        %2755 = vrot.lane.b32.xlu0 %v2747, 44
        %v2756 = vpop.permute.xlu0 %2755
        %2757 = vrot.lane.b32.xlu0 %v2748, 44
        %v2758 = vpop.permute.xlu0 %2757
        %2759 = vrot.lane.b32.xlu0 %v2749, 44
        %v2760 = vpop.permute.xlu0 %2759
        %2761 = vrot.lane.b32.xlu0 %v2750, 44
        %v2762 = vpop.permute.xlu0 %2761
        %v2763 = vsel %vm962, %v2756, %v2758
        %v2764 = vsel %vm962, %v2758, %v2760
        %v2765 = vsel %vm962, %v2760, %v2762
        %2769 = vst [vmem:[#allocation2 + $0x240] sm:$0xff] %v2763
        %2770 = vst [vmem:[#allocation2 + $0x248] sm:$0xff] %v2764
        %2771 = vst [vmem:[#allocation2 + $0x250] sm:$0xff] %v2765
        %s2772 = scalar_lea.vmem %s1, 32
        %v2773 = vld [vmem:[%s2772] sm:$0xff]
        %v2774 = vld [vmem:[%s2772 + $0x8] sm:$0xff]
        %v2775 = vld [vmem:[%s2772 + $0x10] sm:$0xff]
        %v2776 = vld [vmem:[%s2772 + $0x18] sm:$0xff]
        %v2777 = vld [vmem:[#allocation2] sm:$0xff]
        %v2778 = vld [vmem:[#allocation2 + $0x8] sm:$0xff]
        %v2779 = vld [vmem:[#allocation2 + $0x10] sm:$0xff]
        %v2780 = vld [vmem:[#allocation2 + $0x18] sm:$0xff]
        %v2781 = vld [vmem:[#allocation2 + $0x20] sm:$0xff]
        %v2782 = vld [vmem:[#allocation2 + $0x28] sm:$0xff]
        %v2783 = vld [vmem:[#allocation2 + $0x30] sm:$0xff]
        %v2784 = vld [vmem:[#allocation2 + $0x38] sm:$0xff]
        %v2785 = vld [vmem:[#allocation2 + $0x40] sm:$0xff]
        %v2786 = vld [vmem:[#allocation2 + $0x48] sm:$0xff]
        %v2787 = vld [vmem:[#allocation2 + $0x50] sm:$0xff]
        %v2788 = vld [vmem:[#allocation2 + $0x58] sm:$0xff]
        %v2789 = vld [vmem:[#allocation2 + $0x60] sm:$0xff]
        %v2790 = vld [vmem:[#allocation2 + $0x68] sm:$0xff]
        %v2791 = vld [vmem:[#allocation2 + $0x70] sm:$0xff]
        %v2792 = vld [vmem:[#allocation2 + $0x78] sm:$0xff]
        %v2793 = vld [vmem:[#allocation2 + $0x80] sm:$0xff]
        %v2794 = vld [vmem:[#allocation2 + $0x88] sm:$0xff]
        %v2795 = vld [vmem:[#allocation2 + $0x90] sm:$0xff]
        %v2796 = vld [vmem:[#allocation2 + $0x98] sm:$0xff]
        %v2797 = vld [vmem:[#allocation2 + $0xa0] sm:$0xff]
        %v2798 = vld [vmem:[#allocation2 + $0xa8] sm:$0xff]
        %v2799 = vld [vmem:[#allocation2 + $0xb0] sm:$0xff]
        %v2800 = vld [vmem:[#allocation2 + $0xb8] sm:$0xff]
        %v2801 = vld [vmem:[#allocation2 + $0xc0] sm:$0xff]
        %v2802 = vld [vmem:[#allocation2 + $0xc8] sm:$0xff]
        %v2803 = vld [vmem:[#allocation2 + $0xd0] sm:$0xff]
        %v2804 = vld [vmem:[#allocation2 + $0xd8] sm:$0xff]
        %v2805 = vld [vmem:[#allocation2 + $0xe0] sm:$0xff]
        %v2806 = vld [vmem:[#allocation2 + $0xe8] sm:$0xff]
        %v2807 = vld [vmem:[#allocation2 + $0xf0] sm:$0xff]
        %v2808 = vld [vmem:[#allocation2 + $0xf8] sm:$0xff]
        %v2809 = vld [vmem:[#allocation2 + $0x100] sm:$0xff]
        %v2810 = vld [vmem:[#allocation2 + $0x108] sm:$0xff]
        %v2811 = vld [vmem:[#allocation2 + $0x110] sm:$0xff]
        %v2812 = vld [vmem:[#allocation2 + $0x118] sm:$0xff]
        %v2813 = vld [vmem:[#allocation2 + $0x120] sm:$0xff]
        %v2814 = vld [vmem:[#allocation2 + $0x128] sm:$0xff]
        %v2815 = vld [vmem:[#allocation2 + $0x130] sm:$0xff]
        %v2816 = vld [vmem:[#allocation2 + $0x138] sm:$0xff]
        %v2817 = vld [vmem:[#allocation2 + $0x140] sm:$0xff]
        %v2818 = vld [vmem:[#allocation2 + $0x148] sm:$0xff]
        %v2819 = vld [vmem:[#allocation2 + $0x150] sm:$0xff]
        %v2820 = vld [vmem:[#allocation2 + $0x158] sm:$0xff]
        %v2821 = vld [vmem:[#allocation2 + $0x160] sm:$0xff]
        %v2822 = vld [vmem:[#allocation2 + $0x168] sm:$0xff]
        %v2823 = vld [vmem:[#allocation2 + $0x170] sm:$0xff]
        %v2824 = vld [vmem:[#allocation2 + $0x178] sm:$0xff]
        %v2825 = vld [vmem:[#allocation2 + $0x180] sm:$0xff]
        %v2826 = vld [vmem:[#allocation2 + $0x188] sm:$0xff]
        %v2827 = vld [vmem:[#allocation2 + $0x190] sm:$0xff]
        %v2828 = vld [vmem:[#allocation2 + $0x198] sm:$0xff]
        %v2829 = vld [vmem:[#allocation2 + $0x1a0] sm:$0xff]
        %v2830 = vld [vmem:[#allocation2 + $0x1a8] sm:$0xff]
        %v2831 = vld [vmem:[#allocation2 + $0x1b0] sm:$0xff]
        %v2832 = vld [vmem:[#allocation2 + $0x1b8] sm:$0xff]
        %v2833 = vld [vmem:[#allocation2 + $0x1c0] sm:$0xff]
        %v2834 = vld [vmem:[#allocation2 + $0x1c8] sm:$0xff]
        %v2835 = vld [vmem:[#allocation2 + $0x1d0] sm:$0xff]
        %v2836 = vld [vmem:[#allocation2 + $0x1d8] sm:$0xff]
        %v2837 = vld [vmem:[#allocation2 + $0x1e0] sm:$0xff]
        %v2838 = vld [vmem:[#allocation2 + $0x1e8] sm:$0xff]
        %v2839 = vld [vmem:[#allocation2 + $0x1f0] sm:$0xff]
        %v2840 = vld [vmem:[#allocation2 + $0x1f8] sm:$0xff]
        %v2841 = vld [vmem:[#allocation2 + $0x200] sm:$0xff]
        %v2842 = vld [vmem:[#allocation2 + $0x208] sm:$0xff]
        %v2843 = vld [vmem:[#allocation2 + $0x210] sm:$0xff]
        %v2844 = vld [vmem:[#allocation2 + $0x218] sm:$0xff]
        %v2845 = vld [vmem:[#allocation2 + $0x220] sm:$0xff]
        %v2846 = vld [vmem:[#allocation2 + $0x228] sm:$0xff]
        %v2847 = vld [vmem:[#allocation2 + $0x230] sm:$0xff]
        %v2848 = vld [vmem:[#allocation2 + $0x238] sm:$0xff]
        %v2849 = vld [vmem:[#allocation2 + $0x240] sm:$0xff]
        %v2850 = vld [vmem:[#allocation2 + $0x248] sm:$0xff]
        %v2851 = vld [vmem:[#allocation2 + $0x250] sm:$0xff]
        %v2852 = vpack.c.bf16 %v2780, %v2777
        %v2853 = vpack.c.bf16 %v2781, %v2778
        %v2854 = vpack.c.bf16 %v2782, %v2779
        %v2855 = vpack.c.bf16 %v2786, %v2783
        %v2856 = vpack.c.bf16 %v2787, %v2784
        %v2857 = vpack.c.bf16 %v2788, %v2785
        %v2858 = vpack.c.bf16 %v2792, %v2789
        %v2859 = vpack.c.bf16 %v2793, %v2790
        %v2860 = vpack.c.bf16 %v2794, %v2791
        %v2861 = vpack.c.bf16 %v2798, %v2795
        %v2862 = vpack.c.bf16 %v2799, %v2796
        %v2863 = vpack.c.bf16 %v2800, %v2797
        %v2864 = vpack.c.bf16 %v2804, %v2801
        %v2865 = vpack.c.bf16 %v2805, %v2802
        %v2866 = vpack.c.bf16 %v2806, %v2803
        %v2867 = vpack.c.bf16 %v2810, %v2807
        %v2868 = vpack.c.bf16 %v2811, %v2808
        %v2869 = vpack.c.bf16 %v2812, %v2809
        %v2870 = vpack.c.bf16 %v2816, %v2813
        %v2871 = vpack.c.bf16 %v2817, %v2814
        %v2872 = vpack.c.bf16 %v2818, %v2815
        %v2873 = vpack.c.bf16 %v2822, %v2819
        %v2874 = vpack.c.bf16 %v2823, %v2820
        %v2875 = vpack.c.bf16 %v2824, %v2821
        %v2876 = vpack.c.bf16 %v2828, %v2825
        %v2877 = vpack.c.bf16 %v2829, %v2826
        %v2878 = vpack.c.bf16 %v2830, %v2827
        %v2879 = vpack.c.bf16 %v2834, %v2831
        %v2880 = vpack.c.bf16 %v2835, %v2832
        %v2881 = vpack.c.bf16 %v2836, %v2833
        %v2882 = vpack.c.bf16 %v2840, %v2837
        %v2883 = vpack.c.bf16 %v2841, %v2838
        %v2884 = vpack.c.bf16 %v2842, %v2839
        %v2885 = vpack.c.bf16 %v2846, %v2843
        %v2886 = vpack.c.bf16 %v2847, %v2844
        %v2887 = vpack.c.bf16 %v2848, %v2845
        %v2888 = vpack.c.bf16 %v2849, %v2849
        %v2889 = vpack.c.bf16 %v2850, %v2850
        %v2890 = vpack.c.bf16 %v2851, %v2851
        %s2891 = scalar_lea.vmem %s2, 32
        %v2892 = vld [vmem:[%s2891] sm:$0xff]
        %v2893 = vld [vmem:[%s2891 + $0x8] sm:$0xff]
        %v2894 = vld [vmem:[%s2891 + $0x10] sm:$0xff]
        %v2895 = vld [vmem:[%s2891 + $0x18] sm:$0xff]
        %2897 = vset.pattern.permute.xlu0 0
        %2898 = vperm.xlu0 %2897, %v2892
        %v2899 = vpop.permute.xlu0 %2898
        %2902 = vset.pattern.permute.xlu0 0
        %2903 = vperm.xlu0 %2902, %v2893
        %v2904 = vpop.permute.xlu0 %2903
        %2907 = vset.pattern.permute.xlu0 0
        %2908 = vperm.xlu0 %2907, %v2894
        %v2909 = vpop.permute.xlu0 %2908
        %2912 = vset.pattern.permute.xlu0 0
        %2913 = vperm.xlu0 %2912, %v2895
        %v2914 = vpop.permute.xlu0 %2913
        %v2920 = vunpack.c.l.b16 %v2773
        %v2921 = vunpack.c.h.b16 %v2773
        %v2922 = vunpack.c.l.b16 %v2774
        %v2923 = vunpack.c.h.b16 %v2774
        %v2924 = vunpack.c.l.b16 %v2775
        %v2925 = vunpack.c.h.b16 %v2775
        %v2926 = vunpack.c.l.b16 %v2776
        %v2927 = vunpack.c.h.b16 %v2776
        %v2928 = vpack.c.b16 %v2922, %v2920
        %v2929 = vpack.c.b16 %v2923, %v2921
        %v2930 = vpack.c.b16 %v2926, %v2924
        %v2931 = vpack.c.b16 %v2927, %v2925
        %v2935 = vsel %vm1132, %v2929, 0
        %v2938 = vsel %vm1132, %v2931, 0
        %v2941 = vsel %vm1139, %v2888, 0
        %v2944 = vsel %vm1139, %v2889, 0
        %v2947 = vsel %vm1139, %v2890, 0
        %2949 = vmatprep.subr.bf16.mxu0 %v2874
        %2950 = vmatpush1.bf16.msra.mxu0 %v2873
        %2951 = vmatprep.subr.bf16.mxu0 %v2871
        %2952 = vmatpush1.bf16.msra.mxu0 %v2870
        %2953 = vmatprep.subr.bf16.mxu0 %v2868
        %2954 = vmatpush1.bf16.msra.mxu0 %v2867
        %2955 = vmatprep.subr.bf16.mxu0 %v2865
        %2956 = vmatpush1.bf16.msra.mxu0 %v2864
        %2957 = vmatprep.subr.bf16.mxu0 %v2862
        %2958 = vmatpush1.bf16.msra.mxu0 %v2861
        %2959 = vmatprep.subr.bf16.mxu0 %v2859
        %2960 = vmatpush1.bf16.msra.mxu0 %v2858
        %2961 = vmatprep.subr.bf16.mxu0 %v2856
        %2962 = vmatpush1.bf16.msra.mxu0 %v2855
        %2963 = vmatprep.subr.bf16.mxu0 %v2853
        %2964 = vmatpush1.bf16.msra.mxu0 %v2852
        %2965 = vmatprep.subr.bf16.mxu0 0
        %2966 = vmatpush2.bf16.msra.mxu0 0
        %2967 = vmatprep.subr.bf16.mxu0 0
        %2968 = vmatpush2.bf16.msra.mxu0 0
        %2969 = vmatprep.subr.bf16.mxu0 0
        %2970 = vmatpush2.bf16.msra.mxu0 0
        %2971 = vmatprep.subr.bf16.mxu0 %v2944
        %2972 = vmatpush2.bf16.msra.mxu0 %v2941
        %2973 = vmatprep.subr.bf16.mxu0 %v2886
        %2974 = vmatpush2.bf16.msra.mxu0 %v2885
        %2975 = vmatprep.subr.bf16.mxu0 %v2883
        %2976 = vmatpush2.bf16.msra.mxu0 %v2882
        %2977 = vmatprep.subr.bf16.mxu0 %v2880
        %2978 = vmatpush2.bf16.msra.mxu0 %v2879
        %2979 = vmatprep.subr.bf16.mxu0 %v2877
        %2980 = vmatpush2.bf16.msra.mxu0 %v2876
        %2981 = vmatprep.mubr.bf16.mxu0 %v2935
        %2982 = vmatmul.mubr.bf16.gmra.mxu0 %v2928
        %v2983 = vpop.f32.mrf.mxu0
        %v2984 = vadd.f32 %v2899, %v2983
        %v2985 = vpop.f32.mrf.mxu0
        %v2986 = vadd.f32 %v2899, %v2985
        %v2987 = vpop.f32.mrf.mxu0
        %v2988 = vadd.f32 %v2904, %v2987
        %v2989 = vpop.f32.mrf.mxu0
        %v2990 = vadd.f32 %v2904, %v2989
        %2991 = vmatprep.mubr.bf16.mxu0 %v2938
        %2992 = vmatmul.mubr.bf16.gmra.mxu0 %v2930
        %v2993 = vpop.f32.mrf.mxu0
        %v2994 = vadd.f32 %v2909, %v2993
        %v2995 = vpop.f32.mrf.mxu0
        %v2996 = vadd.f32 %v2909, %v2995
        %v2997 = vpop.f32.mrf.mxu0
        %v2998 = vadd.f32 %v2914, %v2997
        %v2999 = vpop.f32.mrf.mxu0
        %v3000 = vadd.f32 %v2914, %v2999
        %3001 = vdwg.mxu0
        %3002 = vmatprep.subr.bf16.mxu0 0
        %3003 = vmatpush1.bf16.msra.mxu0 %v2875
        %3004 = vmatprep.subr.bf16.mxu0 0
        %3005 = vmatpush1.bf16.msra.mxu0 %v2872
        %3006 = vmatprep.subr.bf16.mxu0 0
        %3007 = vmatpush1.bf16.msra.mxu0 %v2869
        %3008 = vmatprep.subr.bf16.mxu0 0
        %3009 = vmatpush1.bf16.msra.mxu0 %v2866
        %3010 = vmatprep.subr.bf16.mxu0 0
        %3011 = vmatpush1.bf16.msra.mxu0 %v2863
        %3012 = vmatprep.subr.bf16.mxu0 0
        %3013 = vmatpush1.bf16.msra.mxu0 %v2860
        %3014 = vmatprep.subr.bf16.mxu0 0
        %3015 = vmatpush1.bf16.msra.mxu0 %v2857
        %3016 = vmatprep.subr.bf16.mxu0 0
        %3017 = vmatpush1.bf16.msra.mxu0 %v2854
        %3018 = vmatprep.subr.bf16.mxu0 0
        %3019 = vmatpush2.bf16.msra.mxu0 0
        %3020 = vmatprep.subr.bf16.mxu0 0
        %3021 = vmatpush2.bf16.msra.mxu0 0
        %3022 = vmatprep.subr.bf16.mxu0 0
        %3023 = vmatpush2.bf16.msra.mxu0 0
        %3024 = vmatprep.subr.bf16.mxu0 0
        %3025 = vmatpush2.bf16.msra.mxu0 %v2947
        %3026 = vmatprep.subr.bf16.mxu0 0
        %3027 = vmatpush2.bf16.msra.mxu0 %v2887
        %3028 = vmatprep.subr.bf16.mxu0 0
        %3029 = vmatpush2.bf16.msra.mxu0 %v2884
        %3030 = vmatprep.subr.bf16.mxu0 0
        %3031 = vmatpush2.bf16.msra.mxu0 %v2881
        %3032 = vmatprep.subr.bf16.mxu0 0
        %3033 = vmatpush2.bf16.msra.mxu0 %v2878
        %3034 = vmatprep.mubr.bf16.mxu0 %v2935
        %3035 = vmatmul.mubr.bf16.gmra.mxu0 %v2928
        %v3036 = vpop.f32.mrf.mxu0
        %v3037 = vadd.f32 %v2899, %v3036
        %v3038 = vpop.f32.mrf.mxu0
        %v3039 = vpop.f32.mrf.mxu0
        %v3040 = vadd.f32 %v2904, %v3039
        %v3041 = vpop.f32.mrf.mxu0
        %3042 = vmatprep.mubr.bf16.mxu0 %v2938
        %3043 = vmatmul.mubr.bf16.gmra.mxu0 %v2930
        %v3044 = vpop.f32.mrf.mxu0
        %v3045 = vadd.f32 %v2909, %v3044
        %v3046 = vpop.f32.mrf.mxu0
        %v3047 = vpop.f32.mrf.mxu0
        %v3048 = vadd.f32 %v2914, %v3047
        %v3049 = vpop.f32.mrf.mxu0
        %3050 = vdwg.mxu0
        %v3051 = vmax.f32 %v2984, 0.0
        %v3052 = vmax.f32 %v2986, 0.0
        %v3053 = vmax.f32 %v3037, 0.0
        %v3054 = vmax.f32 %v2988, 0.0
        %v3055 = vmax.f32 %v2990, 0.0
        %v3056 = vmax.f32 %v3040, 0.0
        %v3057 = vmax.f32 %v2994, 0.0
        %v3058 = vmax.f32 %v2996, 0.0
        %v3059 = vmax.f32 %v3045, 0.0
        %v3060 = vmul.f32 %v3051, %v1264
        %v3061 = vmul.f32 %v3052, %v1268
        %v3062 = vmul.f32 %v3053, %v1272
        %v3063 = vmul.f32 %v3054, %v1264
        %v3064 = vmul.f32 %v3055, %v1268
        %v3065 = vmul.f32 %v3056, %v1272
        %v3066 = vmul.f32 %v3057, %v1264
        %v3067 = vmul.f32 %v3058, %v1268
        %v3068 = vmul.f32 %v3059, %v1272
        %3069 = vst [vmem:[#allocation3] sm:$0xff] 0.0
        %3070 = vst [vmem:[#allocation3 + $0x8] sm:$0xff] 0.0
        %3071 = vst [vmem:[#allocation3 + $0x10] sm:$0xff] 0.0
        %3072 = vst [vmem:[#allocation3 + $0x18] sm:$0xff] 0.0
        %3073 = vst [vmem:[#allocation3 + $0x20] sm:$0xff] 0.0
        %3074 = vst [vmem:[#allocation3 + $0x28] sm:$0xff] 0.0
        %3075 = vst [vmem:[#allocation3 + $0x30] sm:$0xff] 0.0
        %3076 = vst [vmem:[#allocation3 + $0x38] sm:$0xff] 0.0
        %3077 = vst [vmem:[#allocation3 + $0x40] sm:$0xff] 0.0
        %3078 = vst [vmem:[#allocation3 + $0x48] sm:$0xff] 0.0
        %3079 = vst [vmem:[#allocation3 + $0x50] sm:$0xff] 0.0
        %3080 = vst [vmem:[#allocation3 + $0x58] sm:$0xff] 0.0
        %3081 = vst [vmem:[#allocation3 + $0x60] sm:$0xff] 0.0
        %3082 = vst [vmem:[#allocation3 + $0x68] sm:$0xff] 0.0
        %3083 = vst [vmem:[#allocation3 + $0x70] sm:$0xff] 0.0
        %3084 = vst [vmem:[#allocation3 + $0x8] sm:$0xff] %v3060
        %3085 = vst [vmem:[#allocation3 + $0x10] sm:$0xff] %v3061
        %3086 = vst [vmem:[#allocation3 + $0x18] sm:$0xff] %v3062
        %3087 = vst [vmem:[#allocation3 + $0x30] sm:$0xff] %v3063
        %3088 = vst [vmem:[#allocation3 + $0x38] sm:$0xff] %v3064
        %3089 = vst [vmem:[#allocation3 + $0x40] sm:$0xff] %v3065
        %3090 = vst [vmem:[#allocation3 + $0x58] sm:$0xff] %v3066
        %3091 = vst [vmem:[#allocation3 + $0x60] sm:$0xff] %v3067
        %3092 = vst [vmem:[#allocation3 + $0x68] sm:$0xff] %v3068
        %v3093 = vld [vmem:[#allocation3] sm:$0xff]
        %v3094 = vld [vmem:[#allocation3 + $0x8] sm:$0xff]
        %v3095 = vld [vmem:[#allocation3 + $0x10] sm:$0xff]
        %v3096 = vld [vmem:[#allocation3 + $0x18] sm:$0xff]
        %v3097 = vld [vmem:[#allocation3 + $0x28] sm:$0xff]
        %v3098 = vld [vmem:[#allocation3 + $0x30] sm:$0xff]
        %v3099 = vld [vmem:[#allocation3 + $0x38] sm:$0xff]
        %v3100 = vld [vmem:[#allocation3 + $0x40] sm:$0xff]
        %v3101 = vld [vmem:[#allocation3 + $0x50] sm:$0xff]
        %v3102 = vld [vmem:[#allocation3 + $0x58] sm:$0xff]
        %v3103 = vld [vmem:[#allocation3 + $0x60] sm:$0xff]
        %v3104 = vld [vmem:[#allocation3 + $0x68] sm:$0xff]
        %3117 = vrot.lane.b32.xlu0 %v3093, 21
        %v3118 = vpop.permute.xlu0 %3117
        %3119 = vrot.lane.b32.xlu0 %v3094, 21
        %v3120 = vpop.permute.xlu0 %3119
        %3121 = vrot.lane.b32.xlu0 %v3095, 21
        %v3122 = vpop.permute.xlu0 %3121
        %3123 = vrot.lane.b32.xlu0 %v3096, 21
        %v3124 = vpop.permute.xlu0 %3123
        %3125 = vrot.lane.b32.xlu0 %v3097, 21
        %v3126 = vpop.permute.xlu0 %3125
        %3127 = vrot.lane.b32.xlu0 %v3098, 21
        %v3128 = vpop.permute.xlu0 %3127
        %3129 = vrot.lane.b32.xlu0 %v3099, 21
        %v3130 = vpop.permute.xlu0 %3129
        %3131 = vrot.lane.b32.xlu0 %v3100, 21
        %v3132 = vpop.permute.xlu0 %3131
        %3133 = vrot.lane.b32.xlu0 %v3101, 21
        %v3134 = vpop.permute.xlu0 %3133
        %3135 = vrot.lane.b32.xlu0 %v3102, 21
        %v3136 = vpop.permute.xlu0 %3135
        %3137 = vrot.lane.b32.xlu0 %v3103, 21
        %v3138 = vpop.permute.xlu0 %3137
        %3139 = vrot.lane.b32.xlu0 %v3104, 21
        %v3140 = vpop.permute.xlu0 %3139
        %v3141 = vsel %vm1357, %v3118, %v3120
        %v3142 = vsel %vm1357, %v3120, %v3122
        %v3143 = vsel %vm1357, %v3122, %v3124
        %v3144 = vsel %vm1357, %v3126, %v3128
        %v3145 = vsel %vm1357, %v3128, %v3130
        %v3146 = vsel %vm1357, %v3130, %v3132
        %v3147 = vsel %vm1357, %v3134, %v3136
        %v3148 = vsel %vm1357, %v3136, %v3138
        %v3149 = vsel %vm1357, %v3138, %v3140
        %3159 = vst [vmem:[#allocation4] sm:$0xff] %v3141
        %3160 = vst [vmem:[#allocation4 + $0x8] sm:$0xff] %v3142
        %3161 = vst [vmem:[#allocation4 + $0x10] sm:$0xff] %v3143
        %3162 = vst [vmem:[#allocation4 + $0x18] sm:$0xff] %v3144
        %3163 = vst [vmem:[#allocation4 + $0x20] sm:$0xff] %v3145
        %3164 = vst [vmem:[#allocation4 + $0x28] sm:$0xff] %v3146
        %3165 = vst [vmem:[#allocation4 + $0x30] sm:$0xff] %v3147
        %3166 = vst [vmem:[#allocation4 + $0x38] sm:$0xff] %v3148
        %3167 = vst [vmem:[#allocation4 + $0x40] sm:$0xff] %v3149
        %v3168 = vld [vmem:[#allocation3] sm:$0xff]
        %v3169 = vld [vmem:[#allocation3 + $0x8] sm:$0xff]
        %v3170 = vld [vmem:[#allocation3 + $0x10] sm:$0xff]
        %v3171 = vld [vmem:[#allocation3 + $0x18] sm:$0xff]
        %v3172 = vld [vmem:[#allocation3 + $0x28] sm:$0xff]
        %v3173 = vld [vmem:[#allocation3 + $0x30] sm:$0xff]
        %v3174 = vld [vmem:[#allocation3 + $0x38] sm:$0xff]
        %v3175 = vld [vmem:[#allocation3 + $0x40] sm:$0xff]
        %v3176 = vld [vmem:[#allocation3 + $0x50] sm:$0xff]
        %v3177 = vld [vmem:[#allocation3 + $0x58] sm:$0xff]
        %v3178 = vld [vmem:[#allocation3 + $0x60] sm:$0xff]
        %v3179 = vld [vmem:[#allocation3 + $0x68] sm:$0xff]
        %3192 = vrot.lane.b32.xlu0 %v3168, 20
        %v3193 = vpop.permute.xlu0 %3192
        %3194 = vrot.lane.b32.xlu0 %v3169, 20
        %v3195 = vpop.permute.xlu0 %3194
        %3196 = vrot.lane.b32.xlu0 %v3170, 20
        %v3197 = vpop.permute.xlu0 %3196
        %3198 = vrot.lane.b32.xlu0 %v3171, 20
        %v3199 = vpop.permute.xlu0 %3198
        %3200 = vrot.lane.b32.xlu0 %v3172, 20
        %v3201 = vpop.permute.xlu0 %3200
        %3202 = vrot.lane.b32.xlu0 %v3173, 20
        %v3203 = vpop.permute.xlu0 %3202
        %3204 = vrot.lane.b32.xlu0 %v3174, 20
        %v3205 = vpop.permute.xlu0 %3204
        %3206 = vrot.lane.b32.xlu0 %v3175, 20
        %v3207 = vpop.permute.xlu0 %3206
        %3208 = vrot.lane.b32.xlu0 %v3176, 20
        %v3209 = vpop.permute.xlu0 %3208
        %3210 = vrot.lane.b32.xlu0 %v3177, 20
        %v3211 = vpop.permute.xlu0 %3210
        %3212 = vrot.lane.b32.xlu0 %v3178, 20
        %v3213 = vpop.permute.xlu0 %3212
        %3214 = vrot.lane.b32.xlu0 %v3179, 20
        %v3215 = vpop.permute.xlu0 %3214
        %v3216 = vsel %vm1433, %v3193, %v3195
        %v3217 = vsel %vm1433, %v3195, %v3197
        %v3218 = vsel %vm1433, %v3197, %v3199
        %v3219 = vsel %vm1433, %v3201, %v3203
        %v3220 = vsel %vm1433, %v3203, %v3205
        %v3221 = vsel %vm1433, %v3205, %v3207
        %v3222 = vsel %vm1433, %v3209, %v3211
        %v3223 = vsel %vm1433, %v3211, %v3213
        %v3224 = vsel %vm1433, %v3213, %v3215
        %3234 = vst [vmem:[#allocation4 + $0x48] sm:$0xff] %v3216
        %3235 = vst [vmem:[#allocation4 + $0x50] sm:$0xff] %v3217
        %3236 = vst [vmem:[#allocation4 + $0x58] sm:$0xff] %v3218
        %3237 = vst [vmem:[#allocation4 + $0x60] sm:$0xff] %v3219
        %3238 = vst [vmem:[#allocation4 + $0x68] sm:$0xff] %v3220
        %3239 = vst [vmem:[#allocation4 + $0x70] sm:$0xff] %v3221
        %3240 = vst [vmem:[#allocation4 + $0x78] sm:$0xff] %v3222
        %3241 = vst [vmem:[#allocation4 + $0x80] sm:$0xff] %v3223
        %3242 = vst [vmem:[#allocation4 + $0x88] sm:$0xff] %v3224
        %v3243 = vld [vmem:[#allocation3] sm:$0xff]
        %v3244 = vld [vmem:[#allocation3 + $0x8] sm:$0xff]
        %v3245 = vld [vmem:[#allocation3 + $0x10] sm:$0xff]
        %v3246 = vld [vmem:[#allocation3 + $0x18] sm:$0xff]
        %v3247 = vld [vmem:[#allocation3 + $0x28] sm:$0xff]
        %v3248 = vld [vmem:[#allocation3 + $0x30] sm:$0xff]
        %v3249 = vld [vmem:[#allocation3 + $0x38] sm:$0xff]
        %v3250 = vld [vmem:[#allocation3 + $0x40] sm:$0xff]
        %v3251 = vld [vmem:[#allocation3 + $0x50] sm:$0xff]
        %v3252 = vld [vmem:[#allocation3 + $0x58] sm:$0xff]
        %v3253 = vld [vmem:[#allocation3 + $0x60] sm:$0xff]
        %v3254 = vld [vmem:[#allocation3 + $0x68] sm:$0xff]
        %3267 = vrot.lane.b32.xlu0 %v3243, 19
        %v3268 = vpop.permute.xlu0 %3267
        %3269 = vrot.lane.b32.xlu0 %v3244, 19
        %v3270 = vpop.permute.xlu0 %3269
        %3271 = vrot.lane.b32.xlu0 %v3245, 19
        %v3272 = vpop.permute.xlu0 %3271
        %3273 = vrot.lane.b32.xlu0 %v3246, 19
        %v3274 = vpop.permute.xlu0 %3273
        %3275 = vrot.lane.b32.xlu0 %v3247, 19
        %v3276 = vpop.permute.xlu0 %3275
        %3277 = vrot.lane.b32.xlu0 %v3248, 19
        %v3278 = vpop.permute.xlu0 %3277
        %3279 = vrot.lane.b32.xlu0 %v3249, 19
        %v3280 = vpop.permute.xlu0 %3279
        %3281 = vrot.lane.b32.xlu0 %v3250, 19
        %v3282 = vpop.permute.xlu0 %3281
        %3283 = vrot.lane.b32.xlu0 %v3251, 19
        %v3284 = vpop.permute.xlu0 %3283
        %3285 = vrot.lane.b32.xlu0 %v3252, 19
        %v3286 = vpop.permute.xlu0 %3285
        %3287 = vrot.lane.b32.xlu0 %v3253, 19
        %v3288 = vpop.permute.xlu0 %3287
        %3289 = vrot.lane.b32.xlu0 %v3254, 19
        %v3290 = vpop.permute.xlu0 %3289
        %v3291 = vsel %vm1509, %v3268, %v3270
        %v3292 = vsel %vm1509, %v3270, %v3272
        %v3293 = vsel %vm1509, %v3272, %v3274
        %v3294 = vsel %vm1509, %v3276, %v3278
        %v3295 = vsel %vm1509, %v3278, %v3280
        %v3296 = vsel %vm1509, %v3280, %v3282
        %v3297 = vsel %vm1509, %v3284, %v3286
        %v3298 = vsel %vm1509, %v3286, %v3288
        %v3299 = vsel %vm1509, %v3288, %v3290
        %3309 = vst [vmem:[#allocation4 + $0x90] sm:$0xff] %v3291
        %3310 = vst [vmem:[#allocation4 + $0x98] sm:$0xff] %v3292
        %3311 = vst [vmem:[#allocation4 + $0xa0] sm:$0xff] %v3293
        %3312 = vst [vmem:[#allocation4 + $0xa8] sm:$0xff] %v3294
        %3313 = vst [vmem:[#allocation4 + $0xb0] sm:$0xff] %v3295
        %3314 = vst [vmem:[#allocation4 + $0xb8] sm:$0xff] %v3296
        %3315 = vst [vmem:[#allocation4 + $0xc0] sm:$0xff] %v3297
        %3316 = vst [vmem:[#allocation4 + $0xc8] sm:$0xff] %v3298
        %3317 = vst [vmem:[#allocation4 + $0xd0] sm:$0xff] %v3299
        %v3318 = vld [vmem:[#allocation3] sm:$0xff]
        %v3319 = vld [vmem:[#allocation3 + $0x8] sm:$0xff]
        %v3320 = vld [vmem:[#allocation3 + $0x10] sm:$0xff]
        %v3321 = vld [vmem:[#allocation3 + $0x18] sm:$0xff]
        %v3322 = vld [vmem:[#allocation3 + $0x28] sm:$0xff]
        %v3323 = vld [vmem:[#allocation3 + $0x30] sm:$0xff]
        %v3324 = vld [vmem:[#allocation3 + $0x38] sm:$0xff]
        %v3325 = vld [vmem:[#allocation3 + $0x40] sm:$0xff]
        %v3326 = vld [vmem:[#allocation3 + $0x50] sm:$0xff]
        %v3327 = vld [vmem:[#allocation3 + $0x58] sm:$0xff]
        %v3328 = vld [vmem:[#allocation3 + $0x60] sm:$0xff]
        %v3329 = vld [vmem:[#allocation3 + $0x68] sm:$0xff]
        %3342 = vrot.lane.b32.xlu0 %v3318, 1
        %v3343 = vpop.permute.xlu0 %3342
        %3344 = vrot.lane.b32.xlu0 %v3319, 1
        %v3345 = vpop.permute.xlu0 %3344
        %3346 = vrot.lane.b32.xlu0 %v3320, 1
        %v3347 = vpop.permute.xlu0 %3346
        %3348 = vrot.lane.b32.xlu0 %v3321, 1
        %v3349 = vpop.permute.xlu0 %3348
        %3350 = vrot.lane.b32.xlu0 %v3322, 1
        %v3351 = vpop.permute.xlu0 %3350
        %3352 = vrot.lane.b32.xlu0 %v3323, 1
        %v3353 = vpop.permute.xlu0 %3352
        %3354 = vrot.lane.b32.xlu0 %v3324, 1
        %v3355 = vpop.permute.xlu0 %3354
        %3356 = vrot.lane.b32.xlu0 %v3325, 1
        %v3357 = vpop.permute.xlu0 %3356
        %3358 = vrot.lane.b32.xlu0 %v3326, 1
        %v3359 = vpop.permute.xlu0 %3358
        %3360 = vrot.lane.b32.xlu0 %v3327, 1
        %v3361 = vpop.permute.xlu0 %3360
        %3362 = vrot.lane.b32.xlu0 %v3328, 1
        %v3363 = vpop.permute.xlu0 %3362
        %3364 = vrot.lane.b32.xlu0 %v3329, 1
        %v3365 = vpop.permute.xlu0 %3364
        %v3366 = vsel %vm1585, %v3343, %v3345
        %v3367 = vsel %vm1585, %v3345, %v3347
        %v3368 = vsel %vm1585, %v3347, %v3349
        %v3369 = vsel %vm1585, %v3351, %v3353
        %v3370 = vsel %vm1585, %v3353, %v3355
        %v3371 = vsel %vm1585, %v3355, %v3357
        %v3372 = vsel %vm1585, %v3359, %v3361
        %v3373 = vsel %vm1585, %v3361, %v3363
        %v3374 = vsel %vm1585, %v3363, %v3365
        %3384 = vst [vmem:[#allocation4 + $0xd8] sm:$0xff] %v3366
        %3385 = vst [vmem:[#allocation4 + $0xe0] sm:$0xff] %v3367
        %3386 = vst [vmem:[#allocation4 + $0xe8] sm:$0xff] %v3368
        %3387 = vst [vmem:[#allocation4 + $0xf0] sm:$0xff] %v3369
        %3388 = vst [vmem:[#allocation4 + $0xf8] sm:$0xff] %v3370
        %3389 = vst [vmem:[#allocation4 + $0x100] sm:$0xff] %v3371
        %3390 = vst [vmem:[#allocation4 + $0x108] sm:$0xff] %v3372
        %3391 = vst [vmem:[#allocation4 + $0x110] sm:$0xff] %v3373
        %3392 = vst [vmem:[#allocation4 + $0x118] sm:$0xff] %v3374
        %v3393 = vld [vmem:[#allocation3 + $0x8] sm:$0xff]
        %v3394 = vld [vmem:[#allocation3 + $0x10] sm:$0xff]
        %v3395 = vld [vmem:[#allocation3 + $0x18] sm:$0xff]
        %v3396 = vld [vmem:[#allocation3 + $0x30] sm:$0xff]
        %v3397 = vld [vmem:[#allocation3 + $0x38] sm:$0xff]
        %v3398 = vld [vmem:[#allocation3 + $0x40] sm:$0xff]
        %v3399 = vld [vmem:[#allocation3 + $0x58] sm:$0xff]
        %v3400 = vld [vmem:[#allocation3 + $0x60] sm:$0xff]
        %v3401 = vld [vmem:[#allocation3 + $0x68] sm:$0xff]
        %3402 = vst [vmem:[#allocation4 + $0x120] sm:$0xff] %v3393
        %3403 = vst [vmem:[#allocation4 + $0x128] sm:$0xff] %v3394
        %3404 = vst [vmem:[#allocation4 + $0x130] sm:$0xff] %v3395
        %3405 = vst [vmem:[#allocation4 + $0x138] sm:$0xff] %v3396
        %3406 = vst [vmem:[#allocation4 + $0x140] sm:$0xff] %v3397
        %3407 = vst [vmem:[#allocation4 + $0x148] sm:$0xff] %v3398
        %3408 = vst [vmem:[#allocation4 + $0x150] sm:$0xff] %v3399
        %3409 = vst [vmem:[#allocation4 + $0x158] sm:$0xff] %v3400
        %3410 = vst [vmem:[#allocation4 + $0x160] sm:$0xff] %v3401
        %v3411 = vld [vmem:[#allocation3 + $0x8] sm:$0xff]
        %v3412 = vld [vmem:[#allocation3 + $0x10] sm:$0xff]
        %v3413 = vld [vmem:[#allocation3 + $0x18] sm:$0xff]
        %v3414 = vld [vmem:[#allocation3 + $0x20] sm:$0xff]
        %v3415 = vld [vmem:[#allocation3 + $0x30] sm:$0xff]
        %v3416 = vld [vmem:[#allocation3 + $0x38] sm:$0xff]
        %v3417 = vld [vmem:[#allocation3 + $0x40] sm:$0xff]
        %v3418 = vld [vmem:[#allocation3 + $0x48] sm:$0xff]
        %v3419 = vld [vmem:[#allocation3 + $0x58] sm:$0xff]
        %v3420 = vld [vmem:[#allocation3 + $0x60] sm:$0xff]
        %v3421 = vld [vmem:[#allocation3 + $0x68] sm:$0xff]
        %v3422 = vld [vmem:[#allocation3 + $0x70] sm:$0xff]
        %3435 = vrot.lane.b32.xlu0 %v3411, 127
        %v3436 = vpop.permute.xlu0 %3435
        %3437 = vrot.lane.b32.xlu0 %v3412, 127
        %v3438 = vpop.permute.xlu0 %3437
        %3439 = vrot.lane.b32.xlu0 %v3413, 127
        %v3440 = vpop.permute.xlu0 %3439
        %3441 = vrot.lane.b32.xlu0 %v3414, 127
        %v3442 = vpop.permute.xlu0 %3441
        %3443 = vrot.lane.b32.xlu0 %v3415, 127
        %v3444 = vpop.permute.xlu0 %3443
        %3445 = vrot.lane.b32.xlu0 %v3416, 127
        %v3446 = vpop.permute.xlu0 %3445
        %3447 = vrot.lane.b32.xlu0 %v3417, 127
        %v3448 = vpop.permute.xlu0 %3447
        %3449 = vrot.lane.b32.xlu0 %v3418, 127
        %v3450 = vpop.permute.xlu0 %3449
        %3451 = vrot.lane.b32.xlu0 %v3419, 127
        %v3452 = vpop.permute.xlu0 %3451
        %3453 = vrot.lane.b32.xlu0 %v3420, 127
        %v3454 = vpop.permute.xlu0 %3453
        %3455 = vrot.lane.b32.xlu0 %v3421, 127
        %v3456 = vpop.permute.xlu0 %3455
        %3457 = vrot.lane.b32.xlu0 %v3422, 127
        %v3458 = vpop.permute.xlu0 %3457
        %v3459 = vsel %vm364, %v3436, %v3438
        %v3460 = vsel %vm364, %v3438, %v3440
        %v3461 = vsel %vm364, %v3440, %v3442
        %v3462 = vsel %vm364, %v3444, %v3446
        %v3463 = vsel %vm364, %v3446, %v3448
        %v3464 = vsel %vm364, %v3448, %v3450
        %v3465 = vsel %vm364, %v3452, %v3454
        %v3466 = vsel %vm364, %v3454, %v3456
        %v3467 = vsel %vm364, %v3456, %v3458
        %3477 = vst [vmem:[#allocation4 + $0x168] sm:$0xff] %v3459
        %3478 = vst [vmem:[#allocation4 + $0x170] sm:$0xff] %v3460
        %3479 = vst [vmem:[#allocation4 + $0x178] sm:$0xff] %v3461
        %3480 = vst [vmem:[#allocation4 + $0x180] sm:$0xff] %v3462
        %3481 = vst [vmem:[#allocation4 + $0x188] sm:$0xff] %v3463
        %3482 = vst [vmem:[#allocation4 + $0x190] sm:$0xff] %v3464
        %3483 = vst [vmem:[#allocation4 + $0x198] sm:$0xff] %v3465
        %3484 = vst [vmem:[#allocation4 + $0x1a0] sm:$0xff] %v3466
        %3485 = vst [vmem:[#allocation4 + $0x1a8] sm:$0xff] %v3467
        %v3486 = vld [vmem:[#allocation3 + $0x8] sm:$0xff]
        %v3487 = vld [vmem:[#allocation3 + $0x10] sm:$0xff]
        %v3488 = vld [vmem:[#allocation3 + $0x18] sm:$0xff]
        %v3489 = vld [vmem:[#allocation3 + $0x20] sm:$0xff]
        %v3490 = vld [vmem:[#allocation3 + $0x30] sm:$0xff]
        %v3491 = vld [vmem:[#allocation3 + $0x38] sm:$0xff]
        %v3492 = vld [vmem:[#allocation3 + $0x40] sm:$0xff]
        %v3493 = vld [vmem:[#allocation3 + $0x48] sm:$0xff]
        %v3494 = vld [vmem:[#allocation3 + $0x58] sm:$0xff]
        %v3495 = vld [vmem:[#allocation3 + $0x60] sm:$0xff]
        %v3496 = vld [vmem:[#allocation3 + $0x68] sm:$0xff]
        %v3497 = vld [vmem:[#allocation3 + $0x70] sm:$0xff]
        %3510 = vrot.lane.b32.xlu0 %v3486, 109
        %v3511 = vpop.permute.xlu0 %3510
        %3512 = vrot.lane.b32.xlu0 %v3487, 109
        %v3513 = vpop.permute.xlu0 %3512
        %3514 = vrot.lane.b32.xlu0 %v3488, 109
        %v3515 = vpop.permute.xlu0 %3514
        %3516 = vrot.lane.b32.xlu0 %v3489, 109
        %v3517 = vpop.permute.xlu0 %3516
        %3518 = vrot.lane.b32.xlu0 %v3490, 109
        %v3519 = vpop.permute.xlu0 %3518
        %3520 = vrot.lane.b32.xlu0 %v3491, 109
        %v3521 = vpop.permute.xlu0 %3520
        %3522 = vrot.lane.b32.xlu0 %v3492, 109
        %v3523 = vpop.permute.xlu0 %3522
        %3524 = vrot.lane.b32.xlu0 %v3493, 109
        %v3525 = vpop.permute.xlu0 %3524
        %3526 = vrot.lane.b32.xlu0 %v3494, 109
        %v3527 = vpop.permute.xlu0 %3526
        %3528 = vrot.lane.b32.xlu0 %v3495, 109
        %v3529 = vpop.permute.xlu0 %3528
        %3530 = vrot.lane.b32.xlu0 %v3496, 109
        %v3531 = vpop.permute.xlu0 %3530
        %3532 = vrot.lane.b32.xlu0 %v3497, 109
        %v3533 = vpop.permute.xlu0 %3532
        %v3534 = vsel %vm1754, %v3511, %v3513
        %v3535 = vsel %vm1754, %v3513, %v3515
        %v3536 = vsel %vm1754, %v3515, %v3517
        %v3537 = vsel %vm1754, %v3519, %v3521
        %v3538 = vsel %vm1754, %v3521, %v3523
        %v3539 = vsel %vm1754, %v3523, %v3525
        %v3540 = vsel %vm1754, %v3527, %v3529
        %v3541 = vsel %vm1754, %v3529, %v3531
        %v3542 = vsel %vm1754, %v3531, %v3533
        %3552 = vst [vmem:[#allocation4 + $0x1b0] sm:$0xff] %v3534
        %3553 = vst [vmem:[#allocation4 + $0x1b8] sm:$0xff] %v3535
        %3554 = vst [vmem:[#allocation4 + $0x1c0] sm:$0xff] %v3536
        %3555 = vst [vmem:[#allocation4 + $0x1c8] sm:$0xff] %v3537
        %3556 = vst [vmem:[#allocation4 + $0x1d0] sm:$0xff] %v3538
        %3557 = vst [vmem:[#allocation4 + $0x1d8] sm:$0xff] %v3539
        %3558 = vst [vmem:[#allocation4 + $0x1e0] sm:$0xff] %v3540
        %3559 = vst [vmem:[#allocation4 + $0x1e8] sm:$0xff] %v3541
        %3560 = vst [vmem:[#allocation4 + $0x1f0] sm:$0xff] %v3542
        %v3561 = vld [vmem:[#allocation3 + $0x8] sm:$0xff]
        %v3562 = vld [vmem:[#allocation3 + $0x10] sm:$0xff]
        %v3563 = vld [vmem:[#allocation3 + $0x18] sm:$0xff]
        %v3564 = vld [vmem:[#allocation3 + $0x20] sm:$0xff]
        %v3565 = vld [vmem:[#allocation3 + $0x30] sm:$0xff]
        %v3566 = vld [vmem:[#allocation3 + $0x38] sm:$0xff]
        %v3567 = vld [vmem:[#allocation3 + $0x40] sm:$0xff]
        %v3568 = vld [vmem:[#allocation3 + $0x48] sm:$0xff]
        %v3569 = vld [vmem:[#allocation3 + $0x58] sm:$0xff]
        %v3570 = vld [vmem:[#allocation3 + $0x60] sm:$0xff]
        %v3571 = vld [vmem:[#allocation3 + $0x68] sm:$0xff]
        %v3572 = vld [vmem:[#allocation3 + $0x70] sm:$0xff]
        %3585 = vrot.lane.b32.xlu0 %v3561, 108
        %v3586 = vpop.permute.xlu0 %3585
        %3587 = vrot.lane.b32.xlu0 %v3562, 108
        %v3588 = vpop.permute.xlu0 %3587
        %3589 = vrot.lane.b32.xlu0 %v3563, 108
        %v3590 = vpop.permute.xlu0 %3589
        %3591 = vrot.lane.b32.xlu0 %v3564, 108
        %v3592 = vpop.permute.xlu0 %3591
        %3593 = vrot.lane.b32.xlu0 %v3565, 108
        %v3594 = vpop.permute.xlu0 %3593
        %3595 = vrot.lane.b32.xlu0 %v3566, 108
        %v3596 = vpop.permute.xlu0 %3595
        %3597 = vrot.lane.b32.xlu0 %v3567, 108
        %v3598 = vpop.permute.xlu0 %3597
        %3599 = vrot.lane.b32.xlu0 %v3568, 108
        %v3600 = vpop.permute.xlu0 %3599
        %3601 = vrot.lane.b32.xlu0 %v3569, 108
        %v3602 = vpop.permute.xlu0 %3601
        %3603 = vrot.lane.b32.xlu0 %v3570, 108
        %v3604 = vpop.permute.xlu0 %3603
        %3605 = vrot.lane.b32.xlu0 %v3571, 108
        %v3606 = vpop.permute.xlu0 %3605
        %3607 = vrot.lane.b32.xlu0 %v3572, 108
        %v3608 = vpop.permute.xlu0 %3607
        %v3609 = vsel %vm468, %v3586, %v3588
        %v3610 = vsel %vm468, %v3588, %v3590
        %v3611 = vsel %vm468, %v3590, %v3592
        %v3612 = vsel %vm468, %v3594, %v3596
        %v3613 = vsel %vm468, %v3596, %v3598
        %v3614 = vsel %vm468, %v3598, %v3600
        %v3615 = vsel %vm468, %v3602, %v3604
        %v3616 = vsel %vm468, %v3604, %v3606
        %v3617 = vsel %vm468, %v3606, %v3608
        %3627 = vst [vmem:[#allocation4 + $0x1f8] sm:$0xff] %v3609
        %3628 = vst [vmem:[#allocation4 + $0x200] sm:$0xff] %v3610
        %3629 = vst [vmem:[#allocation4 + $0x208] sm:$0xff] %v3611
        %3630 = vst [vmem:[#allocation4 + $0x210] sm:$0xff] %v3612
        %3631 = vst [vmem:[#allocation4 + $0x218] sm:$0xff] %v3613
        %3632 = vst [vmem:[#allocation4 + $0x220] sm:$0xff] %v3614
        %3633 = vst [vmem:[#allocation4 + $0x228] sm:$0xff] %v3615
        %3634 = vst [vmem:[#allocation4 + $0x230] sm:$0xff] %v3616
        %3635 = vst [vmem:[#allocation4 + $0x238] sm:$0xff] %v3617
        %v3636 = vld [vmem:[#allocation3 + $0x8] sm:$0xff]
        %v3637 = vld [vmem:[#allocation3 + $0x10] sm:$0xff]
        %v3638 = vld [vmem:[#allocation3 + $0x18] sm:$0xff]
        %v3639 = vld [vmem:[#allocation3 + $0x20] sm:$0xff]
        %v3640 = vld [vmem:[#allocation3 + $0x30] sm:$0xff]
        %v3641 = vld [vmem:[#allocation3 + $0x38] sm:$0xff]
        %v3642 = vld [vmem:[#allocation3 + $0x40] sm:$0xff]
        %v3643 = vld [vmem:[#allocation3 + $0x48] sm:$0xff]
        %v3644 = vld [vmem:[#allocation3 + $0x58] sm:$0xff]
        %v3645 = vld [vmem:[#allocation3 + $0x60] sm:$0xff]
        %v3646 = vld [vmem:[#allocation3 + $0x68] sm:$0xff]
        %v3647 = vld [vmem:[#allocation3 + $0x70] sm:$0xff]
        %3660 = vrot.lane.b32.xlu0 %v3636, 107
        %v3661 = vpop.permute.xlu0 %3660
        %3662 = vrot.lane.b32.xlu0 %v3637, 107
        %v3663 = vpop.permute.xlu0 %3662
        %3664 = vrot.lane.b32.xlu0 %v3638, 107
        %v3665 = vpop.permute.xlu0 %3664
        %3666 = vrot.lane.b32.xlu0 %v3639, 107
        %v3667 = vpop.permute.xlu0 %3666
        %3668 = vrot.lane.b32.xlu0 %v3640, 107
        %v3669 = vpop.permute.xlu0 %3668
        %3670 = vrot.lane.b32.xlu0 %v3641, 107
        %v3671 = vpop.permute.xlu0 %3670
        %3672 = vrot.lane.b32.xlu0 %v3642, 107
        %v3673 = vpop.permute.xlu0 %3672
        %3674 = vrot.lane.b32.xlu0 %v3643, 107
        %v3675 = vpop.permute.xlu0 %3674
        %3676 = vrot.lane.b32.xlu0 %v3644, 107
        %v3677 = vpop.permute.xlu0 %3676
        %3678 = vrot.lane.b32.xlu0 %v3645, 107
        %v3679 = vpop.permute.xlu0 %3678
        %3680 = vrot.lane.b32.xlu0 %v3646, 107
        %v3681 = vpop.permute.xlu0 %3680
        %3682 = vrot.lane.b32.xlu0 %v3647, 107
        %v3683 = vpop.permute.xlu0 %3682
        %v3684 = vsel %vm494, %v3661, %v3663
        %v3685 = vsel %vm494, %v3663, %v3665
        %v3686 = vsel %vm494, %v3665, %v3667
        %v3687 = vsel %vm494, %v3669, %v3671
        %v3688 = vsel %vm494, %v3671, %v3673
        %v3689 = vsel %vm494, %v3673, %v3675
        %v3690 = vsel %vm494, %v3677, %v3679
        %v3691 = vsel %vm494, %v3679, %v3681
        %v3692 = vsel %vm494, %v3681, %v3683
        %3702 = vst [vmem:[#allocation4 + $0x240] sm:$0xff] %v3684
        %3703 = vst [vmem:[#allocation4 + $0x248] sm:$0xff] %v3685
        %3704 = vst [vmem:[#allocation4 + $0x250] sm:$0xff] %v3686
        %3705 = vst [vmem:[#allocation4 + $0x258] sm:$0xff] %v3687
        %3706 = vst [vmem:[#allocation4 + $0x260] sm:$0xff] %v3688
        %3707 = vst [vmem:[#allocation4 + $0x268] sm:$0xff] %v3689
        %3708 = vst [vmem:[#allocation4 + $0x270] sm:$0xff] %v3690
        %3709 = vst [vmem:[#allocation4 + $0x278] sm:$0xff] %v3691
        %3710 = vst [vmem:[#allocation4 + $0x280] sm:$0xff] %v3692
        %s3711 = scalar_lea.vmem %s3, 8
        %v3712 = vld [vmem:[%s3711] sm:$0xff]
        %v3713 = vld [vmem:[#allocation4] sm:$0xff]
        %v3714 = vld [vmem:[#allocation4 + $0x8] sm:$0xff]
        %v3715 = vld [vmem:[#allocation4 + $0x10] sm:$0xff]
        %v3716 = vld [vmem:[#allocation4 + $0x18] sm:$0xff]
        %v3717 = vld [vmem:[#allocation4 + $0x20] sm:$0xff]
        %v3718 = vld [vmem:[#allocation4 + $0x28] sm:$0xff]
        %v3719 = vld [vmem:[#allocation4 + $0x30] sm:$0xff]
        %v3720 = vld [vmem:[#allocation4 + $0x38] sm:$0xff]
        %v3721 = vld [vmem:[#allocation4 + $0x40] sm:$0xff]
        %v3722 = vld [vmem:[#allocation4 + $0x48] sm:$0xff]
        %v3723 = vld [vmem:[#allocation4 + $0x50] sm:$0xff]
        %v3724 = vld [vmem:[#allocation4 + $0x58] sm:$0xff]
        %v3725 = vld [vmem:[#allocation4 + $0x60] sm:$0xff]
        %v3726 = vld [vmem:[#allocation4 + $0x68] sm:$0xff]
        %v3727 = vld [vmem:[#allocation4 + $0x70] sm:$0xff]
        %v3728 = vld [vmem:[#allocation4 + $0x78] sm:$0xff]
        %v3729 = vld [vmem:[#allocation4 + $0x80] sm:$0xff]
        %v3730 = vld [vmem:[#allocation4 + $0x88] sm:$0xff]
        %v3731 = vld [vmem:[#allocation4 + $0x90] sm:$0xff]
        %v3732 = vld [vmem:[#allocation4 + $0x98] sm:$0xff]
        %v3733 = vld [vmem:[#allocation4 + $0xa0] sm:$0xff]
        %v3734 = vld [vmem:[#allocation4 + $0xa8] sm:$0xff]
        %v3735 = vld [vmem:[#allocation4 + $0xb0] sm:$0xff]
        %v3736 = vld [vmem:[#allocation4 + $0xb8] sm:$0xff]
        %v3737 = vld [vmem:[#allocation4 + $0xc0] sm:$0xff]
        %v3738 = vld [vmem:[#allocation4 + $0xc8] sm:$0xff]
        %v3739 = vld [vmem:[#allocation4 + $0xd0] sm:$0xff]
        %v3740 = vld [vmem:[#allocation4 + $0xd8] sm:$0xff]
        %v3741 = vld [vmem:[#allocation4 + $0xe0] sm:$0xff]
        %v3742 = vld [vmem:[#allocation4 + $0xe8] sm:$0xff]
        %v3743 = vld [vmem:[#allocation4 + $0xf0] sm:$0xff]
        %v3744 = vld [vmem:[#allocation4 + $0xf8] sm:$0xff]
        %v3745 = vld [vmem:[#allocation4 + $0x100] sm:$0xff]
        %v3746 = vld [vmem:[#allocation4 + $0x108] sm:$0xff]
        %v3747 = vld [vmem:[#allocation4 + $0x110] sm:$0xff]
        %v3748 = vld [vmem:[#allocation4 + $0x118] sm:$0xff]
        %v3749 = vld [vmem:[#allocation4 + $0x120] sm:$0xff]
        %v3750 = vld [vmem:[#allocation4 + $0x128] sm:$0xff]
        %v3751 = vld [vmem:[#allocation4 + $0x130] sm:$0xff]
        %v3752 = vld [vmem:[#allocation4 + $0x138] sm:$0xff]
        %v3753 = vld [vmem:[#allocation4 + $0x140] sm:$0xff]
        %v3754 = vld [vmem:[#allocation4 + $0x148] sm:$0xff]
        %v3755 = vld [vmem:[#allocation4 + $0x150] sm:$0xff]
        %v3756 = vld [vmem:[#allocation4 + $0x158] sm:$0xff]
        %v3757 = vld [vmem:[#allocation4 + $0x160] sm:$0xff]
        %v3758 = vld [vmem:[#allocation4 + $0x168] sm:$0xff]
        %v3759 = vld [vmem:[#allocation4 + $0x170] sm:$0xff]
        %v3760 = vld [vmem:[#allocation4 + $0x178] sm:$0xff]
        %v3761 = vld [vmem:[#allocation4 + $0x180] sm:$0xff]
        %v3762 = vld [vmem:[#allocation4 + $0x188] sm:$0xff]
        %v3763 = vld [vmem:[#allocation4 + $0x190] sm:$0xff]
        %v3764 = vld [vmem:[#allocation4 + $0x198] sm:$0xff]
        %v3765 = vld [vmem:[#allocation4 + $0x1a0] sm:$0xff]
        %v3766 = vld [vmem:[#allocation4 + $0x1a8] sm:$0xff]
        %v3767 = vld [vmem:[#allocation4 + $0x1b0] sm:$0xff]
        %v3768 = vld [vmem:[#allocation4 + $0x1b8] sm:$0xff]
        %v3769 = vld [vmem:[#allocation4 + $0x1c0] sm:$0xff]
        %v3770 = vld [vmem:[#allocation4 + $0x1c8] sm:$0xff]
        %v3771 = vld [vmem:[#allocation4 + $0x1d0] sm:$0xff]
        %v3772 = vld [vmem:[#allocation4 + $0x1d8] sm:$0xff]
        %v3773 = vld [vmem:[#allocation4 + $0x1e0] sm:$0xff]
        %v3774 = vld [vmem:[#allocation4 + $0x1e8] sm:$0xff]
        %v3775 = vld [vmem:[#allocation4 + $0x1f0] sm:$0xff]
        %v3776 = vld [vmem:[#allocation4 + $0x1f8] sm:$0xff]
        %v3777 = vld [vmem:[#allocation4 + $0x200] sm:$0xff]
        %v3778 = vld [vmem:[#allocation4 + $0x208] sm:$0xff]
        %v3779 = vld [vmem:[#allocation4 + $0x210] sm:$0xff]
        %v3780 = vld [vmem:[#allocation4 + $0x218] sm:$0xff]
        %v3781 = vld [vmem:[#allocation4 + $0x220] sm:$0xff]
        %v3782 = vld [vmem:[#allocation4 + $0x228] sm:$0xff]
        %v3783 = vld [vmem:[#allocation4 + $0x230] sm:$0xff]
        %v3784 = vld [vmem:[#allocation4 + $0x238] sm:$0xff]
        %v3785 = vld [vmem:[#allocation4 + $0x240] sm:$0xff]
        %v3786 = vld [vmem:[#allocation4 + $0x248] sm:$0xff]
        %v3787 = vld [vmem:[#allocation4 + $0x250] sm:$0xff]
        %v3788 = vld [vmem:[#allocation4 + $0x258] sm:$0xff]
        %v3789 = vld [vmem:[#allocation4 + $0x260] sm:$0xff]
        %v3790 = vld [vmem:[#allocation4 + $0x268] sm:$0xff]
        %v3791 = vld [vmem:[#allocation4 + $0x270] sm:$0xff]
        %v3792 = vld [vmem:[#allocation4 + $0x278] sm:$0xff]
        %v3793 = vld [vmem:[#allocation4 + $0x280] sm:$0xff]
        %v3794 = vpack.c.bf16 %v3716, %v3713
        %v3795 = vpack.c.bf16 %v3717, %v3714
        %v3796 = vpack.c.bf16 %v3718, %v3715
        %v3797 = vpack.c.bf16 %v3722, %v3719
        %v3798 = vpack.c.bf16 %v3723, %v3720
        %v3799 = vpack.c.bf16 %v3724, %v3721
        %v3800 = vpack.c.bf16 %v3728, %v3725
        %v3801 = vpack.c.bf16 %v3729, %v3726
        %v3802 = vpack.c.bf16 %v3730, %v3727
        %v3803 = vpack.c.bf16 %v3734, %v3731
        %v3804 = vpack.c.bf16 %v3735, %v3732
        %v3805 = vpack.c.bf16 %v3736, %v3733
        %v3806 = vpack.c.bf16 %v3740, %v3737
        %v3807 = vpack.c.bf16 %v3741, %v3738
        %v3808 = vpack.c.bf16 %v3742, %v3739
        %v3809 = vpack.c.bf16 %v3746, %v3743
        %v3810 = vpack.c.bf16 %v3747, %v3744
        %v3811 = vpack.c.bf16 %v3748, %v3745
        %v3812 = vpack.c.bf16 %v3752, %v3749
        %v3813 = vpack.c.bf16 %v3753, %v3750
        %v3814 = vpack.c.bf16 %v3754, %v3751
        %v3815 = vpack.c.bf16 %v3758, %v3755
        %v3816 = vpack.c.bf16 %v3759, %v3756
        %v3817 = vpack.c.bf16 %v3760, %v3757
        %v3818 = vpack.c.bf16 %v3764, %v3761
        %v3819 = vpack.c.bf16 %v3765, %v3762
        %v3820 = vpack.c.bf16 %v3766, %v3763
        %v3821 = vpack.c.bf16 %v3770, %v3767
        %v3822 = vpack.c.bf16 %v3771, %v3768
        %v3823 = vpack.c.bf16 %v3772, %v3769
        %v3824 = vpack.c.bf16 %v3776, %v3773
        %v3825 = vpack.c.bf16 %v3777, %v3774
        %v3826 = vpack.c.bf16 %v3778, %v3775
        %v3827 = vpack.c.bf16 %v3782, %v3779
        %v3828 = vpack.c.bf16 %v3783, %v3780
        %v3829 = vpack.c.bf16 %v3784, %v3781
        %v3830 = vpack.c.bf16 %v3788, %v3785
        %v3831 = vpack.c.bf16 %v3789, %v3786
        %v3832 = vpack.c.bf16 %v3790, %v3787
        %v3833 = vpack.c.bf16 %v3791, %v3791
        %v3834 = vpack.c.bf16 %v3792, %v3792
        %v3835 = vpack.c.bf16 %v3793, %v3793
        %s3836 = scalar_lea.vmem %s4, 8
        %v3837 = vld [vmem:[%s3836] sm:$0xff]
        %3839 = vset.pattern.permute.xlu0 0
        %3840 = vperm.xlu0 %3839, %v3837
        %v3841 = vpop.permute.xlu0 %3840
        %v3844 = vunpack.c.l.b16 %v3712
        %v3845 = vunpack.c.h.b16 %v3712
        %v3846 = vpack.c.b16 %v3844, %v3844
        %v3847 = vpack.c.b16 %v3845, %v3845
        %v3850 = vsel %vm598, %v3847, 0
        %v3853 = vsel %vm1139, %v3833, 0
        %v3856 = vsel %vm1139, %v3834, 0
        %v3859 = vsel %vm1139, %v3835, 0
        %3861 = vmatprep.subr.bf16.mxu0 %v3816
        %3862 = vmatpush1.bf16.msra.mxu0 %v3815
        %3863 = vmatprep.subr.bf16.mxu0 %v3813
        %3864 = vmatpush1.bf16.msra.mxu0 %v3812
        %3865 = vmatprep.subr.bf16.mxu0 %v3810
        %3866 = vmatpush1.bf16.msra.mxu0 %v3809
        %3867 = vmatprep.subr.bf16.mxu0 %v3807
        %3868 = vmatpush1.bf16.msra.mxu0 %v3806
        %3869 = vmatprep.subr.bf16.mxu0 %v3804
        %3870 = vmatpush1.bf16.msra.mxu0 %v3803
        %3871 = vmatprep.subr.bf16.mxu0 %v3801
        %3872 = vmatpush1.bf16.msra.mxu0 %v3800
        %3873 = vmatprep.subr.bf16.mxu0 %v3798
        %3874 = vmatpush1.bf16.msra.mxu0 %v3797
        %3875 = vmatprep.subr.bf16.mxu0 %v3795
        %3876 = vmatpush1.bf16.msra.mxu0 %v3794
        %3877 = vmatprep.subr.bf16.mxu0 0
        %3878 = vmatpush2.bf16.msra.mxu0 0
        %3879 = vmatprep.subr.bf16.mxu0 0
        %3880 = vmatpush2.bf16.msra.mxu0 0
        %3881 = vmatprep.subr.bf16.mxu0 %v3856
        %3882 = vmatpush2.bf16.msra.mxu0 %v3853
        %3883 = vmatprep.subr.bf16.mxu0 %v3831
        %3884 = vmatpush2.bf16.msra.mxu0 %v3830
        %3885 = vmatprep.subr.bf16.mxu0 %v3828
        %3886 = vmatpush2.bf16.msra.mxu0 %v3827
        %3887 = vmatprep.subr.bf16.mxu0 %v3825
        %3888 = vmatpush2.bf16.msra.mxu0 %v3824
        %3889 = vmatprep.subr.bf16.mxu0 %v3822
        %3890 = vmatpush2.bf16.msra.mxu0 %v3821
        %3891 = vmatprep.subr.bf16.mxu0 %v3819
        %3892 = vmatpush2.bf16.msra.mxu0 %v3818
        %3893 = vmatprep.mubr.bf16.mxu0 %v3850
        %3894 = vmatmul.mubr.bf16.gmra.mxu0 %v3846
        %v3895 = vpop.f32.mrf.mxu0
        %v3896 = vadd.f32 %v3841, %v3895
        %v3897 = vpop.f32.mrf.mxu0
        %v3898 = vadd.f32 %v3841, %v3897
        %v3899 = vpop.f32.mrf.mxu0
        %v3900 = vpop.f32.mrf.mxu0
        %3901 = vdwg.mxu0
        %3902 = vmatprep.subr.bf16.mxu0 0
        %3903 = vmatpush1.bf16.msra.mxu0 %v3817
        %3904 = vmatprep.subr.bf16.mxu0 0
        %3905 = vmatpush1.bf16.msra.mxu0 %v3814
        %3906 = vmatprep.subr.bf16.mxu0 0
        %3907 = vmatpush1.bf16.msra.mxu0 %v3811
        %3908 = vmatprep.subr.bf16.mxu0 0
        %3909 = vmatpush1.bf16.msra.mxu0 %v3808
        %3910 = vmatprep.subr.bf16.mxu0 0
        %3911 = vmatpush1.bf16.msra.mxu0 %v3805
        %3912 = vmatprep.subr.bf16.mxu0 0
        %3913 = vmatpush1.bf16.msra.mxu0 %v3802
        %3914 = vmatprep.subr.bf16.mxu0 0
        %3915 = vmatpush1.bf16.msra.mxu0 %v3799
        %3916 = vmatprep.subr.bf16.mxu0 0
        %3917 = vmatpush1.bf16.msra.mxu0 %v3796
        %3918 = vmatprep.subr.bf16.mxu0 0
        %3919 = vmatpush2.bf16.msra.mxu0 0
        %3920 = vmatprep.subr.bf16.mxu0 0
        %3921 = vmatpush2.bf16.msra.mxu0 0
        %3922 = vmatprep.subr.bf16.mxu0 0
        %3923 = vmatpush2.bf16.msra.mxu0 %v3859
        %3924 = vmatprep.subr.bf16.mxu0 0
        %3925 = vmatpush2.bf16.msra.mxu0 %v3832
        %3926 = vmatprep.subr.bf16.mxu0 0
        %3927 = vmatpush2.bf16.msra.mxu0 %v3829
        %3928 = vmatprep.subr.bf16.mxu0 0
        %3929 = vmatpush2.bf16.msra.mxu0 %v3826
        %3930 = vmatprep.subr.bf16.mxu0 0
        %3931 = vmatpush2.bf16.msra.mxu0 %v3823
        %3932 = vmatprep.subr.bf16.mxu0 0
        %3933 = vmatpush2.bf16.msra.mxu0 %v3820
        %3934 = vmatprep.mubr.bf16.mxu0 %v3850
        %3935 = vmatmul.mubr.bf16.gmra.mxu0 %v3846
        %v3936 = vpop.f32.mrf.mxu0
        %v3937 = vadd.f32 %v3841, %v3936
        %v3938 = vpop.f32.mrf.mxu0
        %v3939 = vpop.f32.mrf.mxu0
        %v3940 = vpop.f32.mrf.mxu0
        %3941 = vdwg.mxu0
        %v3942 = vld [vmem:[%s2165] sm:$0xff]
        %v3943 = vld [vmem:[%s2165 + $0x8] sm:$0xff]
        %v3944 = vld [vmem:[%s2165 + $0x10] sm:$0xff]
        %v3945 = vld [vmem:[%s2165 + $0x18] sm:$0xff]
        %v3946 = vxor.u32 %v2115, 2147483648
        %v3947 = vxor.u32 %v2117, 2147483648
        %v3948 = vxor.u32 %v2156, 2147483648
        %v3949 = vmul.f32 %v3946, 1.442695
        %v3950 = vpow.pop %v3949
        %v3951 = vmul.f32 %v3947, 1.442695
        %v3952 = vpow.pop %v3951
        %v3953 = vmul.f32 %v3948, 1.442695
        %v3954 = vpow.pop %v3953
        %v3955 = vadd.f32 %v3950, 1.0
        %v3956 = vadd.f32 %v3952, 1.0
        %v3957 = vadd.f32 %v3954, 1.0
        %v3958 = vrcp.pop %v3955
        %v3959 = vmul.f32 1.0, %v3958
        %v3960 = vrcp.pop %v3956
        %v3961 = vmul.f32 1.0, %v3960
        %v3962 = vrcp.pop %v3957
        %v3963 = vmul.f32 1.0, %v3962
        %v3964 = vxor.u32 %v2998, 2147483648
        %v3965 = vxor.u32 %v3000, 2147483648
        %v3966 = vxor.u32 %v3048, 2147483648
        %v3967 = vmul.f32 %v3964, 1.442695
        %v3968 = vpow.pop %v3967
        %v3969 = vmul.f32 %v3965, 1.442695
        %v3970 = vpow.pop %v3969
        %v3971 = vmul.f32 %v3966, 1.442695
        %v3972 = vpow.pop %v3971
        %v3973 = vadd.f32 %v3968, 1.0
        %v3974 = vadd.f32 %v3970, 1.0
        %v3975 = vadd.f32 %v3972, 1.0
        %v3976 = vrcp.pop %v3973
        %v3977 = vmul.f32 1.0, %v3976
        %v3978 = vrcp.pop %v3974
        %v3979 = vmul.f32 1.0, %v3978
        %v3980 = vrcp.pop %v3975
        %v3981 = vmul.f32 1.0, %v3980
        %v3982 = vadd.f32 %v3959, %v3977
        %v3983 = vadd.f32 %v3961, %v3979
        %v3984 = vadd.f32 %v3963, %v3981
        %v3985 = vadd.f32 %v3982, 1.0
        %v3986 = vadd.f32 %v3983, 1.0
        %v3987 = vadd.f32 %v3984, 1.0
        %3991 = vrot.lane.b32.xlu0 %v3985, 42
        %v3992 = vpop.permute.xlu0 %3991
        %3993 = vrot.lane.b32.xlu0 %v3986, 42
        %v3994 = vpop.permute.xlu0 %3993
        %3995 = vrot.lane.b32.xlu0 %v3987, 42
        %v3996 = vpop.permute.xlu0 %3995
        %vm3997 = vcmask 343040
        %v3998 = vsel %vm3997, %v3992, %v3994
        %v3999 = vsel %vm3997, %v3994, %v3996
        %v4004 = vmul.f32 %v3942, %v3992
        %v4005 = vmul.f32 %v3943, %v3998
        %v4006 = vmul.f32 %v3944, %v3999
        %v4007 = vmul.f32 %v3945, %v3996
        %4012 = vrot.lane.b32.xlu0 %v4004, 86
        %v4013 = vpop.permute.xlu0 %4012
        %4014 = vrot.lane.b32.xlu0 %v4005, 86
        %v4015 = vpop.permute.xlu0 %4014
        %4016 = vrot.lane.b32.xlu0 %v4006, 86
        %v4017 = vpop.permute.xlu0 %4016
        %4018 = vrot.lane.b32.xlu0 %v4007, 86
        %v4019 = vpop.permute.xlu0 %4018
        %v4020 = vsel %vm650, %v4013, %v4015
        %v4021 = vsel %vm650, %v4015, %v4017
        %v4022 = vsel %vm650, %v4017, %v4019
        %v4026 = vadd.f32 %v4020, %v4021
        %v4027 = vadd.f32 %v4026, %v4022
        %4028 = vadd.xlane.f32.xlu0 %v4027
        %v4029 = vpop.xlane.xlu0 %4028
        %v4030 = vmul.f32 %v4029, 0.00390625
        %v4031 = vld [vmem:[%s6] sm:$0xff]
        %v4032 = vmul.f32 %v4031, %v4030
        %v4033 = vrot.slane %v4032, 4
        %v4034 = vadd.f32 %v4032, %v4033
        %v4035 = vrot.slane %v4034, 2
        %v4036 = vadd.f32 %v4034, %v4035
        %v4037 = vrot.slane %v4036, 1
        %v4038 = vadd.f32 %v4036, %v4037
        %v4039 = vmax.f32 %v4038, 0.0
        %v4040 = vld [vmem:[%s7] sm:$0x1]
        %v4041 = vmul.f32 %v4040, %v4039
        %vm4042 = vcmask 1040384
        %v4043 = vsel %vm4042, %v4041, 0.0
        %4044 = vadd.xlane.f32.xlu0 %v4043
        %v4045 = vpop.xlane.xlu0 %4044
        %v4046 = vmax.f32 %v4045, 0.0
        %v4047 = vxor.u32 %v4046, 2147483648
        %v4048 = vmul.f32 %v4047, 1.442695
        %v4049 = vpow.pop %v4048
        %v4050 = vadd.f32 %v4049, 1.0
        %v4051 = vrcp.pop %v4050
        %v4052 = vmul.f32 1.0, %v4051
        %v4053 = vlaneseq
        %v4054 = vshrl.u32 %v4053, 7
        %v4055 = vsub.s32 0, %v4054
        %v4056 = vrot.slane %v4052, %v4055
        %v4057 = vmul.f32 %v4004, %v4056
        %v4058 = vmul.f32 %v4005, %v4056
        %v4059 = vmul.f32 %v4006, %v4056
        %v4060 = vmul.f32 %v4007, %v4056
        %v4061 = vxor.u32 %v3896, 2147483648
        %v4062 = vxor.u32 %v3898, 2147483648
        %v4063 = vxor.u32 %v3937, 2147483648
        %v4064 = vmul.f32 %v4061, 1.442695
        %v4065 = vpow.pop %v4064
        %v4066 = vmul.f32 %v4062, 1.442695
        %v4067 = vpow.pop %v4066
        %v4068 = vmul.f32 %v4063, 1.442695
        %v4069 = vpow.pop %v4068
        %v4070 = vadd.f32 %v4065, 1.0
        %v4071 = vadd.f32 %v4067, 1.0
        %v4072 = vadd.f32 %v4069, 1.0
        %v4073 = vrcp.pop %v4070
        %v4074 = vmul.f32 1.0, %v4073
        %v4075 = vrcp.pop %v4071
        %v4076 = vmul.f32 1.0, %v4075
        %v4077 = vrcp.pop %v4072
        %v4078 = vmul.f32 1.0, %v4077
        %v4079 = vxor.u32 %v1198, 2147483648
        %v4080 = vxor.u32 %v1200, 2147483648
        %v4081 = vxor.u32 %v1248, 2147483648
        %v4082 = vmul.f32 %v4079, 1.442695
        %v4083 = vpow.pop %v4082
        %v4084 = vmul.f32 %v4080, 1.442695
        %v4085 = vpow.pop %v4084
        %v4086 = vmul.f32 %v4081, 1.442695
        %v4087 = vpow.pop %v4086
        %v4088 = vadd.f32 %v4083, 1.0
        %v4089 = vadd.f32 %v4085, 1.0
        %v4090 = vadd.f32 %v4087, 1.0
        %v4091 = vrcp.pop %v4088
        %v4092 = vmul.f32 1.0, %v4091
        %v4093 = vrcp.pop %v4089
        %v4094 = vmul.f32 1.0, %v4093
        %v4095 = vrcp.pop %v4090
        %v4096 = vmul.f32 1.0, %v4095
        %v4097 = vadd.f32 %v4074, %v4092
        %v4098 = vadd.f32 %v4076, %v4094
        %v4099 = vadd.f32 %v4078, %v4096
        %v4100 = vadd.f32 %v4097, 1.0
        %v4101 = vadd.f32 %v4098, 1.0
        %v4102 = vadd.f32 %v4099, 1.0
        %4106 = vrot.lane.b32.xlu0 %v4100, 42
        %v4107 = vpop.permute.xlu0 %4106
        %4108 = vrot.lane.b32.xlu0 %v4101, 42
        %v4109 = vpop.permute.xlu0 %4108
        %4110 = vrot.lane.b32.xlu0 %v4102, 42
        %v4111 = vpop.permute.xlu0 %4110
        %v4112 = vsel %vm3997, %v4107, %v4109
        %v4113 = vsel %vm3997, %v4109, %v4111
        %v4118 = vmul.f32 %v2161, %v4107
        %v4119 = vmul.f32 %v2162, %v4112
        %v4120 = vmul.f32 %v2163, %v4113
        %v4121 = vmul.f32 %v2164, %v4111
        %4126 = vrot.lane.b32.xlu0 %v4118, 86
        %v4127 = vpop.permute.xlu0 %4126
        %4128 = vrot.lane.b32.xlu0 %v4119, 86
        %v4129 = vpop.permute.xlu0 %4128
        %4130 = vrot.lane.b32.xlu0 %v4120, 86
        %v4131 = vpop.permute.xlu0 %4130
        %4132 = vrot.lane.b32.xlu0 %v4121, 86
        %v4133 = vpop.permute.xlu0 %4132
        %v4134 = vsel %vm650, %v4127, %v4129
        %v4135 = vsel %vm650, %v4129, %v4131
        %v4136 = vsel %vm650, %v4131, %v4133
        %v4140 = vadd.f32 %v4134, %v4135
        %v4141 = vadd.f32 %v4140, %v4136
        %4142 = vadd.xlane.f32.xlu0 %v4141
        %v4143 = vpop.xlane.xlu0 %4142
        %v4144 = vmul.f32 %v4143, 0.00390625
        %s4145 = scalar_lea.vmem %s6, 8
        %v4146 = vld [vmem:[%s4145] sm:$0xff]
        %v4147 = vmul.f32 %v4146, %v4144
        %v4148 = vrot.slane %v4147, 4
        %v4149 = vadd.f32 %v4147, %v4148
        %v4150 = vrot.slane %v4149, 2
        %v4151 = vadd.f32 %v4149, %v4150
        %v4152 = vrot.slane %v4151, 1
        %v4153 = vadd.f32 %v4151, %v4152
        %v4154 = vmax.f32 %v4153, 0.0
        %s4155 = scalar_lea.vmem %s7, 1
        %v4156 = vld [vmem:[%s4155] sm:$0x1]
        %v4157 = vmul.f32 %v4156, %v4154
        %v4158 = vsel %vm4042, %v4157, 0.0
        %4159 = vadd.xlane.f32.xlu0 %v4158
        %v4160 = vpop.xlane.xlu0 %4159
        %v4161 = vmax.f32 %v4160, 0.0
        %v4162 = vxor.u32 %v4161, 2147483648
        %v4163 = vmul.f32 %v4162, 1.442695
        %v4164 = vpow.pop %v4163
        %v4165 = vadd.f32 %v4164, 1.0
        %v4166 = vrcp.pop %v4165
        %v4167 = vmul.f32 1.0, %v4166
        %v4168 = vlaneseq
        %v4169 = vshrl.u32 %v4168, 7
        %v4170 = vsub.s32 0, %v4169
        %v4171 = vrot.slane %v4167, %v4170
        %v4172 = vmul.f32 %v4118, %v4171
        %v4173 = vmul.f32 %v4119, %v4171
        %v4174 = vmul.f32 %v4120, %v4171
        %v4175 = vmul.f32 %v4121, %v4171
        %v4176 = vadd.f32 %v4057, %v4172
        %v4177 = vadd.f32 %v4058, %v4173
        %v4178 = vadd.f32 %v4059, %v4174
        %v4179 = vadd.f32 %v4060, %v4175
        %4184 = vrot.lane.b32.xlu0 %v4176, 86
        %v4185 = vpop.permute.xlu0 %4184
        %4186 = vrot.lane.b32.xlu0 %v4177, 86
        %v4187 = vpop.permute.xlu0 %4186
        %4188 = vrot.lane.b32.xlu0 %v4178, 86
        %v4189 = vpop.permute.xlu0 %4188
        %4190 = vrot.lane.b32.xlu0 %v4179, 86
        %v4191 = vpop.permute.xlu0 %4190
        %v4192 = vsel %vm650, %v4185, %v4187
        %v4193 = vsel %vm650, %v4187, %v4189
        %v4194 = vsel %vm650, %v4189, %v4191
        %4198 = vst [vmem:[%s339] sm:$0xff] %v4192
        %4199 = vst [vmem:[%s339 + $0x8] sm:$0xff] %v4193
        %4200 = vst [vmem:[%s339 + $0x10] sm:$0xff] %v4194
        %p4201 = scmp.lt.s32.totalorder %s19, 1
        %s4202 = scalar_select %p4201, %s19, 1
        %s4203 = smul.addr %s4202, 3
        %s4204 = smul.addr %s4203, 8
        %s4205 = scalar_lea.vmem %s8, %s4204
        // Predicated region
        $region76: #{counter_attention_forward.1} parent=70 // pred_check
          %p4206 = pneg %p210
        $region77: #{counter_attention_forward.1} parent=70 // pred_check_branch
          %4208 = sbr.rel (%p4206) target = $region79
        $region78: #{counter_attention_forward.1} parent=70 // pred_region
          _
        $region79: #{counter_attention_forward.1} parent=70 // pred_fallthru
          _
      $region71: #{counter_attention_forward.1} parent=5 // pred_fallthru
        _
      %p4209 = scmp.le.s32.totalorder 2, %s14
      // Predicated region
      $region80: #{counter_attention_forward.1} parent=5 // pred_check
        %p4210 = pneg %p4209
      $region81: #{counter_attention_forward.1} parent=5 // pred_check_branch
        %4212 = sbr.rel (%p4210) target = $region83
      $region82: #{counter_attention_forward.1} parent=5 // pred_region
        %s4213 = ssub.s32 %s14, 2
        // Predicated region
        $region84: #{counter_attention_forward.1} parent=82 // pred_check
          %p4214 = pneg %p216
        $region85: #{counter_attention_forward.1} parent=82 // pred_check_branch
          %4216 = sbr.rel (%p4214) target = $region87
        $region86: #{counter_attention_forward.1} parent=82 // pred_region
          %p4217 = scmp.lt.s32.totalorder %s20, 1
          %s4218 = scalar_select %p4217, %s20, 1
          %s4219 = smul.addr %s4218, 3
          %s4220 = smul.addr %s4219, 8
          %s4221 = scalar_lea.vmem %s8, %s4220
        $region87: #{counter_attention_forward.1} parent=82 // pred_fallthru
          _
      $region83: #{counter_attention_forward.1} parent=5 // pred_fallthru
        _
    $region6: #{counter_attention_forward.1} parent=1 // loop_footer
      %s18 = sadd.s32 1, %s14
    $region7: #{counter_attention_forward.1} parent=1 // loop_footer_branch
      %13 = sbr.rel target = $region3
    $region8: #{counter_attention_forward.1} parent=1 // loop_exit
      _

</llo_original>
